<compile_context>
chip_gen: v6e
topology: v6e:2x2x1
jax: 0.10.0
libtpu: 0.0.40
codegen_flags: <defaults>
</compile_context>

<pallas_src>
import functools

import jax
import jax.numpy as jnp
from jax.experimental import pallas as pl
from jax.experimental.pallas import tpu as pltpu


def _round_up(x, m):
    return (x + m - 1) // m * m


# --------------------------- LSTM recurrence kernel ---------------------------

def _lstm_kernel(nb_layer, T, B_pad, Hp, *refs):
    """All LSTM layers, time-major.  Positional refs:
      inputs : x [T*B_pad, E_pad],
               per layer: wih [D_in, 4Hp], whh [Hp, 4Hp], b [1, 4Hp]
      outputs: h_last [B_pad, Hp]
      scratch: zx [T*B_pad, 4Hp], seq [T*B_pad, Hp]
    PyTorch gate order along the 4Hp axis: i, f, g, o (each block Hp wide).
    Hp is a multiple of 128 and the padded gate lanes see z = 0, so padded
    c/h stay identically 0 (exact).
    """
    idx = 0
    x_ref = refs[idx]; idx += 1
    layer_refs = []
    for _ in range(nb_layer):
        layer_refs.append((refs[idx], refs[idx + 1], refs[idx + 2]))
        idx += 3
    hlast_ref = refs[idx]; idx += 1
    zx_ref = refs[idx]; idx += 1
    seq_ref = refs[idx]; idx += 1

    for layer, (wih_ref, whh_ref, b_ref) in enumerate(layer_refs):
        inp = x_ref[...] if layer == 0 else seq_ref[...]
        # Hoisted input projection + bias for ALL timesteps at once:
        # one M = T*B_pad matmul instead of T tiny matmuls on the serial
        # critical path (bias broadcast emitted only once).
        zx_ref[...] = (
            jnp.dot(inp, wih_ref[...], preferred_element_type=jnp.float32)
            + b_ref[...])

        h = jnp.zeros((B_pad, Hp), jnp.float32)
        c = jnp.zeros((B_pad, Hp), jnp.float32)
        # T is small and static: full unroll (static, sublane-aligned slices
        # of zx; scheduler can overlap W_hh matmul with gate math).
        for t in range(T):
            z = (zx_ref[t * B_pad:(t + 1) * B_pad, :]
                 + jnp.dot(h, whh_ref[...],
                           preferred_element_type=jnp.float32))
            # Hp multiple of 128 -> every gate slice is lane-aligned.
            i = jax.nn.sigmoid(z[:, 0 * Hp:1 * Hp])
            f = jax.nn.sigmoid(z[:, 1 * Hp:2 * Hp])
            g = jnp.tanh(z[:, 2 * Hp:3 * Hp])
            o = jax.nn.sigmoid(z[:, 3 * Hp:4 * Hp])
            c = f * c + i * g
            h = o * jnp.tanh(c)
            if layer != nb_layer - 1:
                # lane-dense (Hp-wide) store; the last layer skips the
                # per-step output entirely (only h_last is needed).
                seq_ref[t * B_pad:(t + 1) * B_pad, :] = h
        if layer == nb_layer - 1:
            hlast_ref[...] = h


# --------------------------------- FC kernel ----------------------------------

def _fc_kernel(h_ref, w_ref, b_ref, out_ref):
    """Vocab-tiled FC.  w is streamed as bf16 (HBM bandwidth), accumulated f32.
    Output tile [B_pad, TN] is lane-dense."""
    out_ref[...] = (
        jnp.dot(h_ref[...], w_ref[...].astype(jnp.float32),
                preferred_element_type=jnp.float32)
        + b_ref[...])


# ----------------------------- parameter prep ---------------------------------
# Done ONCE, outside the per-call jit: pads to lane-aligned shapes and casts the
# (huge, streamed) FC weight to bf16 so no per-forward HBM copy is added.

def _pad_gates(w, H, Hp):
    """Zero-pad the trailing 4H gate axis to 4Hp, per gate block (i,f,g,o)."""
    lead = w.shape[:-1]
    w = w.reshape(lead + (4, H))
    w = jnp.pad(w, [(0, 0)] * len(lead) + [(0, 0), (0, Hp - H)])
    return w.reshape(lead + (4 * Hp,))


def prepare_params(params, *, hidden_size, nb_layer, fc_tile_n=2048):
    H = hidden_size
    Hp = _round_up(H, 128)
    E = params["emb"].shape[1]
    E_pad = _round_up(E, 128)
    V = params["fc_w"].shape[1]
    TN = min(fc_tile_n, _round_up(V, 128))   # toy vocab -> grid collapses to 1
    V_pad = _round_up(V, TN)

    lstm = []
    for layer in range(nb_layer):
        wih, whh, b = params["lstm"][layer]
        if layer == 0:
            wih = jnp.pad(wih, ((0, E_pad - E), (0, 0)))     # zero input rows
        else:
            wih = jnp.pad(wih, ((0, Hp - H), (0, 0)))
        wih = _pad_gates(wih, H, Hp)                         # [D_in, 4Hp]
        whh = _pad_gates(jnp.pad(whh, ((0, Hp - H), (0, 0))), H, Hp)
        b = _pad_gates(b, H, Hp)                             # [1, 4Hp]
        lstm.append((wih, whh, b))

    # bf16 weight stream (f32 accumulation inside the kernel); bias stays f32
    # (its bytes are negligible and it keeps the add exact).
    fc_w = jnp.pad(params["fc_w"], ((0, Hp - H), (0, V_pad - V)))
    fc_w = fc_w.astype(jnp.bfloat16)
    fc_b = jnp.pad(params["fc_b"], ((0, 0), (0, V_pad - V)))

    return {
        "emb": params["emb"], "lstm": lstm, "fc_w": fc_w, "fc_b": fc_b,
        "H": H, "Hp": Hp, "E": E, "E_pad": E_pad,
        "V": V, "V_pad": V_pad, "TN": TN, "nb_layer": nb_layer,
    }


# -------------------------------- JAX wrapper ----------------------------------

def lstm_word_net_forward(tokens, prepped, *, seq_length):
    """Mirrors LSTMWordNet.forward:
       emb(x).view(-1, T, E) -> multilayer LSTM (h0=c0=0) -> fc(out[:, -1, :])
    Inter-layer dropout is the eval-mode identity, so it is omitted.
    """
    emb = prepped["emb"]
    E, E_pad = prepped["E"], prepped["E_pad"]
    Hp = prepped["Hp"]
    V, V_pad, TN = prepped["V"], prepped["V_pad"], prepped["TN"]
    nb_layer = prepped["nb_layer"]

    B, T = tokens.shape
    assert T == seq_length
    B_pad = _round_up(B, 8)                  # sublane-aligned per-timestep slabs

    # Embedding gather + batch_first -> time-major + batch/E pad (JAX glue).
    x = jnp.take(emb, tokens.reshape(-1), axis=0).reshape(B, T, E)
    x = jnp.transpose(x, (1, 0, 2))                          # [T, B, E]
    x = jnp.pad(x, ((0, 0), (0, B_pad - B), (0, E_pad - E)))
    x = x.reshape(T * B_pad, E_pad)                          # [T*B_pad, E_pad]

    lstm_inputs = []
    for wih, whh, b in prepped["lstm"]:
        lstm_inputs += [wih, whh, b]

    # ---- call 1: recurrence (no grid -> single-buffered whole-array VMEM) ----
    lstm_bytes = 4 * (T * B_pad * E_pad                      # x
                      + B_pad * Hp                           # h_last
                      + T * B_pad * 4 * Hp + T * B_pad * Hp)  # scratch
    for wih, whh, b in prepped["lstm"]:
        lstm_bytes += 4 * (wih.size + whh.size + b.size)
    lstm_vmem = max(32 << 20, lstm_bytes + (4 << 20))

    h_last = pl.pallas_call(
        functools.partial(_lstm_kernel, nb_layer, T, B_pad, Hp),
        out_shape=jax.ShapeDtypeStruct((B_pad, Hp), jnp.float32),
        scratch_shapes=[
            pltpu.VMEM((T * B_pad, 4 * Hp), jnp.float32),    # zx (reused/layer)
            pltpu.VMEM((T * B_pad, Hp), jnp.float32),        # inter-layer h seq
        ],
        compiler_params=pltpu.CompilerParams(vmem_limit_bytes=lstm_vmem),
    )(x, *lstm_inputs)

    # ---- call 2: vocab-tiled FC (parallel grid axis -> v7x megacore OK) ------
    fc_bytes = 2 * (4 * B_pad * Hp                           # h_last (dbl-buf)
                    + 2 * Hp * TN                            # fc_w tile (bf16)
                    + 4 * TN                                 # fc_b tile
                    + 4 * B_pad * TN)                        # out tile
    fc_vmem = max(32 << 20, fc_bytes + (4 << 20))

    logits = pl.pallas_call(
        _fc_kernel,
        grid=(V_pad // TN,),
        in_specs=[
            pl.BlockSpec((B_pad, Hp), lambda j: (0, 0)),     # h_last (constant)
            pl.BlockSpec((Hp, TN), lambda j: (0, j)),        # stream fc_w tiles
            pl.BlockSpec((1, TN), lambda j: (0, j)),
        ],
        out_specs=pl.BlockSpec((B_pad, TN), lambda j: (0, j)),
        out_shape=jax.ShapeDtypeStruct((B_pad, V_pad), jnp.float32),
        compiler_params=pltpu.CompilerParams(
            dimension_semantics=("parallel",),
            vmem_limit_bytes=fc_vmem),
    )(h_last, prepped["fc_w"], prepped["fc_b"])

    return logits[:B, :V]


# ----------------------- pure-JAX reference (validation) -----------------------

def lstm_word_net_reference(tokens, params, *, seq_length, hidden_size,
                            nb_layer):
    emb = params["emb"]
    E = emb.shape[1]
    B = tokens.shape[0]
    H = hidden_size
    hi = jax.lax.Precision.HIGHEST
    x = jnp.take(emb, tokens.reshape(-1), axis=0).reshape(B, seq_length, E)
    h_seq = x
    for layer in range(nb_layer):
        wih, whh, b = params["lstm"][layer]
        h = jnp.zeros((B, H), jnp.float32)
        c = jnp.zeros((B, H), jnp.float32)
        outs = []
        for t in range(seq_length):
            z = (jnp.dot(h_seq[:, t, :], wih, precision=hi)
                 + jnp.dot(h, whh, precision=hi) + b)
            i = jax.nn.sigmoid(z[:, 0:H])
            f = jax.nn.sigmoid(z[:, H:2 * H])
            g = jnp.tanh(z[:, 2 * H:3 * H])
            o = jax.nn.sigmoid(z[:, 3 * H:4 * H])
            c = f * c + i * g
            h = o * jnp.tanh(c)
            outs.append(h)
        h_seq = jnp.stack(outs, axis=1)
    return (jnp.dot(h_seq[:, -1, :], params["fc_w"], precision=hi)
            + params["fc_b"])


# --------------------------- parameter construction ----------------------------

def init_params(key, *, vocab_size, emb_dim, hidden_size, nb_layer):
    """Deterministic synthetic parameters with the same shapes/roles as the
    PyTorch module (GloVe table replaced by a random frozen table)."""
    keys = jax.random.split(key, 3 + 4 * nb_layer)
    k = 1.0 / jnp.sqrt(hidden_size)

    emb = jax.random.normal(keys[0], (vocab_size, emb_dim), jnp.float32) * 0.1

    lstm_params = []
    for layer in range(nb_layer):
        in_dim = emb_dim if layer == 0 else hidden_size
        kw = keys[3 + 4 * layer: 3 + 4 * (layer + 1)]
        # torch stores weight_ih as [4H, in]; we keep the transpose [in, 4H].
        wih = jax.random.uniform(kw[0], (in_dim, 4 * hidden_size),
                                 jnp.float32, -k, k)
        whh = jax.random.uniform(kw[1], (hidden_size, 4 * hidden_size),
                                 jnp.float32, -k, k)
        b_ih = jax.random.uniform(kw[2], (4 * hidden_size,), jnp.float32, -k, k)
        b_hh = jax.random.uniform(kw[3], (4 * hidden_size,), jnp.float32, -k, k)
        b = (b_ih + b_hh).reshape(1, 4 * hidden_size)
        lstm_params.append((wih, whh, b))

    # nn.Linear(hidden_size, nb_classes): weight [V, H]; we keep transpose [H, V].
    fc_w = jax.random.uniform(keys[1], (hidden_size, vocab_size),
                              jnp.float32, -k, k)
    fc_b = jax.random.uniform(keys[2], (1, vocab_size), jnp.float32, -k, k)

    return {"emb": emb, "lstm": lstm_params, "fc_w": fc_w, "fc_b": fc_b}


# -------------------------------------- main ------------------------------------

if __name__ == "__main__":
    # Small, self-consistent config (stand-ins for config['WORD-LSTM'] / GloVe).
    BATCH = 2
    SEQ_LENGTH = 8
    EMB_DIM = 64          # TODO(synk): real GloVe-6B dim is 300; scaled down.
    HIDDEN = 32
    NB_LAYER = 2
    VOCAB = 256           # nb_classes == len(glove.itos); synthetic small vocab.

    key = jax.random.PRNGKey(0)
    pkey, tkey = jax.random.split(key)
    params = init_params(pkey, vocab_size=VOCAB, emb_dim=EMB_DIM,
                         hidden_size=HIDDEN, nb_layer=NB_LAYER)
    tokens = jax.random.randint(tkey, (BATCH, SEQ_LENGTH), 0, VOCAB, jnp.int32)

    # Pad + bf16-cast ONCE, outside the jitted forward.
    prepped = prepare_params(params, hidden_size=HIDDEN, nb_layer=NB_LAYER,
                             fc_tile_n=2048)

    fwd = jax.jit(lambda t: lstm_word_net_forward(
        t, prepped, seq_length=SEQ_LENGTH))

    logits = fwd(tokens)
    jax.block_until_ready(logits)
    assert logits.shape == (BATCH, VOCAB) and logits.dtype == jnp.float32

    # Tight check vs. a reference using the same bf16-quantized FC weights.
    params_q = {**params,
                "fc_w": params["fc_w"].astype(jnp.bfloat16).astype(jnp.float32)}
    ref_q = lstm_word_net_reference(tokens, params_q, seq_length=SEQ_LENGTH,
                                    hidden_size=HIDDEN, nb_layer=NB_LAYER)
    max_err_q = float(jnp.max(jnp.abs(logits - ref_q)))
    assert max_err_q < 2e-3, f"mismatch vs quantized-weight reference: {max_err_q}"

    # Loose check vs. the full-f32 reference (bf16 FC weight stream).
    ref = lstm_word_net_reference(tokens, params, seq_length=SEQ_LENGTH,
                                  hidden_size=HIDDEN, nb_layer=NB_LAYER)
    max_err = float(jnp.max(jnp.abs(logits - ref)))
    assert max_err < 2e-2, f"mismatch vs pure-JAX f32 reference: {max_err}"

    print("KERNEL_OK")
</pallas_src>

<mosaic_0001>
module attributes {stable_mosaic.version = 11 : i64} {
  func.func @_fc_kernel(%arg0: i32, %arg1: memref<8x128xf32, #tpu.memory_space<vmem>>, %arg2: memref<128x256xbf16, #tpu.memory_space<vmem>>, %arg3: memref<1x256xf32, #tpu.memory_space<vmem>>, %arg4: memref<8x256xf32, #tpu.memory_space<vmem>>) attributes {dimension_semantics = [#tpu.dimension_semantics<parallel>], iteration_bounds = array<i64: 1>, scalar_prefetch = 0 : i64, scratch_operands = 0 : i64, tpu.core_type = #tpu.core_type<tc>, window_params = [{pipeline_mode = #tpu.pipeline_mode<synchronous>, transform_indices = @transform_0, window_bounds = array<i64: 8, 128>}, {transform_indices = @transform_1, window_bounds = array<i64: 128, 256>}, {transform_indices = @transform_2, window_bounds = array<i64: 1, 256>}, {transform_indices = @transform_3, window_bounds = array<i64: 8, 256>}]} {
    %c0 = arith.constant 0 : index
    %c0_0 = arith.constant 0 : index
    %0 = vector.load %arg1[%c0, %c0_0] : memref<8x128xf32, #tpu.memory_space<vmem>>, vector<8x128xf32>
    %c0_1 = arith.constant 0 : index
    %c0_2 = arith.constant 0 : index
    %1 = vector.load %arg2[%c0_1, %c0_2] : memref<128x256xbf16, #tpu.memory_space<vmem>>, vector<128x256xbf16>
    %2 = arith.extf %1 : vector<128x256xbf16> to vector<128x256xf32>
    %cst = arith.constant dense<0.000000e+00> : vector<8x256xf32>
    %3 = tpu.matmul %0, %2, %cst {dimension_numbers = #tpu.dot_dimension_numbers<[1], [0], [0], [1], [0, 0, 1, 1], [], []>} : vector<8x128xf32>, vector<128x256xf32>, vector<8x256xf32> -> vector<8x256xf32>
    %c0_3 = arith.constant 0 : index
    %c0_4 = arith.constant 0 : index
    %4 = vector.load %arg3[%c0_3, %c0_4] : memref<1x256xf32, #tpu.memory_space<vmem>>, vector<1x256xf32>
    %5 = vector.broadcast %4 : vector<1x256xf32> to vector<8x256xf32>
    %6 = arith.addf %3, %5 : vector<8x256xf32>
    %c0_5 = arith.constant 0 : index
    %c0_6 = arith.constant 0 : index
    %7 = vector.load %arg4[%c0_5, %c0_6] : memref<8x256xf32, #tpu.memory_space<vmem>>, vector<8x256xf32>
    tpu.vector_store %arg4[%c0_5, %c0_6], %6 {strides = array<i32>} : memref<8x256xf32, #tpu.memory_space<vmem>>, vector<8x256xf32>,
    return
  }
  func.func @transform_0(%arg0: i32) -> (i32, i32) {
    %c0_i32 = arith.constant 0 : i32
    %c0_i32_0 = arith.constant 0 : i32
    %c0_i32_1 = arith.constant 0 : i32
    return %c0_i32, %c0_i32_0 : i32, i32
  }
  func.func @transform_1(%arg0: i32) -> (i32, i32) {
    %c0_i32 = arith.constant 0 : i32
    %c0_i32_0 = arith.constant 0 : i32
    return %c0_i32, %arg0 : i32, i32
  }
  func.func @transform_2(%arg0: i32) -> (i32, i32) {
    %c0_i32 = arith.constant 0 : i32
    %c0_i32_0 = arith.constant 0 : i32
    return %c0_i32, %arg0 : i32, i32
  }
  func.func @transform_3(%arg0: i32) -> (i32, i32) {
    %c0_i32 = arith.constant 0 : i32
    %c0_i32_0 = arith.constant 0 : i32
    return %c0_i32, %arg0 : i32, i32
  }
}

module attributes {stable_mosaic.version = 11 : i64} {
  func.func @_lstm_kernel(%arg0: memref<64x128xf32, #tpu.memory_space<vmem>>, %arg1: memref<128x512xf32, #tpu.memory_space<vmem>>, %arg2: memref<128x512xf32, #tpu.memory_space<vmem>>, %arg3: memref<1x512xf32, #tpu.memory_space<vmem>>, %arg4: memref<128x512xf32, #tpu.memory_space<vmem>>, %arg5: memref<128x512xf32, #tpu.memory_space<vmem>>, %arg6: memref<1x512xf32, #tpu.memory_space<vmem>>, %arg7: memref<8x128xf32, #tpu.memory_space<vmem>>, %arg8: memref<64x512xf32, #tpu.memory_space<vmem>>, %arg9: memref<64x128xf32, #tpu.memory_space<vmem>>) attributes {dimension_semantics = [], scalar_prefetch = 0 : i64, scratch_operands = 2 : i64, tpu.core_type = #tpu.core_type<tc>} {
    %c0 = arith.constant 0 : index
    %c0_0 = arith.constant 0 : index
    %0 = vector.load %arg0[%c0, %c0_0] : memref<64x128xf32, #tpu.memory_space<vmem>>, vector<64x128xf32>
    %c0_1 = arith.constant 0 : index
    %c0_2 = arith.constant 0 : index
    %1 = vector.load %arg1[%c0_1, %c0_2] : memref<128x512xf32, #tpu.memory_space<vmem>>, vector<128x512xf32>
    %cst = arith.constant dense<0.000000e+00> : vector<64x512xf32>
    %2 = tpu.matmul %0, %1, %cst {dimension_numbers = #tpu.dot_dimension_numbers<[1], [0], [0], [1], [0, 0, 1, 1], [], []>} : vector<64x128xf32>, vector<128x512xf32>, vector<64x512xf32> -> vector<64x512xf32>
    %c0_3 = arith.constant 0 : index
    %c0_4 = arith.constant 0 : index
    %3 = vector.load %arg3[%c0_3, %c0_4] : memref<1x512xf32, #tpu.memory_space<vmem>>, vector<1x512xf32>
    %4 = vector.broadcast %3 : vector<1x512xf32> to vector<64x512xf32>
    %5 = arith.addf %2, %4 : vector<64x512xf32>
    %c0_5 = arith.constant 0 : index
    %c0_6 = arith.constant 0 : index
    %6 = vector.load %arg8[%c0_5, %c0_6] : memref<64x512xf32, #tpu.memory_space<vmem>>, vector<64x512xf32>
    tpu.vector_store %arg8[%c0_5, %c0_6], %5 {strides = array<i32>} : memref<64x512xf32, #tpu.memory_space<vmem>>, vector<64x512xf32>,
    %cst_7 = arith.constant 0.000000e+00 : f32
    %7 = vector.broadcast %cst_7 : f32 to vector<8x128xf32>
    %cst_8 = arith.constant 0.000000e+00 : f32
    %8 = vector.broadcast %cst_8 : f32 to vector<8x128xf32>
    %c0_9 = arith.constant 0 : index
    %c0_10 = arith.constant 0 : index
    %9 = vector.load %arg8[%c0_9, %c0_10] : memref<64x512xf32, #tpu.memory_space<vmem>>, vector<8x512xf32>
    %c0_11 = arith.constant 0 : index
    %c0_12 = arith.constant 0 : index
    %10 = vector.load %arg2[%c0_11, %c0_12] : memref<128x512xf32, #tpu.memory_space<vmem>>, vector<128x512xf32>
    %cst_13 = arith.constant dense<0.000000e+00> : vector<8x512xf32>
    %11 = tpu.matmul %7, %10, %cst_13 {dimension_numbers = #tpu.dot_dimension_numbers<[1], [0], [0], [1], [0, 0, 1, 1], [], []>} : vector<8x128xf32>, vector<128x512xf32>, vector<8x512xf32> -> vector<8x512xf32>
    %12 = arith.addf %9, %11 : vector<8x512xf32>
    %13 = vector.extract_strided_slice %12 {offsets = [0, 0], sizes = [8, 128], strides = [1, 1]} : vector<8x512xf32> to vector<8x128xf32>
    %14 = arith.negf %13 : vector<8x128xf32>
    %15 = math.exp %14 : vector<8x128xf32>
    %cst_14 = arith.constant 1.000000e+00 : f32
    %16 = vector.broadcast %cst_14 : f32 to vector<8x128xf32>
    %17 = arith.addf %16, %15 : vector<8x128xf32>
    %18 = arith.divf %16, %17 : vector<8x128xf32>
    %19 = vector.extract_strided_slice %12 {offsets = [0, 128], sizes = [8, 128], strides = [1, 1]} : vector<8x512xf32> to vector<8x128xf32>
    %20 = arith.negf %19 : vector<8x128xf32>
    %21 = math.exp %20 : vector<8x128xf32>
    %cst_15 = arith.constant 1.000000e+00 : f32
    %22 = vector.broadcast %cst_15 : f32 to vector<8x128xf32>
    %23 = arith.addf %22, %21 : vector<8x128xf32>
    %24 = arith.divf %22, %23 : vector<8x128xf32>
    %25 = vector.extract_strided_slice %12 {offsets = [0, 256], sizes = [8, 128], strides = [1, 1]} : vector<8x512xf32> to vector<8x128xf32>
    %26 = math.tanh %25 : vector<8x128xf32>
    %27 = vector.extract_strided_slice %12 {offsets = [0, 384], sizes = [8, 128], strides = [1, 1]} : vector<8x512xf32> to vector<8x128xf32>
    %28 = arith.negf %27 : vector<8x128xf32>
    %29 = math.exp %28 : vector<8x128xf32>
    %cst_16 = arith.constant 1.000000e+00 : f32
    %30 = vector.broadcast %cst_16 : f32 to vector<8x128xf32>
    %31 = arith.addf %30, %29 : vector<8x128xf32>
    %32 = arith.divf %30, %31 : vector<8x128xf32>
    %33 = arith.mulf %24, %8 : vector<8x128xf32>
    %34 = arith.mulf %18, %26 : vector<8x128xf32>
    %35 = arith.addf %33, %34 : vector<8x128xf32>
    %36 = math.tanh %35 : vector<8x128xf32>
    %37 = arith.mulf %32, %36 : vector<8x128xf32>
    %c0_17 = arith.constant 0 : index
    %c0_18 = arith.constant 0 : index
    %38 = vector.load %arg9[%c0_17, %c0_18] : memref<64x128xf32, #tpu.memory_space<vmem>>, vector<8x128xf32>
    tpu.vector_store %arg9[%c0_17, %c0_18], %37 {strides = array<i32>} : memref<64x128xf32, #tpu.memory_space<vmem>>, vector<8x128xf32>,
    %c8 = arith.constant 8 : index
    %c0_19 = arith.constant 0 : index
    %39 = vector.load %arg8[%c8, %c0_19] : memref<64x512xf32, #tpu.memory_space<vmem>>, vector<8x512xf32>
    %c0_20 = arith.constant 0 : index
    %c0_21 = arith.constant 0 : index
    %40 = vector.load %arg2[%c0_20, %c0_21] : memref<128x512xf32, #tpu.memory_space<vmem>>, vector<128x512xf32>
    %cst_22 = arith.constant dense<0.000000e+00> : vector<8x512xf32>
    %41 = tpu.matmul %37, %40, %cst_22 {dimension_numbers = #tpu.dot_dimension_numbers<[1], [0], [0], [1], [0, 0, 1, 1], [], []>} : vector<8x128xf32>, vector<128x512xf32>, vector<8x512xf32> -> vector<8x512xf32>
    %42 = arith.addf %39, %41 : vector<8x512xf32>
    %43 = vector.extract_strided_slice %42 {offsets = [0, 0], sizes = [8, 128], strides = [1, 1]} : vector<8x512xf32> to vector<8x128xf32>
    %44 = arith.negf %43 : vector<8x128xf32>
    %45 = math.exp %44 : vector<8x128xf32>
    %cst_23 = arith.constant 1.000000e+00 : f32
    %46 = vector.broadcast %cst_23 : f32 to vector<8x128xf32>
    %47 = arith.addf %46, %45 : vector<8x128xf32>
    %48 = arith.divf %46, %47 : vector<8x128xf32>
    %49 = vector.extract_strided_slice %42 {offsets = [0, 128], sizes = [8, 128], strides = [1, 1]} : vector<8x512xf32> to vector<8x128xf32>
    %50 = arith.negf %49 : vector<8x128xf32>
    %51 = math.exp %50 : vector<8x128xf32>
    %cst_24 = arith.constant 1.000000e+00 : f32
    %52 = vector.broadcast %cst_24 : f32 to vector<8x128xf32>
    %53 = arith.addf %52, %51 : vector<8x128xf32>
    %54 = arith.divf %52, %53 : vector<8x128xf32>
    %55 = vector.extract_strided_slice %42 {offsets = [0, 256], sizes = [8, 128], strides = [1, 1]} : vector<8x512xf32> to vector<8x128xf32>
    %56 = math.tanh %55 : vector<8x128xf32>
    %57 = vector.extract_strided_slice %42 {offsets = [0, 384], sizes = [8, 128], strides = [1, 1]} : vector<8x512xf32> to vector<8x128xf32>
    %58 = arith.negf %57 : vector<8x128xf32>
    %59 = math.exp %58 : vector<8x128xf32>
    %cst_25 = arith.constant 1.000000e+00 : f32
    %60 = vector.broadcast %cst_25 : f32 to vector<8x128xf32>
    %61 = arith.addf %60, %59 : vector<8x128xf32>
    %62 = arith.divf %60, %61 : vector<8x128xf32>
    %63 = arith.mulf %54, %35 : vector<8x128xf32>
    %64 = arith.mulf %48, %56 : vector<8x128xf32>
    %65 = arith.addf %63, %64 : vector<8x128xf32>
    %66 = math.tanh %65 : vector<8x128xf32>
    %67 = arith.mulf %62, %66 : vector<8x128xf32>
    %c8_26 = arith.constant 8 : index
    %c0_27 = arith.constant 0 : index
    %68 = vector.load %arg9[%c8_26, %c0_27] : memref<64x128xf32, #tpu.memory_space<vmem>>, vector<8x128xf32>
    tpu.vector_store %arg9[%c8_26, %c0_27], %67 {strides = array<i32>} : memref<64x128xf32, #tpu.memory_space<vmem>>, vector<8x128xf32>,
    %c16 = arith.constant 16 : index
    %c0_28 = arith.constant 0 : index
    %69 = vector.load %arg8[%c16, %c0_28] : memref<64x512xf32, #tpu.memory_space<vmem>>, vector<8x512xf32>
    %c0_29 = arith.constant 0 : index
    %c0_30 = arith.constant 0 : index
    %70 = vector.load %arg2[%c0_29, %c0_30] : memref<128x512xf32, #tpu.memory_space<vmem>>, vector<128x512xf32>
    %cst_31 = arith.constant dense<0.000000e+00> : vector<8x512xf32>
    %71 = tpu.matmul %67, %70, %cst_31 {dimension_numbers = #tpu.dot_dimension_numbers<[1], [0], [0], [1], [0, 0, 1, 1], [], []>} : vector<8x128xf32>, vector<128x512xf32>, vector<8x512xf32> -> vector<8x512xf32>
    %72 = arith.addf %69, %71 : vector<8x512xf32>
    %73 = vector.extract_strided_slice %72 {offsets = [0, 0], sizes = [8, 128], strides = [1, 1]} : vector<8x512xf32> to vector<8x128xf32>
    %74 = arith.negf %73 : vector<8x128xf32>
    %75 = math.exp %74 : vector<8x128xf32>
    %cst_32 = arith.constant 1.000000e+00 : f32
    %76 = vector.broadcast %cst_32 : f32 to vector<8x128xf32>
    %77 = arith.addf %76, %75 : vector<8x128xf32>
    %78 = arith.divf %76, %77 : vector<8x128xf32>
    %79 = vector.extract_strided_slice %72 {offsets = [0, 128], sizes = [8, 128], strides = [1, 1]} : vector<8x512xf32> to vector<8x128xf32>
    %80 = arith.negf %79 : vector<8x128xf32>
    %81 = math.exp %80 : vector<8x128xf32>
    %cst_33 = arith.constant 1.000000e+00 : f32
    %82 = vector.broadcast %cst_33 : f32 to vector<8x128xf32>
    %83 = arith.addf %82, %81 : vector<8x128xf32>
    %84 = arith.divf %82, %83 : vector<8x128xf32>
    %85 = vector.extract_strided_slice %72 {offsets = [0, 256], sizes = [8, 128], strides = [1, 1]} : vector<8x512xf32> to vector<8x128xf32>
    %86 = math.tanh %85 : vector<8x128xf32>
    %87 = vector.extract_strided_slice %72 {offsets = [0, 384], sizes = [8, 128], strides = [1, 1]} : vector<8x512xf32> to vector<8x128xf32>
    %88 = arith.negf %87 : vector<8x128xf32>
    %89 = math.exp %88 : vector<8x128xf32>
    %cst_34 = arith.constant 1.000000e+00 : f32
    %90 = vector.broadcast %cst_34 : f32 to vector<8x128xf32>
    %91 = arith.addf %90, %89 : vector<8x128xf32>
    %92 = arith.divf %90, %91 : vector<8x128xf32>
    %93 = arith.mulf %84, %65 : vector<8x128xf32>
    %94 = arith.mulf %78, %86 : vector<8x128xf32>
    %95 = arith.addf %93, %94 : vector<8x128xf32>
    %96 = math.tanh %95 : vector<8x128xf32>
    %97 = arith.mulf %92, %96 : vector<8x128xf32>
    %c16_35 = arith.constant 16 : index
    %c0_36 = arith.constant 0 : index
    %98 = vector.load %arg9[%c16_35, %c0_36] : memref<64x128xf32, #tpu.memory_space<vmem>>, vector<8x128xf32>
    tpu.vector_store %arg9[%c16_35, %c0_36], %97 {strides = array<i32>} : memref<64x128xf32, #tpu.memory_space<vmem>>, vector<8x128xf32>,
    %c24 = arith.constant 24 : index
    %c0_37 = arith.constant 0 : index
    %99 = vector.load %arg8[%c24, %c0_37] : memref<64x512xf32, #tpu.memory_space<vmem>>, vector<8x512xf32>
    %c0_38 = arith.constant 0 : index
    %c0_39 = arith.constant 0 : index
    %100 = vector.load %arg2[%c0_38, %c0_39] : memref<128x512xf32, #tpu.memory_space<vmem>>, vector<128x512xf32>
    %cst_40 = arith.constant dense<0.000000e+00> : vector<8x512xf32>
    %101 = tpu.matmul %97, %100, %cst_40 {dimension_numbers = #tpu.dot_dimension_numbers<[1], [0], [0], [1], [0, 0, 1, 1], [], []>} : vector<8x128xf32>, vector<128x512xf32>, vector<8x512xf32> -> vector<8x512xf32>
    %102 = arith.addf %99, %101 : vector<8x512xf32>
    %103 = vector.extract_strided_slice %102 {offsets = [0, 0], sizes = [8, 128], strides = [1, 1]} : vector<8x512xf32> to vector<8x128xf32>
    %104 = arith.negf %103 : vector<8x128xf32>
    %105 = math.exp %104 : vector<8x128xf32>
    %cst_41 = arith.constant 1.000000e+00 : f32
    %106 = vector.broadcast %cst_41 : f32 to vector<8x128xf32>
    %107 = arith.addf %106, %105 : vector<8x128xf32>
    %108 = arith.divf %106, %107 : vector<8x128xf32>
    %109 = vector.extract_strided_slice %102 {offsets = [0, 128], sizes = [8, 128], strides = [1, 1]} : vector<8x512xf32> to vector<8x128xf32>
    %110 = arith.negf %109 : vector<8x128xf32>
    %111 = math.exp %110 : vector<8x128xf32>
    %cst_42 = arith.constant 1.000000e+00 : f32
    %112 = vector.broadcast %cst_42 : f32 to vector<8x128xf32>
    %113 = arith.addf %112, %111 : vector<8x128xf32>
    %114 = arith.divf %112, %113 : vector<8x128xf32>
    %115 = vector.extract_strided_slice %102 {offsets = [0, 256], sizes = [8, 128], strides = [1, 1]} : vector<8x512xf32> to vector<8x128xf32>
    %116 = math.tanh %115 : vector<8x128xf32>
    %117 = vector.extract_strided_slice %102 {offsets = [0, 384], sizes = [8, 128], strides = [1, 1]} : vector<8x512xf32> to vector<8x128xf32>
    %118 = arith.negf %117 : vector<8x128xf32>
    %119 = math.exp %118 : vector<8x128xf32>
    %cst_43 = arith.constant 1.000000e+00 : f32
    %120 = vector.broadcast %cst_43 : f32 to vector<8x128xf32>
    %121 = arith.addf %120, %119 : vector<8x128xf32>
    %122 = arith.divf %120, %121 : vector<8x128xf32>
    %123 = arith.mulf %114, %95 : vector<8x128xf32>
    %124 = arith.mulf %108, %116 : vector<8x128xf32>
    %125 = arith.addf %123, %124 : vector<8x128xf32>
    %126 = math.tanh %125 : vector<8x128xf32>
    %127 = arith.mulf %122, %126 : vector<8x128xf32>
    %c24_44 = arith.constant 24 : index
    %c0_45 = arith.constant 0 : index
    %128 = vector.load %arg9[%c24_44, %c0_45] : memref<64x128xf32, #tpu.memory_space<vmem>>, vector<8x128xf32>
    tpu.vector_store %arg9[%c24_44, %c0_45], %127 {strides = array<i32>} : memref<64x128xf32, #tpu.memory_space<vmem>>, vector<8x128xf32>,
    %c32 = arith.constant 32 : index
    %c0_46 = arith.constant 0 : index
    %129 = vector.load %arg8[%c32, %c0_46] : memref<64x512xf32, #tpu.memory_space<vmem>>, vector<8x512xf32>
    %c0_47 = arith.constant 0 : index
    %c0_48 = arith.constant 0 : index
    %130 = vector.load %arg2[%c0_47, %c0_48] : memref<128x512xf32, #tpu.memory_space<vmem>>, vector<128x512xf32>
    %cst_49 = arith.constant dense<0.000000e+00> : vector<8x512xf32>
    %131 = tpu.matmul %127, %130, %cst_49 {dimension_numbers = #tpu.dot_dimension_numbers<[1], [0], [0], [1], [0, 0, 1, 1], [], []>} : vector<8x128xf32>, vector<128x512xf32>, vector<8x512xf32> -> vector<8x512xf32>
    %132 = arith.addf %129, %131 : vector<8x512xf32>
    %133 = vector.extract_strided_slice %132 {offsets = [0, 0], sizes = [8, 128], strides = [1, 1]} : vector<8x512xf32> to vector<8x128xf32>
    %134 = arith.negf %133 : vector<8x128xf32>
    %135 = math.exp %134 : vector<8x128xf32>
    %cst_50 = arith.constant 1.000000e+00 : f32
    %136 = vector.broadcast %cst_50 : f32 to vector<8x128xf32>
    %137 = arith.addf %136, %135 : vector<8x128xf32>
    %138 = arith.divf %136, %137 : vector<8x128xf32>
    %139 = vector.extract_strided_slice %132 {offsets = [0, 128], sizes = [8, 128], strides = [1, 1]} : vector<8x512xf32> to vector<8x128xf32>
    %140 = arith.negf %139 : vector<8x128xf32>
    %141 = math.exp %140 : vector<8x128xf32>
    %cst_51 = arith.constant 1.000000e+00 : f32
    %142 = vector.broadcast %cst_51 : f32 to vector<8x128xf32>
    %143 = arith.addf %142, %141 : vector<8x128xf32>
    %144 = arith.divf %142, %143 : vector<8x128xf32>
    %145 = vector.extract_strided_slice %132 {offsets = [0, 256], sizes = [8, 128], strides = [1, 1]} : vector<8x512xf32> to vector<8x128xf32>
    %146 = math.tanh %145 : vector<8x128xf32>
    %147 = vector.extract_strided_slice %132 {offsets = [0, 384], sizes = [8, 128], strides = [1, 1]} : vector<8x512xf32> to vector<8x128xf32>
    %148 = arith.negf %147 : vector<8x128xf32>
    %149 = math.exp %148 : vector<8x128xf32>
    %cst_52 = arith.constant 1.000000e+00 : f32
    %150 = vector.broadcast %cst_52 : f32 to vector<8x128xf32>
    %151 = arith.addf %150, %149 : vector<8x128xf32>
    %152 = arith.divf %150, %151 : vector<8x128xf32>
    %153 = arith.mulf %144, %125 : vector<8x128xf32>
    %154 = arith.mulf %138, %146 : vector<8x128xf32>
    %155 = arith.addf %153, %154 : vector<8x128xf32>
    %156 = math.tanh %155 : vector<8x128xf32>
    %157 = arith.mulf %152, %156 : vector<8x128xf32>
    %c32_53 = arith.constant 32 : index
    %c0_54 = arith.constant 0 : index
    %158 = vector.load %arg9[%c32_53, %c0_54] : memref<64x128xf32, #tpu.memory_space<vmem>>, vector<8x128xf32>
    tpu.vector_store %arg9[%c32_53, %c0_54], %157 {strides = array<i32>} : memref<64x128xf32, #tpu.memory_space<vmem>>, vector<8x128xf32>,
    %c40 = arith.constant 40 : index
    %c0_55 = arith.constant 0 : index
    %159 = vector.load %arg8[%c40, %c0_55] : memref<64x512xf32, #tpu.memory_space<vmem>>, vector<8x512xf32>
    %c0_56 = arith.constant 0 : index
    %c0_57 = arith.constant 0 : index
    %160 = vector.load %arg2[%c0_56, %c0_57] : memref<128x512xf32, #tpu.memory_space<vmem>>, vector<128x512xf32>
    %cst_58 = arith.constant dense<0.000000e+00> : vector<8x512xf32>
    %161 = tpu.matmul %157, %160, %cst_58 {dimension_numbers = #tpu.dot_dimension_numbers<[1], [0], [0], [1], [0, 0, 1, 1], [], []>} : vector<8x128xf32>, vector<128x512xf32>, vector<8x512xf32> -> vector<8x512xf32>
    %162 = arith.addf %159, %161 : vector<8x512xf32>
    %163 = vector.extract_strided_slice %162 {offsets = [0, 0], sizes = [8, 128], strides = [1, 1]} : vector<8x512xf32> to vector<8x128xf32>
    %164 = arith.negf %163 : vector<8x128xf32>
    %165 = math.exp %164 : vector<8x128xf32>
    %cst_59 = arith.constant 1.000000e+00 : f32
    %166 = vector.broadcast %cst_59 : f32 to vector<8x128xf32>
    %167 = arith.addf %166, %165 : vector<8x128xf32>
    %168 = arith.divf %166, %167 : vector<8x128xf32>
    %169 = vector.extract_strided_slice %162 {offsets = [0, 128], sizes = [8, 128], strides = [1, 1]} : vector<8x512xf32> to vector<8x128xf32>
    %170 = arith.negf %169 : vector<8x128xf32>
    %171 = math.exp %170 : vector<8x128xf32>
    %cst_60 = arith.constant 1.000000e+00 : f32
    %172 = vector.broadcast %cst_60 : f32 to vector<8x128xf32>
    %173 = arith.addf %172, %171 : vector<8x128xf32>
    %174 = arith.divf %172, %173 : vector<8x128xf32>
    %175 = vector.extract_strided_slice %162 {offsets = [0, 256], sizes = [8, 128], strides = [1, 1]} : vector<8x512xf32> to vector<8x128xf32>
    %176 = math.tanh %175 : vector<8x128xf32>
    %177 = vector.extract_strided_slice %162 {offsets = [0, 384], sizes = [8, 128], strides = [1, 1]} : vector<8x512xf32> to vector<8x128xf32>
    %178 = arith.negf %177 : vector<8x128xf32>
    %179 = math.exp %178 : vector<8x128xf32>
    %cst_61 = arith.constant 1.000000e+00 : f32
    %180 = vector.broadcast %cst_61 : f32 to vector<8x128xf32>
    %181 = arith.addf %180, %179 : vector<8x128xf32>
    %182 = arith.divf %180, %181 : vector<8x128xf32>
    %183 = arith.mulf %174, %155 : vector<8x128xf32>
    %184 = arith.mulf %168, %176 : vector<8x128xf32>
    %185 = arith.addf %183, %184 : vector<8x128xf32>
    %186 = math.tanh %185 : vector<8x128xf32>
    %187 = arith.mulf %182, %186 : vector<8x128xf32>
    %c40_62 = arith.constant 40 : index
    %c0_63 = arith.constant 0 : index
    %188 = vector.load %arg9[%c40_62, %c0_63] : memref<64x128xf32, #tpu.memory_space<vmem>>, vector<8x128xf32>
    tpu.vector_store %arg9[%c40_62, %c0_63], %187 {strides = array<i32>} : memref<64x128xf32, #tpu.memory_space<vmem>>, vector<8x128xf32>,
    %c48 = arith.constant 48 : index
    %c0_64 = arith.constant 0 : index
    %189 = vector.load %arg8[%c48, %c0_64] : memref<64x512xf32, #tpu.memory_space<vmem>>, vector<8x512xf32>
    %c0_65 = arith.constant 0 : index
    %c0_66 = arith.constant 0 : index
    %190 = vector.load %arg2[%c0_65, %c0_66] : memref<128x512xf32, #tpu.memory_space<vmem>>, vector<128x512xf32>
    %cst_67 = arith.constant dense<0.000000e+00> : vector<8x512xf32>
    %191 = tpu.matmul %187, %190, %cst_67 {dimension_numbers = #tpu.dot_dimension_numbers<[1], [0], [0], [1], [0, 0, 1, 1], [], []>} : vector<8x128xf32>, vector<128x512xf32>, vector<8x512xf32> -> vector<8x512xf32>
    %192 = arith.addf %189, %191 : vector<8x512xf32>
    %193 = vector.extract_strided_slice %192 {offsets = [0, 0], sizes = [8, 128], strides = [1, 1]} : vector<8x512xf32> to vector<8x128xf32>
    %194 = arith.negf %193 : vector<8x128xf32>
    %195 = math.exp %194 : vector<8x128xf32>
    %cst_68 = arith.constant 1.000000e+00 : f32
    %196 = vector.broadcast %cst_68 : f32 to vector<8x128xf32>
    %197 = arith.addf %196, %195 : vector<8x128xf32>
    %198 = arith.divf %196, %197 : vector<8x128xf32>
    %199 = vector.extract_strided_slice %192 {offsets = [0, 128], sizes = [8, 128], strides = [1, 1]} : vector<8x512xf32> to vector<8x128xf32>
    %200 = arith.negf %199 : vector<8x128xf32>
    %201 = math.exp %200 : vector<8x128xf32>
    %cst_69 = arith.constant 1.000000e+00 : f32
    %202 = vector.broadcast %cst_69 : f32 to vector<8x128xf32>
    %203 = arith.addf %202, %201 : vector<8x128xf32>
    %204 = arith.divf %202, %203 : vector<8x128xf32>
    %205 = vector.extract_strided_slice %192 {offsets = [0, 256], sizes = [8, 128], strides = [1, 1]} : vector<8x512xf32> to vector<8x128xf32>
    %206 = math.tanh %205 : vector<8x128xf32>
    %207 = vector.extract_strided_slice %192 {offsets = [0, 384], sizes = [8, 128], strides = [1, 1]} : vector<8x512xf32> to vector<8x128xf32>
    %208 = arith.negf %207 : vector<8x128xf32>
    %209 = math.exp %208 : vector<8x128xf32>
    %cst_70 = arith.constant 1.000000e+00 : f32
    %210 = vector.broadcast %cst_70 : f32 to vector<8x128xf32>
    %211 = arith.addf %210, %209 : vector<8x128xf32>
    %212 = arith.divf %210, %211 : vector<8x128xf32>
    %213 = arith.mulf %204, %185 : vector<8x128xf32>
    %214 = arith.mulf %198, %206 : vector<8x128xf32>
    %215 = arith.addf %213, %214 : vector<8x128xf32>
    %216 = math.tanh %215 : vector<8x128xf32>
    %217 = arith.mulf %212, %216 : vector<8x128xf32>
    %c48_71 = arith.constant 48 : index
    %c0_72 = arith.constant 0 : index
    %218 = vector.load %arg9[%c48_71, %c0_72] : memref<64x128xf32, #tpu.memory_space<vmem>>, vector<8x128xf32>
    tpu.vector_store %arg9[%c48_71, %c0_72], %217 {strides = array<i32>} : memref<64x128xf32, #tpu.memory_space<vmem>>, vector<8x128xf32>,
    %c56 = arith.constant 56 : index
    %c0_73 = arith.constant 0 : index
    %219 = vector.load %arg8[%c56, %c0_73] : memref<64x512xf32, #tpu.memory_space<vmem>>, vector<8x512xf32>
    %c0_74 = arith.constant 0 : index
    %c0_75 = arith.constant 0 : index
    %220 = vector.load %arg2[%c0_74, %c0_75] : memref<128x512xf32, #tpu.memory_space<vmem>>, vector<128x512xf32>
    %cst_76 = arith.constant dense<0.000000e+00> : vector<8x512xf32>
    %221 = tpu.matmul %217, %220, %cst_76 {dimension_numbers = #tpu.dot_dimension_numbers<[1], [0], [0], [1], [0, 0, 1, 1], [], []>} : vector<8x128xf32>, vector<128x512xf32>, vector<8x512xf32> -> vector<8x512xf32>
    %222 = arith.addf %219, %221 : vector<8x512xf32>
    %223 = vector.extract_strided_slice %222 {offsets = [0, 0], sizes = [8, 128], strides = [1, 1]} : vector<8x512xf32> to vector<8x128xf32>
    %224 = arith.negf %223 : vector<8x128xf32>
    %225 = math.exp %224 : vector<8x128xf32>
    %cst_77 = arith.constant 1.000000e+00 : f32
    %226 = vector.broadcast %cst_77 : f32 to vector<8x128xf32>
    %227 = arith.addf %226, %225 : vector<8x128xf32>
    %228 = arith.divf %226, %227 : vector<8x128xf32>
    %229 = vector.extract_strided_slice %222 {offsets = [0, 128], sizes = [8, 128], strides = [1, 1]} : vector<8x512xf32> to vector<8x128xf32>
    %230 = arith.negf %229 : vector<8x128xf32>
    %231 = math.exp %230 : vector<8x128xf32>
    %cst_78 = arith.constant 1.000000e+00 : f32
    %232 = vector.broadcast %cst_78 : f32 to vector<8x128xf32>
    %233 = arith.addf %232, %231 : vector<8x128xf32>
    %234 = arith.divf %232, %233 : vector<8x128xf32>
    %235 = vector.extract_strided_slice %222 {offsets = [0, 256], sizes = [8, 128], strides = [1, 1]} : vector<8x512xf32> to vector<8x128xf32>
    %236 = math.tanh %235 : vector<8x128xf32>
    %237 = vector.extract_strided_slice %222 {offsets = [0, 384], sizes = [8, 128], strides = [1, 1]} : vector<8x512xf32> to vector<8x128xf32>
    %238 = arith.negf %237 : vector<8x128xf32>
    %239 = math.exp %238 : vector<8x128xf32>
    %cst_79 = arith.constant 1.000000e+00 : f32
    %240 = vector.broadcast %cst_79 : f32 to vector<8x128xf32>
    %241 = arith.addf %240, %239 : vector<8x128xf32>
    %242 = arith.divf %240, %241 : vector<8x128xf32>
    %243 = arith.mulf %234, %215 : vector<8x128xf32>
    %244 = arith.mulf %228, %236 : vector<8x128xf32>
    %245 = arith.addf %243, %244 : vector<8x128xf32>
    %246 = math.tanh %245 : vector<8x128xf32>
    %247 = arith.mulf %242, %246 : vector<8x128xf32>
    %c56_80 = arith.constant 56 : index
    %c0_81 = arith.constant 0 : index
    %248 = vector.load %arg9[%c56_80, %c0_81] : memref<64x128xf32, #tpu.memory_space<vmem>>, vector<8x128xf32>
    tpu.vector_store %arg9[%c56_80, %c0_81], %247 {strides = array<i32>} : memref<64x128xf32, #tpu.memory_space<vmem>>, vector<8x128xf32>,
    %c0_82 = arith.constant 0 : index
    %c0_83 = arith.constant 0 : index
    %249 = vector.load %arg9[%c0_82, %c0_83] : memref<64x128xf32, #tpu.memory_space<vmem>>, vector<64x128xf32>
    %c0_84 = arith.constant 0 : index
    %c0_85 = arith.constant 0 : index
    %250 = vector.load %arg4[%c0_84, %c0_85] : memref<128x512xf32, #tpu.memory_space<vmem>>, vector<128x512xf32>
    %cst_86 = arith.constant dense<0.000000e+00> : vector<64x512xf32>
    %251 = tpu.matmul %249, %250, %cst_86 {dimension_numbers = #tpu.dot_dimension_numbers<[1], [0], [0], [1], [0, 0, 1, 1], [], []>} : vector<64x128xf32>, vector<128x512xf32>, vector<64x512xf32> -> vector<64x512xf32>
    %c0_87 = arith.constant 0 : index
    %c0_88 = arith.constant 0 : index
    %252 = vector.load %arg6[%c0_87, %c0_88] : memref<1x512xf32, #tpu.memory_space<vmem>>, vector<1x512xf32>
    %253 = vector.broadcast %252 : vector<1x512xf32> to vector<64x512xf32>
    %254 = arith.addf %251, %253 : vector<64x512xf32>
    %c0_89 = arith.constant 0 : index
    %c0_90 = arith.constant 0 : index
    %255 = vector.load %arg8[%c0_89, %c0_90] : memref<64x512xf32, #tpu.memory_space<vmem>>, vector<64x512xf32>
    tpu.vector_store %arg8[%c0_89, %c0_90], %254 {strides = array<i32>} : memref<64x512xf32, #tpu.memory_space<vmem>>, vector<64x512xf32>,
    %cst_91 = arith.constant 0.000000e+00 : f32
    %256 = vector.broadcast %cst_91 : f32 to vector<8x128xf32>
    %cst_92 = arith.constant 0.000000e+00 : f32
    %257 = vector.broadcast %cst_92 : f32 to vector<8x128xf32>
    %c0_93 = arith.constant 0 : index
    %c0_94 = arith.constant 0 : index
    %258 = vector.load %arg8[%c0_93, %c0_94] : memref<64x512xf32, #tpu.memory_space<vmem>>, vector<8x512xf32>
    %c0_95 = arith.constant 0 : index
    %c0_96 = arith.constant 0 : index
    %259 = vector.load %arg5[%c0_95, %c0_96] : memref<128x512xf32, #tpu.memory_space<vmem>>, vector<128x512xf32>
    %cst_97 = arith.constant dense<0.000000e+00> : vector<8x512xf32>
    %260 = tpu.matmul %256, %259, %cst_97 {dimension_numbers = #tpu.dot_dimension_numbers<[1], [0], [0], [1], [0, 0, 1, 1], [], []>} : vector<8x128xf32>, vector<128x512xf32>, vector<8x512xf32> -> vector<8x512xf32>
    %261 = arith.addf %258, %260 : vector<8x512xf32>
    %262 = vector.extract_strided_slice %261 {offsets = [0, 0], sizes = [8, 128], strides = [1, 1]} : vector<8x512xf32> to vector<8x128xf32>
    %263 = arith.negf %262 : vector<8x128xf32>
    %264 = math.exp %263 : vector<8x128xf32>
    %cst_98 = arith.constant 1.000000e+00 : f32
    %265 = vector.broadcast %cst_98 : f32 to vector<8x128xf32>
    %266 = arith.addf %265, %264 : vector<8x128xf32>
    %267 = arith.divf %265, %266 : vector<8x128xf32>
    %268 = vector.extract_strided_slice %261 {offsets = [0, 128], sizes = [8, 128], strides = [1, 1]} : vector<8x512xf32> to vector<8x128xf32>
    %269 = arith.negf %268 : vector<8x128xf32>
    %270 = math.exp %269 : vector<8x128xf32>
    %cst_99 = arith.constant 1.000000e+00 : f32
    %271 = vector.broadcast %cst_99 : f32 to vector<8x128xf32>
    %272 = arith.addf %271, %270 : vector<8x128xf32>
    %273 = arith.divf %271, %272 : vector<8x128xf32>
    %274 = vector.extract_strided_slice %261 {offsets = [0, 256], sizes = [8, 128], strides = [1, 1]} : vector<8x512xf32> to vector<8x128xf32>
    %275 = math.tanh %274 : vector<8x128xf32>
    %276 = vector.extract_strided_slice %261 {offsets = [0, 384], sizes = [8, 128], strides = [1, 1]} : vector<8x512xf32> to vector<8x128xf32>
    %277 = arith.negf %276 : vector<8x128xf32>
    %278 = math.exp %277 : vector<8x128xf32>
    %cst_100 = arith.constant 1.000000e+00 : f32
    %279 = vector.broadcast %cst_100 : f32 to vector<8x128xf32>
    %280 = arith.addf %279, %278 : vector<8x128xf32>
    %281 = arith.divf %279, %280 : vector<8x128xf32>
    %282 = arith.mulf %273, %257 : vector<8x128xf32>
    %283 = arith.mulf %267, %275 : vector<8x128xf32>
    %284 = arith.addf %282, %283 : vector<8x128xf32>
    %285 = math.tanh %284 : vector<8x128xf32>
    %286 = arith.mulf %281, %285 : vector<8x128xf32>
    %c8_101 = arith.constant 8 : index
    %c0_102 = arith.constant 0 : index
    %287 = vector.load %arg8[%c8_101, %c0_102] : memref<64x512xf32, #tpu.memory_space<vmem>>, vector<8x512xf32>
    %c0_103 = arith.constant 0 : index
    %c0_104 = arith.constant 0 : index
    %288 = vector.load %arg5[%c0_103, %c0_104] : memref<128x512xf32, #tpu.memory_space<vmem>>, vector<128x512xf32>
    %cst_105 = arith.constant dense<0.000000e+00> : vector<8x512xf32>
    %289 = tpu.matmul %286, %288, %cst_105 {dimension_numbers = #tpu.dot_dimension_numbers<[1], [0], [0], [1], [0, 0, 1, 1], [], []>} : vector<8x128xf32>, vector<128x512xf32>, vector<8x512xf32> -> vector<8x512xf32>
    %290 = arith.addf %287, %289 : vector<8x512xf32>
    %291 = vector.extract_strided_slice %290 {offsets = [0, 0], sizes = [8, 128], strides = [1, 1]} : vector<8x512xf32> to vector<8x128xf32>
    %292 = arith.negf %291 : vector<8x128xf32>
    %293 = math.exp %292 : vector<8x128xf32>
    %cst_106 = arith.constant 1.000000e+00 : f32
    %294 = vector.broadcast %cst_106 : f32 to vector<8x128xf32>
    %295 = arith.addf %294, %293 : vector<8x128xf32>
    %296 = arith.divf %294, %295 : vector<8x128xf32>
    %297 = vector.extract_strided_slice %290 {offsets = [0, 128], sizes = [8, 128], strides = [1, 1]} : vector<8x512xf32> to vector<8x128xf32>
    %298 = arith.negf %297 : vector<8x128xf32>
    %299 = math.exp %298 : vector<8x128xf32>
    %cst_107 = arith.constant 1.000000e+00 : f32
    %300 = vector.broadcast %cst_107 : f32 to vector<8x128xf32>
    %301 = arith.addf %300, %299 : vector<8x128xf32>
    %302 = arith.divf %300, %301 : vector<8x128xf32>
    %303 = vector.extract_strided_slice %290 {offsets = [0, 256], sizes = [8, 128], strides = [1, 1]} : vector<8x512xf32> to vector<8x128xf32>
    %304 = math.tanh %303 : vector<8x128xf32>
    %305 = vector.extract_strided_slice %290 {offsets = [0, 384], sizes = [8, 128], strides = [1, 1]} : vector<8x512xf32> to vector<8x128xf32>
    %306 = arith.negf %305 : vector<8x128xf32>
    %307 = math.exp %306 : vector<8x128xf32>
    %cst_108 = arith.constant 1.000000e+00 : f32
    %308 = vector.broadcast %cst_108 : f32 to vector<8x128xf32>
    %309 = arith.addf %308, %307 : vector<8x128xf32>
    %310 = arith.divf %308, %309 : vector<8x128xf32>
    %311 = arith.mulf %302, %284 : vector<8x128xf32>
    %312 = arith.mulf %296, %304 : vector<8x128xf32>
    %313 = arith.addf %311, %312 : vector<8x128xf32>
    %314 = math.tanh %313 : vector<8x128xf32>
    %315 = arith.mulf %310, %314 : vector<8x128xf32>
    %c16_109 = arith.constant 16 : index
    %c0_110 = arith.constant 0 : index
    %316 = vector.load %arg8[%c16_109, %c0_110] : memref<64x512xf32, #tpu.memory_space<vmem>>, vector<8x512xf32>
    %c0_111 = arith.constant 0 : index
    %c0_112 = arith.constant 0 : index
    %317 = vector.load %arg5[%c0_111, %c0_112] : memref<128x512xf32, #tpu.memory_space<vmem>>, vector<128x512xf32>
    %cst_113 = arith.constant dense<0.000000e+00> : vector<8x512xf32>
    %318 = tpu.matmul %315, %317, %cst_113 {dimension_numbers = #tpu.dot_dimension_numbers<[1], [0], [0], [1], [0, 0, 1, 1], [], []>} : vector<8x128xf32>, vector<128x512xf32>, vector<8x512xf32> -> vector<8x512xf32>
    %319 = arith.addf %316, %318 : vector<8x512xf32>
    %320 = vector.extract_strided_slice %319 {offsets = [0, 0], sizes = [8, 128], strides = [1, 1]} : vector<8x512xf32> to vector<8x128xf32>
    %321 = arith.negf %320 : vector<8x128xf32>
    %322 = math.exp %321 : vector<8x128xf32>
    %cst_114 = arith.constant 1.000000e+00 : f32
    %323 = vector.broadcast %cst_114 : f32 to vector<8x128xf32>
    %324 = arith.addf %323, %322 : vector<8x128xf32>
    %325 = arith.divf %323, %324 : vector<8x128xf32>
    %326 = vector.extract_strided_slice %319 {offsets = [0, 128], sizes = [8, 128], strides = [1, 1]} : vector<8x512xf32> to vector<8x128xf32>
    %327 = arith.negf %326 : vector<8x128xf32>
    %328 = math.exp %327 : vector<8x128xf32>
    %cst_115 = arith.constant 1.000000e+00 : f32
    %329 = vector.broadcast %cst_115 : f32 to vector<8x128xf32>
    %330 = arith.addf %329, %328 : vector<8x128xf32>
    %331 = arith.divf %329, %330 : vector<8x128xf32>
    %332 = vector.extract_strided_slice %319 {offsets = [0, 256], sizes = [8, 128], strides = [1, 1]} : vector<8x512xf32> to vector<8x128xf32>
    %333 = math.tanh %332 : vector<8x128xf32>
    %334 = vector.extract_strided_slice %319 {offsets = [0, 384], sizes = [8, 128], strides = [1, 1]} : vector<8x512xf32> to vector<8x128xf32>
    %335 = arith.negf %334 : vector<8x128xf32>
    %336 = math.exp %335 : vector<8x128xf32>
    %cst_116 = arith.constant 1.000000e+00 : f32
    %337 = vector.broadcast %cst_116 : f32 to vector<8x128xf32>
    %338 = arith.addf %337, %336 : vector<8x128xf32>
    %339 = arith.divf %337, %338 : vector<8x128xf32>
    %340 = arith.mulf %331, %313 : vector<8x128xf32>
    %341 = arith.mulf %325, %333 : vector<8x128xf32>
    %342 = arith.addf %340, %341 : vector<8x128xf32>
    %343 = math.tanh %342 : vector<8x128xf32>
    %344 = arith.mulf %339, %343 : vector<8x128xf32>
    %c24_117 = arith.constant 24 : index
    %c0_118 = arith.constant 0 : index
    %345 = vector.load %arg8[%c24_117, %c0_118] : memref<64x512xf32, #tpu.memory_space<vmem>>, vector<8x512xf32>
    %c0_119 = arith.constant 0 : index
    %c0_120 = arith.constant 0 : index
    %346 = vector.load %arg5[%c0_119, %c0_120] : memref<128x512xf32, #tpu.memory_space<vmem>>, vector<128x512xf32>
    %cst_121 = arith.constant dense<0.000000e+00> : vector<8x512xf32>
    %347 = tpu.matmul %344, %346, %cst_121 {dimension_numbers = #tpu.dot_dimension_numbers<[1], [0], [0], [1], [0, 0, 1, 1], [], []>} : vector<8x128xf32>, vector<128x512xf32>, vector<8x512xf32> -> vector<8x512xf32>
    %348 = arith.addf %345, %347 : vector<8x512xf32>
    %349 = vector.extract_strided_slice %348 {offsets = [0, 0], sizes = [8, 128], strides = [1, 1]} : vector<8x512xf32> to vector<8x128xf32>
    %350 = arith.negf %349 : vector<8x128xf32>
    %351 = math.exp %350 : vector<8x128xf32>
    %cst_122 = arith.constant 1.000000e+00 : f32
    %352 = vector.broadcast %cst_122 : f32 to vector<8x128xf32>
    %353 = arith.addf %352, %351 : vector<8x128xf32>
    %354 = arith.divf %352, %353 : vector<8x128xf32>
    %355 = vector.extract_strided_slice %348 {offsets = [0, 128], sizes = [8, 128], strides = [1, 1]} : vector<8x512xf32> to vector<8x128xf32>
    %356 = arith.negf %355 : vector<8x128xf32>
    %357 = math.exp %356 : vector<8x128xf32>
    %cst_123 = arith.constant 1.000000e+00 : f32
    %358 = vector.broadcast %cst_123 : f32 to vector<8x128xf32>
    %359 = arith.addf %358, %357 : vector<8x128xf32>
    %360 = arith.divf %358, %359 : vector<8x128xf32>
    %361 = vector.extract_strided_slice %348 {offsets = [0, 256], sizes = [8, 128], strides = [1, 1]} : vector<8x512xf32> to vector<8x128xf32>
    %362 = math.tanh %361 : vector<8x128xf32>
    %363 = vector.extract_strided_slice %348 {offsets = [0, 384], sizes = [8, 128], strides = [1, 1]} : vector<8x512xf32> to vector<8x128xf32>
    %364 = arith.negf %363 : vector<8x128xf32>
    %365 = math.exp %364 : vector<8x128xf32>
    %cst_124 = arith.constant 1.000000e+00 : f32
    %366 = vector.broadcast %cst_124 : f32 to vector<8x128xf32>
    %367 = arith.addf %366, %365 : vector<8x128xf32>
    %368 = arith.divf %366, %367 : vector<8x128xf32>
    %369 = arith.mulf %360, %342 : vector<8x128xf32>
    %370 = arith.mulf %354, %362 : vector<8x128xf32>
    %371 = arith.addf %369, %370 : vector<8x128xf32>
    %372 = math.tanh %371 : vector<8x128xf32>
    %373 = arith.mulf %368, %372 : vector<8x128xf32>
    %c32_125 = arith.constant 32 : index
    %c0_126 = arith.constant 0 : index
    %374 = vector.load %arg8[%c32_125, %c0_126] : memref<64x512xf32, #tpu.memory_space<vmem>>, vector<8x512xf32>
    %c0_127 = arith.constant 0 : index
    %c0_128 = arith.constant 0 : index
    %375 = vector.load %arg5[%c0_127, %c0_128] : memref<128x512xf32, #tpu.memory_space<vmem>>, vector<128x512xf32>
    %cst_129 = arith.constant dense<0.000000e+00> : vector<8x512xf32>
    %376 = tpu.matmul %373, %375, %cst_129 {dimension_numbers = #tpu.dot_dimension_numbers<[1], [0], [0], [1], [0, 0, 1, 1], [], []>} : vector<8x128xf32>, vector<128x512xf32>, vector<8x512xf32> -> vector<8x512xf32>
    %377 = arith.addf %374, %376 : vector<8x512xf32>
    %378 = vector.extract_strided_slice %377 {offsets = [0, 0], sizes = [8, 128], strides = [1, 1]} : vector<8x512xf32> to vector<8x128xf32>
    %379 = arith.negf %378 : vector<8x128xf32>
    %380 = math.exp %379 : vector<8x128xf32>
    %cst_130 = arith.constant 1.000000e+00 : f32
    %381 = vector.broadcast %cst_130 : f32 to vector<8x128xf32>
    %382 = arith.addf %381, %380 : vector<8x128xf32>
    %383 = arith.divf %381, %382 : vector<8x128xf32>
    %384 = vector.extract_strided_slice %377 {offsets = [0, 128], sizes = [8, 128], strides = [1, 1]} : vector<8x512xf32> to vector<8x128xf32>
    %385 = arith.negf %384 : vector<8x128xf32>
    %386 = math.exp %385 : vector<8x128xf32>
    %cst_131 = arith.constant 1.000000e+00 : f32
    %387 = vector.broadcast %cst_131 : f32 to vector<8x128xf32>
    %388 = arith.addf %387, %386 : vector<8x128xf32>
    %389 = arith.divf %387, %388 : vector<8x128xf32>
    %390 = vector.extract_strided_slice %377 {offsets = [0, 256], sizes = [8, 128], strides = [1, 1]} : vector<8x512xf32> to vector<8x128xf32>
    %391 = math.tanh %390 : vector<8x128xf32>
    %392 = vector.extract_strided_slice %377 {offsets = [0, 384], sizes = [8, 128], strides = [1, 1]} : vector<8x512xf32> to vector<8x128xf32>
    %393 = arith.negf %392 : vector<8x128xf32>
    %394 = math.exp %393 : vector<8x128xf32>
    %cst_132 = arith.constant 1.000000e+00 : f32
    %395 = vector.broadcast %cst_132 : f32 to vector<8x128xf32>
    %396 = arith.addf %395, %394 : vector<8x128xf32>
    %397 = arith.divf %395, %396 : vector<8x128xf32>
    %398 = arith.mulf %389, %371 : vector<8x128xf32>
    %399 = arith.mulf %383, %391 : vector<8x128xf32>
    %400 = arith.addf %398, %399 : vector<8x128xf32>
    %401 = math.tanh %400 : vector<8x128xf32>
    %402 = arith.mulf %397, %401 : vector<8x128xf32>
    %c40_133 = arith.constant 40 : index
    %c0_134 = arith.constant 0 : index
    %403 = vector.load %arg8[%c40_133, %c0_134] : memref<64x512xf32, #tpu.memory_space<vmem>>, vector<8x512xf32>
    %c0_135 = arith.constant 0 : index
    %c0_136 = arith.constant 0 : index
    %404 = vector.load %arg5[%c0_135, %c0_136] : memref<128x512xf32, #tpu.memory_space<vmem>>, vector<128x512xf32>
    %cst_137 = arith.constant dense<0.000000e+00> : vector<8x512xf32>
    %405 = tpu.matmul %402, %404, %cst_137 {dimension_numbers = #tpu.dot_dimension_numbers<[1], [0], [0], [1], [0, 0, 1, 1], [], []>} : vector<8x128xf32>, vector<128x512xf32>, vector<8x512xf32> -> vector<8x512xf32>
    %406 = arith.addf %403, %405 : vector<8x512xf32>
    %407 = vector.extract_strided_slice %406 {offsets = [0, 0], sizes = [8, 128], strides = [1, 1]} : vector<8x512xf32> to vector<8x128xf32>
    %408 = arith.negf %407 : vector<8x128xf32>
    %409 = math.exp %408 : vector<8x128xf32>
    %cst_138 = arith.constant 1.000000e+00 : f32
    %410 = vector.broadcast %cst_138 : f32 to vector<8x128xf32>
    %411 = arith.addf %410, %409 : vector<8x128xf32>
    %412 = arith.divf %410, %411 : vector<8x128xf32>
    %413 = vector.extract_strided_slice %406 {offsets = [0, 128], sizes = [8, 128], strides = [1, 1]} : vector<8x512xf32> to vector<8x128xf32>
    %414 = arith.negf %413 : vector<8x128xf32>
    %415 = math.exp %414 : vector<8x128xf32>
    %cst_139 = arith.constant 1.000000e+00 : f32
    %416 = vector.broadcast %cst_139 : f32 to vector<8x128xf32>
    %417 = arith.addf %416, %415 : vector<8x128xf32>
    %418 = arith.divf %416, %417 : vector<8x128xf32>
    %419 = vector.extract_strided_slice %406 {offsets = [0, 256], sizes = [8, 128], strides = [1, 1]} : vector<8x512xf32> to vector<8x128xf32>
    %420 = math.tanh %419 : vector<8x128xf32>
    %421 = vector.extract_strided_slice %406 {offsets = [0, 384], sizes = [8, 128], strides = [1, 1]} : vector<8x512xf32> to vector<8x128xf32>
    %422 = arith.negf %421 : vector<8x128xf32>
    %423 = math.exp %422 : vector<8x128xf32>
    %cst_140 = arith.constant 1.000000e+00 : f32
    %424 = vector.broadcast %cst_140 : f32 to vector<8x128xf32>
    %425 = arith.addf %424, %423 : vector<8x128xf32>
    %426 = arith.divf %424, %425 : vector<8x128xf32>
    %427 = arith.mulf %418, %400 : vector<8x128xf32>
    %428 = arith.mulf %412, %420 : vector<8x128xf32>
    %429 = arith.addf %427, %428 : vector<8x128xf32>
    %430 = math.tanh %429 : vector<8x128xf32>
    %431 = arith.mulf %426, %430 : vector<8x128xf32>
    %c48_141 = arith.constant 48 : index
    %c0_142 = arith.constant 0 : index
    %432 = vector.load %arg8[%c48_141, %c0_142] : memref<64x512xf32, #tpu.memory_space<vmem>>, vector<8x512xf32>
    %c0_143 = arith.constant 0 : index
    %c0_144 = arith.constant 0 : index
    %433 = vector.load %arg5[%c0_143, %c0_144] : memref<128x512xf32, #tpu.memory_space<vmem>>, vector<128x512xf32>
    %cst_145 = arith.constant dense<0.000000e+00> : vector<8x512xf32>
    %434 = tpu.matmul %431, %433, %cst_145 {dimension_numbers = #tpu.dot_dimension_numbers<[1], [0], [0], [1], [0, 0, 1, 1], [], []>} : vector<8x128xf32>, vector<128x512xf32>, vector<8x512xf32> -> vector<8x512xf32>
    %435 = arith.addf %432, %434 : vector<8x512xf32>
    %436 = vector.extract_strided_slice %435 {offsets = [0, 0], sizes = [8, 128], strides = [1, 1]} : vector<8x512xf32> to vector<8x128xf32>
    %437 = arith.negf %436 : vector<8x128xf32>
    %438 = math.exp %437 : vector<8x128xf32>
    %cst_146 = arith.constant 1.000000e+00 : f32
    %439 = vector.broadcast %cst_146 : f32 to vector<8x128xf32>
    %440 = arith.addf %439, %438 : vector<8x128xf32>
    %441 = arith.divf %439, %440 : vector<8x128xf32>
    %442 = vector.extract_strided_slice %435 {offsets = [0, 128], sizes = [8, 128], strides = [1, 1]} : vector<8x512xf32> to vector<8x128xf32>
    %443 = arith.negf %442 : vector<8x128xf32>
    %444 = math.exp %443 : vector<8x128xf32>
    %cst_147 = arith.constant 1.000000e+00 : f32
    %445 = vector.broadcast %cst_147 : f32 to vector<8x128xf32>
    %446 = arith.addf %445, %444 : vector<8x128xf32>
    %447 = arith.divf %445, %446 : vector<8x128xf32>
    %448 = vector.extract_strided_slice %435 {offsets = [0, 256], sizes = [8, 128], strides = [1, 1]} : vector<8x512xf32> to vector<8x128xf32>
    %449 = math.tanh %448 : vector<8x128xf32>
    %450 = vector.extract_strided_slice %435 {offsets = [0, 384], sizes = [8, 128], strides = [1, 1]} : vector<8x512xf32> to vector<8x128xf32>
    %451 = arith.negf %450 : vector<8x128xf32>
    %452 = math.exp %451 : vector<8x128xf32>
    %cst_148 = arith.constant 1.000000e+00 : f32
    %453 = vector.broadcast %cst_148 : f32 to vector<8x128xf32>
    %454 = arith.addf %453, %452 : vector<8x128xf32>
    %455 = arith.divf %453, %454 : vector<8x128xf32>
    %456 = arith.mulf %447, %429 : vector<8x128xf32>
    %457 = arith.mulf %441, %449 : vector<8x128xf32>
    %458 = arith.addf %456, %457 : vector<8x128xf32>
    %459 = math.tanh %458 : vector<8x128xf32>
    %460 = arith.mulf %455, %459 : vector<8x128xf32>
    %c56_149 = arith.constant 56 : index
    %c0_150 = arith.constant 0 : index
    %461 = vector.load %arg8[%c56_149, %c0_150] : memref<64x512xf32, #tpu.memory_space<vmem>>, vector<8x512xf32>
    %c0_151 = arith.constant 0 : index
    %c0_152 = arith.constant 0 : index
    %462 = vector.load %arg5[%c0_151, %c0_152] : memref<128x512xf32, #tpu.memory_space<vmem>>, vector<128x512xf32>
    %cst_153 = arith.constant dense<0.000000e+00> : vector<8x512xf32>
    %463 = tpu.matmul %460, %462, %cst_153 {dimension_numbers = #tpu.dot_dimension_numbers<[1], [0], [0], [1], [0, 0, 1, 1], [], []>} : vector<8x128xf32>, vector<128x512xf32>, vector<8x512xf32> -> vector<8x512xf32>
    %464 = arith.addf %461, %463 : vector<8x512xf32>
    %465 = vector.extract_strided_slice %464 {offsets = [0, 0], sizes = [8, 128], strides = [1, 1]} : vector<8x512xf32> to vector<8x128xf32>
    %466 = arith.negf %465 : vector<8x128xf32>
    %467 = math.exp %466 : vector<8x128xf32>
    %cst_154 = arith.constant 1.000000e+00 : f32
    %468 = vector.broadcast %cst_154 : f32 to vector<8x128xf32>
    %469 = arith.addf %468, %467 : vector<8x128xf32>
    %470 = arith.divf %468, %469 : vector<8x128xf32>
    %471 = vector.extract_strided_slice %464 {offsets = [0, 128], sizes = [8, 128], strides = [1, 1]} : vector<8x512xf32> to vector<8x128xf32>
    %472 = arith.negf %471 : vector<8x128xf32>
    %473 = math.exp %472 : vector<8x128xf32>
    %cst_155 = arith.constant 1.000000e+00 : f32
    %474 = vector.broadcast %cst_155 : f32 to vector<8x128xf32>
    %475 = arith.addf %474, %473 : vector<8x128xf32>
    %476 = arith.divf %474, %475 : vector<8x128xf32>
    %477 = vector.extract_strided_slice %464 {offsets = [0, 256], sizes = [8, 128], strides = [1, 1]} : vector<8x512xf32> to vector<8x128xf32>
    %478 = math.tanh %477 : vector<8x128xf32>
    %479 = vector.extract_strided_slice %464 {offsets = [0, 384], sizes = [8, 128], strides = [1, 1]} : vector<8x512xf32> to vector<8x128xf32>
    %480 = arith.negf %479 : vector<8x128xf32>
    %481 = math.exp %480 : vector<8x128xf32>
    %cst_156 = arith.constant 1.000000e+00 : f32
    %482 = vector.broadcast %cst_156 : f32 to vector<8x128xf32>
    %483 = arith.addf %482, %481 : vector<8x128xf32>
    %484 = arith.divf %482, %483 : vector<8x128xf32>
    %485 = arith.mulf %476, %458 : vector<8x128xf32>
    %486 = arith.mulf %470, %478 : vector<8x128xf32>
    %487 = arith.addf %485, %486 : vector<8x128xf32>
    %488 = math.tanh %487 : vector<8x128xf32>
    %489 = arith.mulf %484, %488 : vector<8x128xf32>
    %c0_157 = arith.constant 0 : index
    %c0_158 = arith.constant 0 : index
    %490 = vector.load %arg7[%c0_157, %c0_158] : memref<8x128xf32, #tpu.memory_space<vmem>>, vector<8x128xf32>
    tpu.vector_store %arg7[%c0_157, %c0_158], %489 {strides = array<i32>} : memref<8x128xf32, #tpu.memory_space<vmem>>, vector<8x128xf32>,
    return
  }
}

</mosaic_0001>

<llo_original>
// kernel: _lambda_.3
$region0: #{_lambda_.3}
  #allocation0 [shape = 'u32[]', space=smem, size = 0x4, offset = 0x4, fixed_abs, tag = 'smem constant byte address 0x4 - core index']
  #allocation1 [shape = 'u32[144,128]{1,0:T(1,128)}', space=vmem, size = 0x12000, scoped, tag = 'internal scratch']
  %s0 = inlined_call_operand.vmem [shape: f32[8,128], index: 0, kind: input, shape index: {}]
  %s1 = inlined_call_operand.vmem [shape: bf16[128,256], index: 1, kind: input, shape index: {}]
  %s2 = inlined_call_operand.vmem [shape: f32[1,256], index: 2, kind: input, shape index: {}]
  %s3 = inlined_call_operand.vmem [shape: f32[8,256], index: 3, kind: output, shape index: {}]
  %s4 = sld [smem:[#allocation0]]
  $region22: #{_lambda_.3} parent=0
    _
  %s6 = ssub.s32 1, %s4
  %s7 = scalar_select 0, %s6, %s4
  // Predicated region
  $region2: #{_lambda_.3} parent=0 // pred_check
    _
  $region3: #{_lambda_.3} parent=0 // pred_check_branch
    %9 = sbr.rel (0) target = $region5
  $region4: #{_lambda_.3} parent=0 // pred_region
    _
  $region5: #{_lambda_.3} parent=0 // pred_fallthru
    _
  // Predicated region
  $region6: #{_lambda_.3} parent=0 // pred_check
    _
  $region7: #{_lambda_.3} parent=0 // pred_check_branch
    %11 = sbr.rel (0) target = $region9
  $region8: #{_lambda_.3} parent=0 // pred_region
    _
  $region9: #{_lambda_.3} parent=0 // pred_fallthru
    _
  // Predicated region
  $region10: #{_lambda_.3} parent=0 // pred_check
    _
  $region11: #{_lambda_.3} parent=0 // pred_check_branch
    %13 = sbr.rel (0) target = $region13
  $region12: #{_lambda_.3} parent=0 // pred_region
    _
  $region13: #{_lambda_.3} parent=0 // pred_fallthru
    _
  %v14 = vld [vmem:[%s0] sm:$0xff]
  %v15 = vld [vmem:[%s1] sm:$0xff]
  %v16 = vld [vmem:[%s1 + $0x8] sm:$0xff]
  %v17 = vld [vmem:[%s1 + $0x10] sm:$0xff]
  %v18 = vld [vmem:[%s1 + $0x18] sm:$0xff]
  %v19 = vld [vmem:[%s1 + $0x20] sm:$0xff]
  %v20 = vld [vmem:[%s1 + $0x28] sm:$0xff]
  %v21 = vld [vmem:[%s1 + $0x30] sm:$0xff]
  %v22 = vld [vmem:[%s1 + $0x38] sm:$0xff]
  %v23 = vld [vmem:[%s1 + $0x40] sm:$0xff]
  %v24 = vld [vmem:[%s1 + $0x48] sm:$0xff]
  %v25 = vld [vmem:[%s1 + $0x50] sm:$0xff]
  %v26 = vld [vmem:[%s1 + $0x58] sm:$0xff]
  %v27 = vld [vmem:[%s1 + $0x60] sm:$0xff]
  %v28 = vld [vmem:[%s1 + $0x68] sm:$0xff]
  %v29 = vld [vmem:[%s1 + $0x70] sm:$0xff]
  %v30 = vld [vmem:[%s1 + $0x78] sm:$0xff]
  %v31 = vunpack.c.l.bf16 %v15
  %v32 = vunpack.c.h.bf16 %v15
  %v33 = vunpack.c.l.bf16 %v16
  %v34 = vunpack.c.h.bf16 %v16
  %v35 = vunpack.c.l.bf16 %v17
  %v36 = vunpack.c.h.bf16 %v17
  %v37 = vunpack.c.l.bf16 %v18
  %v38 = vunpack.c.h.bf16 %v18
  %v39 = vunpack.c.l.bf16 %v19
  %v40 = vunpack.c.h.bf16 %v19
  %v41 = vunpack.c.l.bf16 %v20
  %v42 = vunpack.c.h.bf16 %v20
  %v43 = vunpack.c.l.bf16 %v21
  %v44 = vunpack.c.h.bf16 %v21
  %v45 = vunpack.c.l.bf16 %v22
  %v46 = vunpack.c.h.bf16 %v22
  %v47 = vunpack.c.l.bf16 %v23
  %v48 = vunpack.c.h.bf16 %v23
  %v49 = vunpack.c.l.bf16 %v24
  %v50 = vunpack.c.h.bf16 %v24
  %v51 = vunpack.c.l.bf16 %v25
  %v52 = vunpack.c.h.bf16 %v25
  %v53 = vunpack.c.l.bf16 %v26
  %v54 = vunpack.c.h.bf16 %v26
  %v55 = vunpack.c.l.bf16 %v27
  %v56 = vunpack.c.h.bf16 %v27
  %v57 = vunpack.c.l.bf16 %v28
  %v58 = vunpack.c.h.bf16 %v28
  %v59 = vunpack.c.l.bf16 %v29
  %v60 = vunpack.c.h.bf16 %v29
  %v61 = vunpack.c.l.bf16 %v30
  %v62 = vunpack.c.h.bf16 %v30
  %v63 = vld [vmem:[%s2] sm:$0x3]
  %v65 = vlaneseq
  %v66 = vshrl.u32 %v65, 7
  %v67 = vsub.s32 0, %v66
  %v68 = vrot.slane %v63, %v67
  %v69 = vlaneseq
  %v70 = vshrl.u32 %v69, 7
  %v71 = vsub.s32 1, %v70
  %v72 = vrot.slane %v63, %v71
  %75 = vmatprep.subr.mxu0 %v62
  %76 = vmatpush1.msra.mxu0 %v61
  %77 = vmatprep.subr.mxu0 %v60
  %78 = vmatpush1.msra.mxu0 %v59
  %79 = vmatprep.subr.mxu0 %v58
  %80 = vmatpush1.msra.mxu0 %v57
  %81 = vmatprep.subr.mxu0 %v56
  %82 = vmatpush1.msra.mxu0 %v55
  %83 = vmatprep.subr.mxu0 %v54
  %84 = vmatpush1.msra.mxu0 %v53
  %85 = vmatprep.subr.mxu0 %v52
  %86 = vmatpush1.msra.mxu0 %v51
  %87 = vmatprep.subr.mxu0 %v50
  %88 = vmatpush1.msra.mxu0 %v49
  %89 = vmatprep.subr.mxu0 %v48
  %90 = vmatpush1.msra.mxu0 %v47
  %91 = vmatprep.subr.mxu0 %v46
  %92 = vmatpush1.msra.mxu0 %v45
  %93 = vmatprep.subr.mxu0 %v44
  %94 = vmatpush1.msra.mxu0 %v43
  %95 = vmatprep.subr.mxu0 %v42
  %96 = vmatpush1.msra.mxu0 %v41
  %97 = vmatprep.subr.mxu0 %v40
  %98 = vmatpush1.msra.mxu0 %v39
  %99 = vmatprep.subr.mxu0 %v38
  %100 = vmatpush1.msra.mxu0 %v37
  %101 = vmatprep.subr.mxu0 %v36
  %102 = vmatpush1.msra.mxu0 %v35
  %103 = vmatprep.subr.mxu0 %v34
  %104 = vmatpush1.msra.mxu0 %v33
  %105 = vmatprep.subr.mxu0 %v32
  %106 = vmatpush1.msra.mxu0 %v31
  %107 = vmatprep.subr.mxu0 0.0
  %108 = vmatpush2.msra.mxu0 0.0
  %109 = vmatprep.subr.mxu0 0.0
  %110 = vmatpush2.msra.mxu0 0.0
  %111 = vmatprep.subr.mxu0 0.0
  %112 = vmatpush2.msra.mxu0 0.0
  %113 = vmatprep.subr.mxu0 0.0
  %114 = vmatpush2.msra.mxu0 0.0
  %115 = vmatprep.subr.mxu0 0.0
  %116 = vmatpush2.msra.mxu0 0.0
  %117 = vmatprep.subr.mxu0 0.0
  %118 = vmatpush2.msra.mxu0 0.0
  %119 = vmatprep.subr.mxu0 0.0
  %120 = vmatpush2.msra.mxu0 0.0
  %121 = vmatprep.subr.mxu0 0.0
  %122 = vmatpush2.msra.mxu0 0.0
  %123 = vmatprep.subr.mxu0 0.0
  %124 = vmatpush2.msra.mxu0 0.0
  %125 = vmatprep.subr.mxu0 0.0
  %126 = vmatpush2.msra.mxu0 0.0
  %127 = vmatprep.subr.mxu0 0.0
  %128 = vmatpush2.msra.mxu0 0.0
  %129 = vmatprep.subr.mxu0 0.0
  %130 = vmatpush2.msra.mxu0 0.0
  %131 = vmatprep.subr.mxu0 0.0
  %132 = vmatpush2.msra.mxu0 0.0
  %133 = vmatprep.subr.mxu0 0.0
  %134 = vmatpush2.msra.mxu0 0.0
  %135 = vmatprep.subr.mxu0 0.0
  %136 = vmatpush2.msra.mxu0 0.0
  %137 = vmatprep.subr.mxu0 0.0
  %138 = vmatpush2.msra.mxu0 0.0
  %139 = vmatprep.mubr.f32.mxu0 0.0
  %140 = vmatmul.mubr.f32.gmra.mxu0 %v14
  %v141 = vpop.f32.mrf.mxu0
  %v142 = vadd.f32 %v68, %v141
  %v143 = vpop.f32.mrf.mxu0
  %v144 = vadd.f32 %v72, %v143
  %145 = vdwg.mxu0
  %146 = vst [vmem:[%s3] sm:$0xff] %v142
  %147 = vst [vmem:[%s3 + $0x8] sm:$0xff] %v144
  // Predicated region
  $region14: #{_lambda_.3} parent=0 // pred_check
    _
  $region15: #{_lambda_.3} parent=0 // pred_check_branch
    %149 = sbr.rel (0) target = $region17
  $region16: #{_lambda_.3} parent=0 // pred_region
    _
  $region17: #{_lambda_.3} parent=0 // pred_fallthru
    _
  // Predicated region
  $region18: #{_lambda_.3} parent=0 // pred_check
    _
  $region19: #{_lambda_.3} parent=0 // pred_check_branch
    %151 = sbr.rel (0) target = $region21
  $region20: #{_lambda_.3} parent=0 // pred_region
    _
  $region21: #{_lambda_.3} parent=0 // pred_fallthru
    _

// kernel: _lambda_.2
$region0: #{_lambda_.2}
  #allocation0 [shape = 'u32[]', space=smem, size = 0x4, offset = 0x4, fixed_abs, tag = 'smem constant byte address 0x4 - core index']
  #allocation1 [shape = 'u32[144,128]{1,0:T(1,128)}', space=vmem, size = 0x12000, scoped, tag = 'internal scratch']
  #allocation2 [shape = 'f32[64,512]{1,0:T(8,128)}', space=vmem, size = 0x20000, scoped, tag = 'scratch operand']
  #allocation3 [shape = 'f32[64,128]{1,0:T(8,128)}', space=vmem, size = 0x8000, scoped, tag = 'scratch operand']
  %s0 = inlined_call_operand.vmem [shape: f32[64,128], index: 0, kind: input, shape index: {}]
  %s1 = inlined_call_operand.hbm [shape: f32[128,512], index: 1, kind: input, shape index: {}]
  %s2 = inlined_call_operand.hbm [shape: f32[128,512], index: 2, kind: input, shape index: {}]
  %s3 = inlined_call_operand.vmem [shape: f32[1,512], index: 3, kind: input, shape index: {}]
  %s4 = inlined_call_operand.hbm [shape: f32[128,512], index: 4, kind: input, shape index: {}]
  %s5 = inlined_call_operand.hbm [shape: f32[128,512], index: 5, kind: input, shape index: {}]
  %s6 = inlined_call_operand.vmem [shape: f32[1,512], index: 6, kind: input, shape index: {}]
  %s7 = inlined_call_operand.vmem [shape: f32[8,128], index: 7, kind: output, shape index: {}]
  %s8 = sld [smem:[#allocation0]]
  $region54: #{_lambda_.2} parent=0
    _
  %s10 = ssub.s32 1, %s8
  %s11 = scalar_select 0, %s10, %s8
  $region1: #{_lambda_.2} parent=0
    #allocation4 [shape = 'u8[262144]{0}', space=vmem, size = 0x40000, scoped, tag = 'input window, operand 1, single buffered']
    #allocation5 [shape = 's32[1]{0}', space=sflag, size = 0x4, scoped, tag = 'scoped memory for _lambda_.2']
    #allocation6 [shape = 'u8[262144]{0}', space=vmem, size = 0x40000, scoped, tag = 'input window, operand 2, single buffered']
    #allocation7 [shape = 's32[1]{0}', space=sflag, size = 0x4, scoped, tag = 'scoped memory for _lambda_.2']
    #allocation8 [shape = 'u8[262144]{0}', space=vmem, size = 0x40000, scoped, tag = 'input window, operand 4, single buffered']
    #allocation9 [shape = 'u8[262144]{0}', space=vmem, size = 0x40000, scoped, tag = 'input window, operand 5, single buffered']
    #allocation10 [shape = 's32[1]{0}', space=sflag, size = 0x4, scoped, tag = 'scoped memory for _lambda_.2']
    %12 = vsyncpa [#allocation5], 0
    %13 = vsyncpa [#allocation7], 0
    %14 = vsyncpa [#allocation10], 0
    // Predicated region
    $region2: #{_lambda_.2} parent=1 // pred_check
      _
    $region3: #{_lambda_.2} parent=1 // pred_check_branch
      %16 = sbr.rel (0) target = $region5
    $region4: #{_lambda_.2} parent=1 // pred_region
      _
    $region5: #{_lambda_.2} parent=1 // pred_fallthru
      _
    // Predicated region
    $region6: #{_lambda_.2} parent=1 // pred_check
      _
    $region7: #{_lambda_.2} parent=1 // pred_check_branch
      %18 = sbr.rel (0) target = $region9
    $region8: #{_lambda_.2} parent=1 // pred_region
      %s20 = ssub.s32 8192, 8192
      %21 = vsyncadd [#allocation5], %s20
      %s22 = sshll.u32 [#allocation4], 4
      %s23 = int_to_ptr.vmem [resolvable:$true] %s22
      %28 = dma.hbm_to_vmem [thread:$0]  %s1, 8192, %s23, [#allocation5], 512, 512, 32
    $region9: #{_lambda_.2} parent=1 // pred_fallthru
      _
    // Predicated region
    $region10: #{_lambda_.2} parent=1 // pred_check
      _
    $region11: #{_lambda_.2} parent=1 // pred_check_branch
      %30 = sbr.rel (0) target = $region13
    $region12: #{_lambda_.2} parent=1 // pred_region
      %s32 = ssub.s32 8192, 8192
      %33 = vsyncadd [#allocation7], %s32
      %s34 = sshll.u32 [#allocation6], 4
      %s35 = int_to_ptr.vmem [resolvable:$true] %s34
      %40 = dma.hbm_to_vmem [thread:$0]  %s2, 8192, %s35, [#allocation7], 512, 512, 32
    $region13: #{_lambda_.2} parent=1 // pred_fallthru
      _
    // Predicated region
    $region14: #{_lambda_.2} parent=1 // pred_check
      _
    $region15: #{_lambda_.2} parent=1 // pred_check_branch
      %42 = sbr.rel (0) target = $region17
    $region16: #{_lambda_.2} parent=1 // pred_region
      _
    $region17: #{_lambda_.2} parent=1 // pred_fallthru
      _
    // Predicated region
    $region18: #{_lambda_.2} parent=1 // pred_check
      _
    $region19: #{_lambda_.2} parent=1 // pred_check_branch
      %44 = sbr.rel (0) target = $region21
    $region20: #{_lambda_.2} parent=1 // pred_region
      %s46 = ssub.s32 8192, 8192
      %47 = vsyncadd [#allocation7], %s46
      %s48 = sshll.u32 [#allocation8], 4
      %s49 = int_to_ptr.vmem [resolvable:$true] %s48
      %54 = dma.hbm_to_vmem [thread:$0]  %s4, 8192, %s49, [#allocation7], 512, 512, 32
    $region21: #{_lambda_.2} parent=1 // pred_fallthru
      _
    // Predicated region
    $region22: #{_lambda_.2} parent=1 // pred_check
      _
    $region23: #{_lambda_.2} parent=1 // pred_check_branch
      %56 = sbr.rel (0) target = $region25
    $region24: #{_lambda_.2} parent=1 // pred_region
      %s58 = ssub.s32 8192, 8192
      %59 = vsyncadd [#allocation10], %s58
      %s60 = sshll.u32 [#allocation9], 4
      %s61 = int_to_ptr.vmem [resolvable:$true] %s60
      %66 = dma.hbm_to_vmem [thread:$0]  %s5, 8192, %s61, [#allocation10], 512, 512, 32
    $region25: #{_lambda_.2} parent=1 // pred_fallthru
      _
    // Predicated region
    $region26: #{_lambda_.2} parent=1 // pred_check
      _
    $region27: #{_lambda_.2} parent=1 // pred_check_branch
      %68 = sbr.rel (0) target = $region29
    $region28: #{_lambda_.2} parent=1 // pred_region
      _
    $region29: #{_lambda_.2} parent=1 // pred_fallthru
      _
    // Predicated region
    $region30: #{_lambda_.2} parent=1 // pred_check
      _
    $region31: #{_lambda_.2} parent=1 // pred_check_branch
      %70 = sbr.rel (0) target = $region33
    $region32: #{_lambda_.2} parent=1 // pred_region
      %71 = dma.done [#allocation5], 8192
    $region33: #{_lambda_.2} parent=1 // pred_fallthru
      _
    // Predicated region
    $region34: #{_lambda_.2} parent=1 // pred_check
      _
    $region35: #{_lambda_.2} parent=1 // pred_check_branch
      %73 = sbr.rel (0) target = $region37
    $region36: #{_lambda_.2} parent=1 // pred_region
      %74 = dma.done [#allocation7], 8192
    $region37: #{_lambda_.2} parent=1 // pred_fallthru
      _
    // Predicated region
    $region38: #{_lambda_.2} parent=1 // pred_check
      _
    $region39: #{_lambda_.2} parent=1 // pred_check_branch
      %76 = sbr.rel (0) target = $region41
    $region40: #{_lambda_.2} parent=1 // pred_region
      %77 = dma.done [#allocation7], 8192
    $region41: #{_lambda_.2} parent=1 // pred_fallthru
      _
    // Predicated region
    $region42: #{_lambda_.2} parent=1 // pred_check
      _
    $region43: #{_lambda_.2} parent=1 // pred_check_branch
      %79 = sbr.rel (0) target = $region45
    $region44: #{_lambda_.2} parent=1 // pred_region
      %80 = dma.done [#allocation10], 8192
    $region45: #{_lambda_.2} parent=1 // pred_fallthru
      _
    %v81 = vld [vmem:[%s0] sm:$0xff]
    %v82 = vld [vmem:[%s0 + $0x8] sm:$0xff]
    %v83 = vld [vmem:[%s0 + $0x10] sm:$0xff]
    %v84 = vld [vmem:[%s0 + $0x18] sm:$0xff]
    %v85 = vld [vmem:[%s0 + $0x20] sm:$0xff]
    %v86 = vld [vmem:[%s0 + $0x28] sm:$0xff]
    %v87 = vld [vmem:[%s0 + $0x30] sm:$0xff]
    %v88 = vld [vmem:[%s0 + $0x38] sm:$0xff]
    %v89 = vld [vmem:[#allocation4] sm:$0xff]
    %v90 = vld [vmem:[#allocation4 + $0x8] sm:$0xff]
    %v91 = vld [vmem:[#allocation4 + $0x10] sm:$0xff]
    %v92 = vld [vmem:[#allocation4 + $0x18] sm:$0xff]
    %v93 = vld [vmem:[#allocation4 + $0x20] sm:$0xff]
    %v94 = vld [vmem:[#allocation4 + $0x28] sm:$0xff]
    %v95 = vld [vmem:[#allocation4 + $0x30] sm:$0xff]
    %v96 = vld [vmem:[#allocation4 + $0x38] sm:$0xff]
    %v97 = vld [vmem:[#allocation4 + $0x40] sm:$0xff]
    %v98 = vld [vmem:[#allocation4 + $0x48] sm:$0xff]
    %v99 = vld [vmem:[#allocation4 + $0x50] sm:$0xff]
    %v100 = vld [vmem:[#allocation4 + $0x58] sm:$0xff]
    %v101 = vld [vmem:[#allocation4 + $0x60] sm:$0xff]
    %v102 = vld [vmem:[#allocation4 + $0x68] sm:$0xff]
    %v103 = vld [vmem:[#allocation4 + $0x70] sm:$0xff]
    %v104 = vld [vmem:[#allocation4 + $0x78] sm:$0xff]
    %v105 = vld [vmem:[#allocation4 + $0x80] sm:$0xff]
    %v106 = vld [vmem:[#allocation4 + $0x88] sm:$0xff]
    %v107 = vld [vmem:[#allocation4 + $0x90] sm:$0xff]
    %v108 = vld [vmem:[#allocation4 + $0x98] sm:$0xff]
    %v109 = vld [vmem:[#allocation4 + $0xa0] sm:$0xff]
    %v110 = vld [vmem:[#allocation4 + $0xa8] sm:$0xff]
    %v111 = vld [vmem:[#allocation4 + $0xb0] sm:$0xff]
    %v112 = vld [vmem:[#allocation4 + $0xb8] sm:$0xff]
    %v113 = vld [vmem:[#allocation4 + $0xc0] sm:$0xff]
    %v114 = vld [vmem:[#allocation4 + $0xc8] sm:$0xff]
    %v115 = vld [vmem:[#allocation4 + $0xd0] sm:$0xff]
    %v116 = vld [vmem:[#allocation4 + $0xd8] sm:$0xff]
    %v117 = vld [vmem:[#allocation4 + $0xe0] sm:$0xff]
    %v118 = vld [vmem:[#allocation4 + $0xe8] sm:$0xff]
    %v119 = vld [vmem:[#allocation4 + $0xf0] sm:$0xff]
    %v120 = vld [vmem:[#allocation4 + $0xf8] sm:$0xff]
    %v121 = vld [vmem:[#allocation4 + $0x100] sm:$0xff]
    %v122 = vld [vmem:[#allocation4 + $0x108] sm:$0xff]
    %v123 = vld [vmem:[#allocation4 + $0x110] sm:$0xff]
    %v124 = vld [vmem:[#allocation4 + $0x118] sm:$0xff]
    %v125 = vld [vmem:[#allocation4 + $0x120] sm:$0xff]
    %v126 = vld [vmem:[#allocation4 + $0x128] sm:$0xff]
    %v127 = vld [vmem:[#allocation4 + $0x130] sm:$0xff]
    %v128 = vld [vmem:[#allocation4 + $0x138] sm:$0xff]
    %v129 = vld [vmem:[#allocation4 + $0x140] sm:$0xff]
    %v130 = vld [vmem:[#allocation4 + $0x148] sm:$0xff]
    %v131 = vld [vmem:[#allocation4 + $0x150] sm:$0xff]
    %v132 = vld [vmem:[#allocation4 + $0x158] sm:$0xff]
    %v133 = vld [vmem:[#allocation4 + $0x160] sm:$0xff]
    %v134 = vld [vmem:[#allocation4 + $0x168] sm:$0xff]
    %v135 = vld [vmem:[#allocation4 + $0x170] sm:$0xff]
    %v136 = vld [vmem:[#allocation4 + $0x178] sm:$0xff]
    %v137 = vld [vmem:[#allocation4 + $0x180] sm:$0xff]
    %v138 = vld [vmem:[#allocation4 + $0x188] sm:$0xff]
    %v139 = vld [vmem:[#allocation4 + $0x190] sm:$0xff]
    %v140 = vld [vmem:[#allocation4 + $0x198] sm:$0xff]
    %v141 = vld [vmem:[#allocation4 + $0x1a0] sm:$0xff]
    %v142 = vld [vmem:[#allocation4 + $0x1a8] sm:$0xff]
    %v143 = vld [vmem:[#allocation4 + $0x1b0] sm:$0xff]
    %v144 = vld [vmem:[#allocation4 + $0x1b8] sm:$0xff]
    %v145 = vld [vmem:[#allocation4 + $0x1c0] sm:$0xff]
    %v146 = vld [vmem:[#allocation4 + $0x1c8] sm:$0xff]
    %v147 = vld [vmem:[#allocation4 + $0x1d0] sm:$0xff]
    %v148 = vld [vmem:[#allocation4 + $0x1d8] sm:$0xff]
    %v149 = vld [vmem:[#allocation4 + $0x1e0] sm:$0xff]
    %v150 = vld [vmem:[#allocation4 + $0x1e8] sm:$0xff]
    %v151 = vld [vmem:[#allocation4 + $0x1f0] sm:$0xff]
    %v152 = vld [vmem:[#allocation4 + $0x1f8] sm:$0xff]
    %v153 = vld [vmem:[%s3] sm:$0xf]
    %v155 = vlaneseq
    %v156 = vshrl.u32 %v155, 7
    %v157 = vsub.s32 0, %v156
    %v158 = vrot.slane %v153, %v157
    %v159 = vlaneseq
    %v160 = vshrl.u32 %v159, 7
    %v161 = vsub.s32 1, %v160
    %v162 = vrot.slane %v153, %v161
    %v163 = vlaneseq
    %v164 = vshrl.u32 %v163, 7
    %v165 = vsub.s32 2, %v164
    %v166 = vrot.slane %v153, %v165
    %v167 = vlaneseq
    %v168 = vshrl.u32 %v167, 7
    %v169 = vsub.s32 3, %v168
    %v170 = vrot.slane %v153, %v169
    %175 = vmatprep.subr.mxu0 %v150
    %176 = vmatpush1.msra.mxu0 %v149
    %177 = vmatprep.subr.mxu0 %v146
    %178 = vmatpush1.msra.mxu0 %v145
    %179 = vmatprep.subr.mxu0 %v142
    %180 = vmatpush1.msra.mxu0 %v141
    %181 = vmatprep.subr.mxu0 %v138
    %182 = vmatpush1.msra.mxu0 %v137
    %183 = vmatprep.subr.mxu0 %v134
    %184 = vmatpush1.msra.mxu0 %v133
    %185 = vmatprep.subr.mxu0 %v130
    %186 = vmatpush1.msra.mxu0 %v129
    %187 = vmatprep.subr.mxu0 %v126
    %188 = vmatpush1.msra.mxu0 %v125
    %189 = vmatprep.subr.mxu0 %v122
    %190 = vmatpush1.msra.mxu0 %v121
    %191 = vmatprep.subr.mxu0 %v118
    %192 = vmatpush1.msra.mxu0 %v117
    %193 = vmatprep.subr.mxu0 %v114
    %194 = vmatpush1.msra.mxu0 %v113
    %195 = vmatprep.subr.mxu0 %v110
    %196 = vmatpush1.msra.mxu0 %v109
    %197 = vmatprep.subr.mxu0 %v106
    %198 = vmatpush1.msra.mxu0 %v105
    %199 = vmatprep.subr.mxu0 %v102
    %200 = vmatpush1.msra.mxu0 %v101
    %201 = vmatprep.subr.mxu0 %v98
    %202 = vmatpush1.msra.mxu0 %v97
    %203 = vmatprep.subr.mxu0 %v94
    %204 = vmatpush1.msra.mxu0 %v93
    %205 = vmatprep.subr.mxu0 %v90
    %206 = vmatpush1.msra.mxu0 %v89
    %207 = vmatprep.subr.mxu0 0.0
    %208 = vmatpush2.msra.mxu0 0.0
    %209 = vmatprep.subr.mxu0 0.0
    %210 = vmatpush2.msra.mxu0 0.0
    %211 = vmatprep.subr.mxu0 0.0
    %212 = vmatpush2.msra.mxu0 0.0
    %213 = vmatprep.subr.mxu0 0.0
    %214 = vmatpush2.msra.mxu0 0.0
    %215 = vmatprep.subr.mxu0 0.0
    %216 = vmatpush2.msra.mxu0 0.0
    %217 = vmatprep.subr.mxu0 0.0
    %218 = vmatpush2.msra.mxu0 0.0
    %219 = vmatprep.subr.mxu0 0.0
    %220 = vmatpush2.msra.mxu0 0.0
    %221 = vmatprep.subr.mxu0 0.0
    %222 = vmatpush2.msra.mxu0 0.0
    %223 = vmatprep.subr.mxu0 0.0
    %224 = vmatpush2.msra.mxu0 0.0
    %225 = vmatprep.subr.mxu0 0.0
    %226 = vmatpush2.msra.mxu0 0.0
    %227 = vmatprep.subr.mxu0 0.0
    %228 = vmatpush2.msra.mxu0 0.0
    %229 = vmatprep.subr.mxu0 0.0
    %230 = vmatpush2.msra.mxu0 0.0
    %231 = vmatprep.subr.mxu0 0.0
    %232 = vmatpush2.msra.mxu0 0.0
    %233 = vmatprep.subr.mxu0 0.0
    %234 = vmatpush2.msra.mxu0 0.0
    %235 = vmatprep.subr.mxu0 0.0
    %236 = vmatpush2.msra.mxu0 0.0
    %237 = vmatprep.subr.mxu0 0.0
    %238 = vmatpush2.msra.mxu0 0.0
    %239 = vmatprep.mubr.f32.mxu0 0.0
    %240 = vmatmul.mubr.f32.gmra.mxu0 %v81
    %v241 = vpop.f32.mrf.mxu0
    %v242 = vadd.f32 %v158, %v241
    %v243 = vpop.f32.mrf.mxu0
    %v244 = vadd.f32 %v162, %v243
    %245 = vmatprep.mubr.f32.mxu0 0.0
    %246 = vmatmul.mubr.f32.gmra.mxu0 %v82
    %v247 = vpop.f32.mrf.mxu0
    %v248 = vadd.f32 %v158, %v247
    %v249 = vpop.f32.mrf.mxu0
    %v250 = vadd.f32 %v162, %v249
    %251 = vmatprep.mubr.f32.mxu0 0.0
    %252 = vmatmul.mubr.f32.gmra.mxu0 %v83
    %v253 = vpop.f32.mrf.mxu0
    %v254 = vadd.f32 %v158, %v253
    %v255 = vpop.f32.mrf.mxu0
    %v256 = vadd.f32 %v162, %v255
    %257 = vmatprep.mubr.f32.mxu0 0.0
    %258 = vmatmul.mubr.f32.gmra.mxu0 %v84
    %v259 = vpop.f32.mrf.mxu0
    %v260 = vadd.f32 %v158, %v259
    %v261 = vpop.f32.mrf.mxu0
    %v262 = vadd.f32 %v162, %v261
    %263 = vmatprep.mubr.f32.mxu0 0.0
    %264 = vmatmul.mubr.f32.gmra.mxu0 %v85
    %v265 = vpop.f32.mrf.mxu0
    %v266 = vadd.f32 %v158, %v265
    %v267 = vpop.f32.mrf.mxu0
    %v268 = vadd.f32 %v162, %v267
    %269 = vmatprep.mubr.f32.mxu0 0.0
    %270 = vmatmul.mubr.f32.gmra.mxu0 %v86
    %v271 = vpop.f32.mrf.mxu0
    %v272 = vadd.f32 %v158, %v271
    %v273 = vpop.f32.mrf.mxu0
    %v274 = vadd.f32 %v162, %v273
    %275 = vmatprep.mubr.f32.mxu0 0.0
    %276 = vmatmul.mubr.f32.gmra.mxu0 %v87
    %v277 = vpop.f32.mrf.mxu0
    %v278 = vadd.f32 %v158, %v277
    %v279 = vpop.f32.mrf.mxu0
    %v280 = vadd.f32 %v162, %v279
    %281 = vmatprep.mubr.f32.mxu0 0.0
    %282 = vmatmul.mubr.f32.gmra.mxu0 %v88
    %v283 = vpop.f32.mrf.mxu0
    %v284 = vadd.f32 %v158, %v283
    %v285 = vpop.f32.mrf.mxu0
    %v286 = vadd.f32 %v162, %v285
    %287 = vdwg.mxu0
    %288 = vmatprep.subr.mxu0 %v152
    %289 = vmatpush1.msra.mxu0 %v151
    %290 = vmatprep.subr.mxu0 %v148
    %291 = vmatpush1.msra.mxu0 %v147
    %292 = vmatprep.subr.mxu0 %v144
    %293 = vmatpush1.msra.mxu0 %v143
    %294 = vmatprep.subr.mxu0 %v140
    %295 = vmatpush1.msra.mxu0 %v139
    %296 = vmatprep.subr.mxu0 %v136
    %297 = vmatpush1.msra.mxu0 %v135
    %298 = vmatprep.subr.mxu0 %v132
    %299 = vmatpush1.msra.mxu0 %v131
    %300 = vmatprep.subr.mxu0 %v128
    %301 = vmatpush1.msra.mxu0 %v127
    %302 = vmatprep.subr.mxu0 %v124
    %303 = vmatpush1.msra.mxu0 %v123
    %304 = vmatprep.subr.mxu0 %v120
    %305 = vmatpush1.msra.mxu0 %v119
    %306 = vmatprep.subr.mxu0 %v116
    %307 = vmatpush1.msra.mxu0 %v115
    %308 = vmatprep.subr.mxu0 %v112
    %309 = vmatpush1.msra.mxu0 %v111
    %310 = vmatprep.subr.mxu0 %v108
    %311 = vmatpush1.msra.mxu0 %v107
    %312 = vmatprep.subr.mxu0 %v104
    %313 = vmatpush1.msra.mxu0 %v103
    %314 = vmatprep.subr.mxu0 %v100
    %315 = vmatpush1.msra.mxu0 %v99
    %316 = vmatprep.subr.mxu0 %v96
    %317 = vmatpush1.msra.mxu0 %v95
    %318 = vmatprep.subr.mxu0 %v92
    %319 = vmatpush1.msra.mxu0 %v91
    %320 = vmatprep.subr.mxu0 0.0
    %321 = vmatpush2.msra.mxu0 0.0
    %322 = vmatprep.subr.mxu0 0.0
    %323 = vmatpush2.msra.mxu0 0.0
    %324 = vmatprep.subr.mxu0 0.0
    %325 = vmatpush2.msra.mxu0 0.0
    %326 = vmatprep.subr.mxu0 0.0
    %327 = vmatpush2.msra.mxu0 0.0
    %328 = vmatprep.subr.mxu0 0.0
    %329 = vmatpush2.msra.mxu0 0.0
    %330 = vmatprep.subr.mxu0 0.0
    %331 = vmatpush2.msra.mxu0 0.0
    %332 = vmatprep.subr.mxu0 0.0
    %333 = vmatpush2.msra.mxu0 0.0
    %334 = vmatprep.subr.mxu0 0.0
    %335 = vmatpush2.msra.mxu0 0.0
    %336 = vmatprep.subr.mxu0 0.0
    %337 = vmatpush2.msra.mxu0 0.0
    %338 = vmatprep.subr.mxu0 0.0
    %339 = vmatpush2.msra.mxu0 0.0
    %340 = vmatprep.subr.mxu0 0.0
    %341 = vmatpush2.msra.mxu0 0.0
    %342 = vmatprep.subr.mxu0 0.0
    %343 = vmatpush2.msra.mxu0 0.0
    %344 = vmatprep.subr.mxu0 0.0
    %345 = vmatpush2.msra.mxu0 0.0
    %346 = vmatprep.subr.mxu0 0.0
    %347 = vmatpush2.msra.mxu0 0.0
    %348 = vmatprep.subr.mxu0 0.0
    %349 = vmatpush2.msra.mxu0 0.0
    %350 = vmatprep.subr.mxu0 0.0
    %351 = vmatpush2.msra.mxu0 0.0
    %352 = vmatprep.mubr.f32.mxu0 0.0
    %353 = vmatmul.mubr.f32.gmra.mxu0 %v81
    %v354 = vpop.f32.mrf.mxu0
    %v355 = vadd.f32 %v166, %v354
    %v356 = vpop.f32.mrf.mxu0
    %v357 = vadd.f32 %v170, %v356
    %358 = vmatprep.mubr.f32.mxu0 0.0
    %359 = vmatmul.mubr.f32.gmra.mxu0 %v82
    %v360 = vpop.f32.mrf.mxu0
    %v361 = vadd.f32 %v166, %v360
    %v362 = vpop.f32.mrf.mxu0
    %v363 = vadd.f32 %v170, %v362
    %364 = vmatprep.mubr.f32.mxu0 0.0
    %365 = vmatmul.mubr.f32.gmra.mxu0 %v83
    %v366 = vpop.f32.mrf.mxu0
    %v367 = vadd.f32 %v166, %v366
    %v368 = vpop.f32.mrf.mxu0
    %v369 = vadd.f32 %v170, %v368
    %370 = vmatprep.mubr.f32.mxu0 0.0
    %371 = vmatmul.mubr.f32.gmra.mxu0 %v84
    %v372 = vpop.f32.mrf.mxu0
    %v373 = vadd.f32 %v166, %v372
    %v374 = vpop.f32.mrf.mxu0
    %v375 = vadd.f32 %v170, %v374
    %376 = vmatprep.mubr.f32.mxu0 0.0
    %377 = vmatmul.mubr.f32.gmra.mxu0 %v85
    %v378 = vpop.f32.mrf.mxu0
    %v379 = vadd.f32 %v166, %v378
    %v380 = vpop.f32.mrf.mxu0
    %v381 = vadd.f32 %v170, %v380
    %382 = vmatprep.mubr.f32.mxu0 0.0
    %383 = vmatmul.mubr.f32.gmra.mxu0 %v86
    %v384 = vpop.f32.mrf.mxu0
    %v385 = vadd.f32 %v166, %v384
    %v386 = vpop.f32.mrf.mxu0
    %v387 = vadd.f32 %v170, %v386
    %388 = vmatprep.mubr.f32.mxu0 0.0
    %389 = vmatmul.mubr.f32.gmra.mxu0 %v87
    %v390 = vpop.f32.mrf.mxu0
    %v391 = vadd.f32 %v166, %v390
    %v392 = vpop.f32.mrf.mxu0
    %v393 = vadd.f32 %v170, %v392
    %394 = vmatprep.mubr.f32.mxu0 0.0
    %395 = vmatmul.mubr.f32.gmra.mxu0 %v88
    %v396 = vpop.f32.mrf.mxu0
    %v397 = vadd.f32 %v166, %v396
    %v398 = vpop.f32.mrf.mxu0
    %v399 = vadd.f32 %v170, %v398
    %400 = vdwg.mxu0
    %401 = vst [vmem:[#allocation2] sm:$0xff] %v242
    %402 = vst [vmem:[#allocation2 + $0x8] sm:$0xff] %v244
    %403 = vst [vmem:[#allocation2 + $0x10] sm:$0xff] %v355
    %404 = vst [vmem:[#allocation2 + $0x18] sm:$0xff] %v357
    %405 = vst [vmem:[#allocation2 + $0x20] sm:$0xff] %v248
    %406 = vst [vmem:[#allocation2 + $0x28] sm:$0xff] %v250
    %407 = vst [vmem:[#allocation2 + $0x30] sm:$0xff] %v361
    %408 = vst [vmem:[#allocation2 + $0x38] sm:$0xff] %v363
    %409 = vst [vmem:[#allocation2 + $0x40] sm:$0xff] %v254
    %410 = vst [vmem:[#allocation2 + $0x48] sm:$0xff] %v256
    %411 = vst [vmem:[#allocation2 + $0x50] sm:$0xff] %v367
    %412 = vst [vmem:[#allocation2 + $0x58] sm:$0xff] %v369
    %413 = vst [vmem:[#allocation2 + $0x60] sm:$0xff] %v260
    %414 = vst [vmem:[#allocation2 + $0x68] sm:$0xff] %v262
    %415 = vst [vmem:[#allocation2 + $0x70] sm:$0xff] %v373
    %416 = vst [vmem:[#allocation2 + $0x78] sm:$0xff] %v375
    %417 = vst [vmem:[#allocation2 + $0x80] sm:$0xff] %v266
    %418 = vst [vmem:[#allocation2 + $0x88] sm:$0xff] %v268
    %419 = vst [vmem:[#allocation2 + $0x90] sm:$0xff] %v379
    %420 = vst [vmem:[#allocation2 + $0x98] sm:$0xff] %v381
    %421 = vst [vmem:[#allocation2 + $0xa0] sm:$0xff] %v272
    %422 = vst [vmem:[#allocation2 + $0xa8] sm:$0xff] %v274
    %423 = vst [vmem:[#allocation2 + $0xb0] sm:$0xff] %v385
    %424 = vst [vmem:[#allocation2 + $0xb8] sm:$0xff] %v387
    %425 = vst [vmem:[#allocation2 + $0xc0] sm:$0xff] %v278
    %426 = vst [vmem:[#allocation2 + $0xc8] sm:$0xff] %v280
    %427 = vst [vmem:[#allocation2 + $0xd0] sm:$0xff] %v391
    %428 = vst [vmem:[#allocation2 + $0xd8] sm:$0xff] %v393
    %429 = vst [vmem:[#allocation2 + $0xe0] sm:$0xff] %v284
    %430 = vst [vmem:[#allocation2 + $0xe8] sm:$0xff] %v286
    %431 = vst [vmem:[#allocation2 + $0xf0] sm:$0xff] %v397
    %432 = vst [vmem:[#allocation2 + $0xf8] sm:$0xff] %v399
    %v433 = vld [vmem:[#allocation2] sm:$0xff]
    %v434 = vld [vmem:[#allocation2 + $0x8] sm:$0xff]
    %v435 = vld [vmem:[#allocation2 + $0x10] sm:$0xff]
    %v436 = vld [vmem:[#allocation2 + $0x18] sm:$0xff]
    %v437 = vld [vmem:[#allocation6] sm:$0xff]
    %v438 = vld [vmem:[#allocation6 + $0x8] sm:$0xff]
    %v439 = vld [vmem:[#allocation6 + $0x10] sm:$0xff]
    %v440 = vld [vmem:[#allocation6 + $0x18] sm:$0xff]
    %v441 = vld [vmem:[#allocation6 + $0x20] sm:$0xff]
    %v442 = vld [vmem:[#allocation6 + $0x28] sm:$0xff]
    %v443 = vld [vmem:[#allocation6 + $0x30] sm:$0xff]
    %v444 = vld [vmem:[#allocation6 + $0x38] sm:$0xff]
    %v445 = vld [vmem:[#allocation6 + $0x40] sm:$0xff]
    %v446 = vld [vmem:[#allocation6 + $0x48] sm:$0xff]
    %v447 = vld [vmem:[#allocation6 + $0x50] sm:$0xff]
    %v448 = vld [vmem:[#allocation6 + $0x58] sm:$0xff]
    %v449 = vld [vmem:[#allocation6 + $0x60] sm:$0xff]
    %v450 = vld [vmem:[#allocation6 + $0x68] sm:$0xff]
    %v451 = vld [vmem:[#allocation6 + $0x70] sm:$0xff]
    %v452 = vld [vmem:[#allocation6 + $0x78] sm:$0xff]
    %v453 = vld [vmem:[#allocation6 + $0x80] sm:$0xff]
    %v454 = vld [vmem:[#allocation6 + $0x88] sm:$0xff]
    %v455 = vld [vmem:[#allocation6 + $0x90] sm:$0xff]
    %v456 = vld [vmem:[#allocation6 + $0x98] sm:$0xff]
    %v457 = vld [vmem:[#allocation6 + $0xa0] sm:$0xff]
    %v458 = vld [vmem:[#allocation6 + $0xa8] sm:$0xff]
    %v459 = vld [vmem:[#allocation6 + $0xb0] sm:$0xff]
    %v460 = vld [vmem:[#allocation6 + $0xb8] sm:$0xff]
    %v461 = vld [vmem:[#allocation6 + $0xc0] sm:$0xff]
    %v462 = vld [vmem:[#allocation6 + $0xc8] sm:$0xff]
    %v463 = vld [vmem:[#allocation6 + $0xd0] sm:$0xff]
    %v464 = vld [vmem:[#allocation6 + $0xd8] sm:$0xff]
    %v465 = vld [vmem:[#allocation6 + $0xe0] sm:$0xff]
    %v466 = vld [vmem:[#allocation6 + $0xe8] sm:$0xff]
    %v467 = vld [vmem:[#allocation6 + $0xf0] sm:$0xff]
    %v468 = vld [vmem:[#allocation6 + $0xf8] sm:$0xff]
    %v469 = vld [vmem:[#allocation6 + $0x100] sm:$0xff]
    %v470 = vld [vmem:[#allocation6 + $0x108] sm:$0xff]
    %v471 = vld [vmem:[#allocation6 + $0x110] sm:$0xff]
    %v472 = vld [vmem:[#allocation6 + $0x118] sm:$0xff]
    %v473 = vld [vmem:[#allocation6 + $0x120] sm:$0xff]
    %v474 = vld [vmem:[#allocation6 + $0x128] sm:$0xff]
    %v475 = vld [vmem:[#allocation6 + $0x130] sm:$0xff]
    %v476 = vld [vmem:[#allocation6 + $0x138] sm:$0xff]
    %v477 = vld [vmem:[#allocation6 + $0x140] sm:$0xff]
    %v478 = vld [vmem:[#allocation6 + $0x148] sm:$0xff]
    %v479 = vld [vmem:[#allocation6 + $0x150] sm:$0xff]
    %v480 = vld [vmem:[#allocation6 + $0x158] sm:$0xff]
    %v481 = vld [vmem:[#allocation6 + $0x160] sm:$0xff]
    %v482 = vld [vmem:[#allocation6 + $0x168] sm:$0xff]
    %v483 = vld [vmem:[#allocation6 + $0x170] sm:$0xff]
    %v484 = vld [vmem:[#allocation6 + $0x178] sm:$0xff]
    %v485 = vld [vmem:[#allocation6 + $0x180] sm:$0xff]
    %v486 = vld [vmem:[#allocation6 + $0x188] sm:$0xff]
    %v487 = vld [vmem:[#allocation6 + $0x190] sm:$0xff]
    %v488 = vld [vmem:[#allocation6 + $0x198] sm:$0xff]
    %v489 = vld [vmem:[#allocation6 + $0x1a0] sm:$0xff]
    %v490 = vld [vmem:[#allocation6 + $0x1a8] sm:$0xff]
    %v491 = vld [vmem:[#allocation6 + $0x1b0] sm:$0xff]
    %v492 = vld [vmem:[#allocation6 + $0x1b8] sm:$0xff]
    %v493 = vld [vmem:[#allocation6 + $0x1c0] sm:$0xff]
    %v494 = vld [vmem:[#allocation6 + $0x1c8] sm:$0xff]
    %v495 = vld [vmem:[#allocation6 + $0x1d0] sm:$0xff]
    %v496 = vld [vmem:[#allocation6 + $0x1d8] sm:$0xff]
    %v497 = vld [vmem:[#allocation6 + $0x1e0] sm:$0xff]
    %v498 = vld [vmem:[#allocation6 + $0x1e8] sm:$0xff]
    %v499 = vld [vmem:[#allocation6 + $0x1f0] sm:$0xff]
    %v500 = vld [vmem:[#allocation6 + $0x1f8] sm:$0xff]
    %501 = vmatprep.subr.mxu0 %v498
    %502 = vmatpush1.msra.mxu0 %v497
    %503 = vmatprep.subr.mxu0 %v494
    %504 = vmatpush1.msra.mxu0 %v493
    %505 = vmatprep.subr.mxu0 %v490
    %506 = vmatpush1.msra.mxu0 %v489
    %507 = vmatprep.subr.mxu0 %v486
    %508 = vmatpush1.msra.mxu0 %v485
    %509 = vmatprep.subr.mxu0 %v482
    %510 = vmatpush1.msra.mxu0 %v481
    %511 = vmatprep.subr.mxu0 %v478
    %512 = vmatpush1.msra.mxu0 %v477
    %513 = vmatprep.subr.mxu0 %v474
    %514 = vmatpush1.msra.mxu0 %v473
    %515 = vmatprep.subr.mxu0 %v470
    %516 = vmatpush1.msra.mxu0 %v469
    %517 = vmatprep.subr.mxu0 %v466
    %518 = vmatpush1.msra.mxu0 %v465
    %519 = vmatprep.subr.mxu0 %v462
    %520 = vmatpush1.msra.mxu0 %v461
    %521 = vmatprep.subr.mxu0 %v458
    %522 = vmatpush1.msra.mxu0 %v457
    %523 = vmatprep.subr.mxu0 %v454
    %524 = vmatpush1.msra.mxu0 %v453
    %525 = vmatprep.subr.mxu0 %v450
    %526 = vmatpush1.msra.mxu0 %v449
    %527 = vmatprep.subr.mxu0 %v446
    %528 = vmatpush1.msra.mxu0 %v445
    %529 = vmatprep.subr.mxu0 %v442
    %530 = vmatpush1.msra.mxu0 %v441
    %531 = vmatprep.subr.mxu0 %v438
    %532 = vmatpush1.msra.mxu0 %v437
    %533 = vmatprep.subr.mxu0 0.0
    %534 = vmatpush2.msra.mxu0 0.0
    %535 = vmatprep.subr.mxu0 0.0
    %536 = vmatpush2.msra.mxu0 0.0
    %537 = vmatprep.subr.mxu0 0.0
    %538 = vmatpush2.msra.mxu0 0.0
    %539 = vmatprep.subr.mxu0 0.0
    %540 = vmatpush2.msra.mxu0 0.0
    %541 = vmatprep.subr.mxu0 0.0
    %542 = vmatpush2.msra.mxu0 0.0
    %543 = vmatprep.subr.mxu0 0.0
    %544 = vmatpush2.msra.mxu0 0.0
    %545 = vmatprep.subr.mxu0 0.0
    %546 = vmatpush2.msra.mxu0 0.0
    %547 = vmatprep.subr.mxu0 0.0
    %548 = vmatpush2.msra.mxu0 0.0
    %549 = vmatprep.subr.mxu0 0.0
    %550 = vmatpush2.msra.mxu0 0.0
    %551 = vmatprep.subr.mxu0 0.0
    %552 = vmatpush2.msra.mxu0 0.0
    %553 = vmatprep.subr.mxu0 0.0
    %554 = vmatpush2.msra.mxu0 0.0
    %555 = vmatprep.subr.mxu0 0.0
    %556 = vmatpush2.msra.mxu0 0.0
    %557 = vmatprep.subr.mxu0 0.0
    %558 = vmatpush2.msra.mxu0 0.0
    %559 = vmatprep.subr.mxu0 0.0
    %560 = vmatpush2.msra.mxu0 0.0
    %561 = vmatprep.subr.mxu0 0.0
    %562 = vmatpush2.msra.mxu0 0.0
    %563 = vmatprep.subr.mxu0 0.0
    %564 = vmatpush2.msra.mxu0 0.0
    %565 = vmatprep.mubr.f32.mxu0 0.0
    %566 = vmatmul.mubr.f32.gmra.mxu0 0.0
    %v567 = vpop.f32.mrf.mxu0
    %v568 = vadd.f32 0.0, %v567
    %v569 = vpop.f32.mrf.mxu0
    %v570 = vadd.f32 0.0, %v569
    %571 = vdwg.mxu0
    %572 = vmatprep.subr.mxu0 %v500
    %573 = vmatpush1.msra.mxu0 %v499
    %574 = vmatprep.subr.mxu0 %v496
    %575 = vmatpush1.msra.mxu0 %v495
    %576 = vmatprep.subr.mxu0 %v492
    %577 = vmatpush1.msra.mxu0 %v491
    %578 = vmatprep.subr.mxu0 %v488
    %579 = vmatpush1.msra.mxu0 %v487
    %580 = vmatprep.subr.mxu0 %v484
    %581 = vmatpush1.msra.mxu0 %v483
    %582 = vmatprep.subr.mxu0 %v480
    %583 = vmatpush1.msra.mxu0 %v479
    %584 = vmatprep.subr.mxu0 %v476
    %585 = vmatpush1.msra.mxu0 %v475
    %586 = vmatprep.subr.mxu0 %v472
    %587 = vmatpush1.msra.mxu0 %v471
    %588 = vmatprep.subr.mxu0 %v468
    %589 = vmatpush1.msra.mxu0 %v467
    %590 = vmatprep.subr.mxu0 %v464
    %591 = vmatpush1.msra.mxu0 %v463
    %592 = vmatprep.subr.mxu0 %v460
    %593 = vmatpush1.msra.mxu0 %v459
    %594 = vmatprep.subr.mxu0 %v456
    %595 = vmatpush1.msra.mxu0 %v455
    %596 = vmatprep.subr.mxu0 %v452
    %597 = vmatpush1.msra.mxu0 %v451
    %598 = vmatprep.subr.mxu0 %v448
    %599 = vmatpush1.msra.mxu0 %v447
    %600 = vmatprep.subr.mxu0 %v444
    %601 = vmatpush1.msra.mxu0 %v443
    %602 = vmatprep.subr.mxu0 %v440
    %603 = vmatpush1.msra.mxu0 %v439
    %604 = vmatprep.subr.mxu0 0.0
    %605 = vmatpush2.msra.mxu0 0.0
    %606 = vmatprep.subr.mxu0 0.0
    %607 = vmatpush2.msra.mxu0 0.0
    %608 = vmatprep.subr.mxu0 0.0
    %609 = vmatpush2.msra.mxu0 0.0
    %610 = vmatprep.subr.mxu0 0.0
    %611 = vmatpush2.msra.mxu0 0.0
    %612 = vmatprep.subr.mxu0 0.0
    %613 = vmatpush2.msra.mxu0 0.0
    %614 = vmatprep.subr.mxu0 0.0
    %615 = vmatpush2.msra.mxu0 0.0
    %616 = vmatprep.subr.mxu0 0.0
    %617 = vmatpush2.msra.mxu0 0.0
    %618 = vmatprep.subr.mxu0 0.0
    %619 = vmatpush2.msra.mxu0 0.0
    %620 = vmatprep.subr.mxu0 0.0
    %621 = vmatpush2.msra.mxu0 0.0
    %622 = vmatprep.subr.mxu0 0.0
    %623 = vmatpush2.msra.mxu0 0.0
    %624 = vmatprep.subr.mxu0 0.0
    %625 = vmatpush2.msra.mxu0 0.0
    %626 = vmatprep.subr.mxu0 0.0
    %627 = vmatpush2.msra.mxu0 0.0
    %628 = vmatprep.subr.mxu0 0.0
    %629 = vmatpush2.msra.mxu0 0.0
    %630 = vmatprep.subr.mxu0 0.0
    %631 = vmatpush2.msra.mxu0 0.0
    %632 = vmatprep.subr.mxu0 0.0
    %633 = vmatpush2.msra.mxu0 0.0
    %634 = vmatprep.subr.mxu0 0.0
    %635 = vmatpush2.msra.mxu0 0.0
    %636 = vmatprep.mubr.f32.mxu0 0.0
    %637 = vmatmul.mubr.f32.gmra.mxu0 0.0
    %v638 = vpop.f32.mrf.mxu0
    %v639 = vadd.f32 0.0, %v638
    %v640 = vpop.f32.mrf.mxu0
    %v641 = vadd.f32 0.0, %v640
    %642 = vdwg.mxu0
    %v643 = vadd.f32 %v433, %v568
    %v644 = vadd.f32 %v434, %v570
    %v645 = vadd.f32 %v435, %v639
    %v646 = vadd.f32 %v436, %v641
    %v647 = vxor.u32 %v643, 2147483648
    %v648 = vmul.f32 %v647, 1.442695
    %v649 = vpow.pop %v648
    %v650 = vadd.f32 %v649, 1.0
    %v651 = vrcp.pop %v650
    %v652 = vmul.f32 1.0, %v651
    %v653 = vxor.u32 %v644, 2147483648
    %v654 = vmul.f32 %v653, 1.442695
    %v655 = vpow.pop %v654
    %v656 = vadd.f32 %v655, 1.0
    %v657 = vrcp.pop %v656
    %v658 = vmul.f32 1.0, %v657
    %v659 = vtanh.pop %v645
    %v660 = vxor.u32 %v646, 2147483648
    %v661 = vmul.f32 %v660, 1.442695
    %v662 = vpow.pop %v661
    %v663 = vadd.f32 %v662, 1.0
    %v664 = vrcp.pop %v663
    %v665 = vmul.f32 1.0, %v664
    %v666 = vmul.f32 %v658, 0.0
    %v667 = vmul.f32 %v652, %v659
    %v668 = vadd.f32 %v666, %v667
    %v669 = vtanh.pop %v668
    %v670 = vmul.f32 %v665, %v669
    %671 = vst [vmem:[#allocation3] sm:$0xff] %v670
    %v672 = vld [vmem:[#allocation2 + $0x20] sm:$0xff]
    %v673 = vld [vmem:[#allocation2 + $0x28] sm:$0xff]
    %v674 = vld [vmem:[#allocation2 + $0x30] sm:$0xff]
    %v675 = vld [vmem:[#allocation2 + $0x38] sm:$0xff]
    %v676 = vld [vmem:[#allocation6] sm:$0xff]
    %v677 = vld [vmem:[#allocation6 + $0x8] sm:$0xff]
    %v678 = vld [vmem:[#allocation6 + $0x10] sm:$0xff]
    %v679 = vld [vmem:[#allocation6 + $0x18] sm:$0xff]
    %v680 = vld [vmem:[#allocation6 + $0x20] sm:$0xff]
    %v681 = vld [vmem:[#allocation6 + $0x28] sm:$0xff]
    %v682 = vld [vmem:[#allocation6 + $0x30] sm:$0xff]
    %v683 = vld [vmem:[#allocation6 + $0x38] sm:$0xff]
    %v684 = vld [vmem:[#allocation6 + $0x40] sm:$0xff]
    %v685 = vld [vmem:[#allocation6 + $0x48] sm:$0xff]
    %v686 = vld [vmem:[#allocation6 + $0x50] sm:$0xff]
    %v687 = vld [vmem:[#allocation6 + $0x58] sm:$0xff]
    %v688 = vld [vmem:[#allocation6 + $0x60] sm:$0xff]
    %v689 = vld [vmem:[#allocation6 + $0x68] sm:$0xff]
    %v690 = vld [vmem:[#allocation6 + $0x70] sm:$0xff]
    %v691 = vld [vmem:[#allocation6 + $0x78] sm:$0xff]
    %v692 = vld [vmem:[#allocation6 + $0x80] sm:$0xff]
    %v693 = vld [vmem:[#allocation6 + $0x88] sm:$0xff]
    %v694 = vld [vmem:[#allocation6 + $0x90] sm:$0xff]
    %v695 = vld [vmem:[#allocation6 + $0x98] sm:$0xff]
    %v696 = vld [vmem:[#allocation6 + $0xa0] sm:$0xff]
    %v697 = vld [vmem:[#allocation6 + $0xa8] sm:$0xff]
    %v698 = vld [vmem:[#allocation6 + $0xb0] sm:$0xff]
    %v699 = vld [vmem:[#allocation6 + $0xb8] sm:$0xff]
    %v700 = vld [vmem:[#allocation6 + $0xc0] sm:$0xff]
    %v701 = vld [vmem:[#allocation6 + $0xc8] sm:$0xff]
    %v702 = vld [vmem:[#allocation6 + $0xd0] sm:$0xff]
    %v703 = vld [vmem:[#allocation6 + $0xd8] sm:$0xff]
    %v704 = vld [vmem:[#allocation6 + $0xe0] sm:$0xff]
    %v705 = vld [vmem:[#allocation6 + $0xe8] sm:$0xff]
    %v706 = vld [vmem:[#allocation6 + $0xf0] sm:$0xff]
    %v707 = vld [vmem:[#allocation6 + $0xf8] sm:$0xff]
    %v708 = vld [vmem:[#allocation6 + $0x100] sm:$0xff]
    %v709 = vld [vmem:[#allocation6 + $0x108] sm:$0xff]
    %v710 = vld [vmem:[#allocation6 + $0x110] sm:$0xff]
    %v711 = vld [vmem:[#allocation6 + $0x118] sm:$0xff]
    %v712 = vld [vmem:[#allocation6 + $0x120] sm:$0xff]
    %v713 = vld [vmem:[#allocation6 + $0x128] sm:$0xff]
    %v714 = vld [vmem:[#allocation6 + $0x130] sm:$0xff]
    %v715 = vld [vmem:[#allocation6 + $0x138] sm:$0xff]
    %v716 = vld [vmem:[#allocation6 + $0x140] sm:$0xff]
    %v717 = vld [vmem:[#allocation6 + $0x148] sm:$0xff]
    %v718 = vld [vmem:[#allocation6 + $0x150] sm:$0xff]
    %v719 = vld [vmem:[#allocation6 + $0x158] sm:$0xff]
    %v720 = vld [vmem:[#allocation6 + $0x160] sm:$0xff]
    %v721 = vld [vmem:[#allocation6 + $0x168] sm:$0xff]
    %v722 = vld [vmem:[#allocation6 + $0x170] sm:$0xff]
    %v723 = vld [vmem:[#allocation6 + $0x178] sm:$0xff]
    %v724 = vld [vmem:[#allocation6 + $0x180] sm:$0xff]
    %v725 = vld [vmem:[#allocation6 + $0x188] sm:$0xff]
    %v726 = vld [vmem:[#allocation6 + $0x190] sm:$0xff]
    %v727 = vld [vmem:[#allocation6 + $0x198] sm:$0xff]
    %v728 = vld [vmem:[#allocation6 + $0x1a0] sm:$0xff]
    %v729 = vld [vmem:[#allocation6 + $0x1a8] sm:$0xff]
    %v730 = vld [vmem:[#allocation6 + $0x1b0] sm:$0xff]
    %v731 = vld [vmem:[#allocation6 + $0x1b8] sm:$0xff]
    %v732 = vld [vmem:[#allocation6 + $0x1c0] sm:$0xff]
    %v733 = vld [vmem:[#allocation6 + $0x1c8] sm:$0xff]
    %v734 = vld [vmem:[#allocation6 + $0x1d0] sm:$0xff]
    %v735 = vld [vmem:[#allocation6 + $0x1d8] sm:$0xff]
    %v736 = vld [vmem:[#allocation6 + $0x1e0] sm:$0xff]
    %v737 = vld [vmem:[#allocation6 + $0x1e8] sm:$0xff]
    %v738 = vld [vmem:[#allocation6 + $0x1f0] sm:$0xff]
    %v739 = vld [vmem:[#allocation6 + $0x1f8] sm:$0xff]
    %740 = vmatprep.subr.mxu0 %v737
    %741 = vmatpush1.msra.mxu0 %v736
    %742 = vmatprep.subr.mxu0 %v733
    %743 = vmatpush1.msra.mxu0 %v732
    %744 = vmatprep.subr.mxu0 %v729
    %745 = vmatpush1.msra.mxu0 %v728
    %746 = vmatprep.subr.mxu0 %v725
    %747 = vmatpush1.msra.mxu0 %v724
    %748 = vmatprep.subr.mxu0 %v721
    %749 = vmatpush1.msra.mxu0 %v720
    %750 = vmatprep.subr.mxu0 %v717
    %751 = vmatpush1.msra.mxu0 %v716
    %752 = vmatprep.subr.mxu0 %v713
    %753 = vmatpush1.msra.mxu0 %v712
    %754 = vmatprep.subr.mxu0 %v709
    %755 = vmatpush1.msra.mxu0 %v708
    %756 = vmatprep.subr.mxu0 %v705
    %757 = vmatpush1.msra.mxu0 %v704
    %758 = vmatprep.subr.mxu0 %v701
    %759 = vmatpush1.msra.mxu0 %v700
    %760 = vmatprep.subr.mxu0 %v697
    %761 = vmatpush1.msra.mxu0 %v696
    %762 = vmatprep.subr.mxu0 %v693
    %763 = vmatpush1.msra.mxu0 %v692
    %764 = vmatprep.subr.mxu0 %v689
    %765 = vmatpush1.msra.mxu0 %v688
    %766 = vmatprep.subr.mxu0 %v685
    %767 = vmatpush1.msra.mxu0 %v684
    %768 = vmatprep.subr.mxu0 %v681
    %769 = vmatpush1.msra.mxu0 %v680
    %770 = vmatprep.subr.mxu0 %v677
    %771 = vmatpush1.msra.mxu0 %v676
    %772 = vmatprep.subr.mxu0 0.0
    %773 = vmatpush2.msra.mxu0 0.0
    %774 = vmatprep.subr.mxu0 0.0
    %775 = vmatpush2.msra.mxu0 0.0
    %776 = vmatprep.subr.mxu0 0.0
    %777 = vmatpush2.msra.mxu0 0.0
    %778 = vmatprep.subr.mxu0 0.0
    %779 = vmatpush2.msra.mxu0 0.0
    %780 = vmatprep.subr.mxu0 0.0
    %781 = vmatpush2.msra.mxu0 0.0
    %782 = vmatprep.subr.mxu0 0.0
    %783 = vmatpush2.msra.mxu0 0.0
    %784 = vmatprep.subr.mxu0 0.0
    %785 = vmatpush2.msra.mxu0 0.0
    %786 = vmatprep.subr.mxu0 0.0
    %787 = vmatpush2.msra.mxu0 0.0
    %788 = vmatprep.subr.mxu0 0.0
    %789 = vmatpush2.msra.mxu0 0.0
    %790 = vmatprep.subr.mxu0 0.0
    %791 = vmatpush2.msra.mxu0 0.0
    %792 = vmatprep.subr.mxu0 0.0
    %793 = vmatpush2.msra.mxu0 0.0
    %794 = vmatprep.subr.mxu0 0.0
    %795 = vmatpush2.msra.mxu0 0.0
    %796 = vmatprep.subr.mxu0 0.0
    %797 = vmatpush2.msra.mxu0 0.0
    %798 = vmatprep.subr.mxu0 0.0
    %799 = vmatpush2.msra.mxu0 0.0
    %800 = vmatprep.subr.mxu0 0.0
    %801 = vmatpush2.msra.mxu0 0.0
    %802 = vmatprep.subr.mxu0 0.0
    %803 = vmatpush2.msra.mxu0 0.0
    %804 = vmatprep.mubr.f32.mxu0 0.0
    %805 = vmatmul.mubr.f32.gmra.mxu0 %v670
    %v806 = vpop.f32.mrf.mxu0
    %v807 = vadd.f32 0.0, %v806
    %v808 = vpop.f32.mrf.mxu0
    %v809 = vadd.f32 0.0, %v808
    %810 = vdwg.mxu0
    %811 = vmatprep.subr.mxu0 %v739
    %812 = vmatpush1.msra.mxu0 %v738
    %813 = vmatprep.subr.mxu0 %v735
    %814 = vmatpush1.msra.mxu0 %v734
    %815 = vmatprep.subr.mxu0 %v731
    %816 = vmatpush1.msra.mxu0 %v730
    %817 = vmatprep.subr.mxu0 %v727
    %818 = vmatpush1.msra.mxu0 %v726
    %819 = vmatprep.subr.mxu0 %v723
    %820 = vmatpush1.msra.mxu0 %v722
    %821 = vmatprep.subr.mxu0 %v719
    %822 = vmatpush1.msra.mxu0 %v718
    %823 = vmatprep.subr.mxu0 %v715
    %824 = vmatpush1.msra.mxu0 %v714
    %825 = vmatprep.subr.mxu0 %v711
    %826 = vmatpush1.msra.mxu0 %v710
    %827 = vmatprep.subr.mxu0 %v707
    %828 = vmatpush1.msra.mxu0 %v706
    %829 = vmatprep.subr.mxu0 %v703
    %830 = vmatpush1.msra.mxu0 %v702
    %831 = vmatprep.subr.mxu0 %v699
    %832 = vmatpush1.msra.mxu0 %v698
    %833 = vmatprep.subr.mxu0 %v695
    %834 = vmatpush1.msra.mxu0 %v694
    %835 = vmatprep.subr.mxu0 %v691
    %836 = vmatpush1.msra.mxu0 %v690
    %837 = vmatprep.subr.mxu0 %v687
    %838 = vmatpush1.msra.mxu0 %v686
    %839 = vmatprep.subr.mxu0 %v683
    %840 = vmatpush1.msra.mxu0 %v682
    %841 = vmatprep.subr.mxu0 %v679
    %842 = vmatpush1.msra.mxu0 %v678
    %843 = vmatprep.subr.mxu0 0.0
    %844 = vmatpush2.msra.mxu0 0.0
    %845 = vmatprep.subr.mxu0 0.0
    %846 = vmatpush2.msra.mxu0 0.0
    %847 = vmatprep.subr.mxu0 0.0
    %848 = vmatpush2.msra.mxu0 0.0
    %849 = vmatprep.subr.mxu0 0.0
    %850 = vmatpush2.msra.mxu0 0.0
    %851 = vmatprep.subr.mxu0 0.0
    %852 = vmatpush2.msra.mxu0 0.0
    %853 = vmatprep.subr.mxu0 0.0
    %854 = vmatpush2.msra.mxu0 0.0
    %855 = vmatprep.subr.mxu0 0.0
    %856 = vmatpush2.msra.mxu0 0.0
    %857 = vmatprep.subr.mxu0 0.0
    %858 = vmatpush2.msra.mxu0 0.0
    %859 = vmatprep.subr.mxu0 0.0
    %860 = vmatpush2.msra.mxu0 0.0
    %861 = vmatprep.subr.mxu0 0.0
    %862 = vmatpush2.msra.mxu0 0.0
    %863 = vmatprep.subr.mxu0 0.0
    %864 = vmatpush2.msra.mxu0 0.0
    %865 = vmatprep.subr.mxu0 0.0
    %866 = vmatpush2.msra.mxu0 0.0
    %867 = vmatprep.subr.mxu0 0.0
    %868 = vmatpush2.msra.mxu0 0.0
    %869 = vmatprep.subr.mxu0 0.0
    %870 = vmatpush2.msra.mxu0 0.0
    %871 = vmatprep.subr.mxu0 0.0
    %872 = vmatpush2.msra.mxu0 0.0
    %873 = vmatprep.subr.mxu0 0.0
    %874 = vmatpush2.msra.mxu0 0.0
    %875 = vmatprep.mubr.f32.mxu0 0.0
    %876 = vmatmul.mubr.f32.gmra.mxu0 %v670
    %v877 = vpop.f32.mrf.mxu0
    %v878 = vadd.f32 0.0, %v877
    %v879 = vpop.f32.mrf.mxu0
    %v880 = vadd.f32 0.0, %v879
    %881 = vdwg.mxu0
    %v882 = vadd.f32 %v672, %v807
    %v883 = vadd.f32 %v673, %v809
    %v884 = vadd.f32 %v674, %v878
    %v885 = vadd.f32 %v675, %v880
    %v886 = vxor.u32 %v882, 2147483648
    %v887 = vmul.f32 %v886, 1.442695
    %v888 = vpow.pop %v887
    %v889 = vadd.f32 %v888, 1.0
    %v890 = vrcp.pop %v889
    %v891 = vmul.f32 1.0, %v890
    %v892 = vxor.u32 %v883, 2147483648
    %v893 = vmul.f32 %v892, 1.442695
    %v894 = vpow.pop %v893
    %v895 = vadd.f32 %v894, 1.0
    %v896 = vrcp.pop %v895
    %v897 = vmul.f32 1.0, %v896
    %v898 = vtanh.pop %v884
    %v899 = vxor.u32 %v885, 2147483648
    %v900 = vmul.f32 %v899, 1.442695
    %v901 = vpow.pop %v900
    %v902 = vadd.f32 %v901, 1.0
    %v903 = vrcp.pop %v902
    %v904 = vmul.f32 1.0, %v903
    %v905 = vmul.f32 %v897, %v668
    %v906 = vmul.f32 %v891, %v898
    %v907 = vadd.f32 %v905, %v906
    %v908 = vtanh.pop %v907
    %v909 = vmul.f32 %v904, %v908
    %910 = vst [vmem:[#allocation3 + $0x8] sm:$0xff] %v909
    %v911 = vld [vmem:[#allocation2 + $0x40] sm:$0xff]
    %v912 = vld [vmem:[#allocation2 + $0x48] sm:$0xff]
    %v913 = vld [vmem:[#allocation2 + $0x50] sm:$0xff]
    %v914 = vld [vmem:[#allocation2 + $0x58] sm:$0xff]
    %v915 = vld [vmem:[#allocation6] sm:$0xff]
    %v916 = vld [vmem:[#allocation6 + $0x8] sm:$0xff]
    %v917 = vld [vmem:[#allocation6 + $0x10] sm:$0xff]
    %v918 = vld [vmem:[#allocation6 + $0x18] sm:$0xff]
    %v919 = vld [vmem:[#allocation6 + $0x20] sm:$0xff]
    %v920 = vld [vmem:[#allocation6 + $0x28] sm:$0xff]
    %v921 = vld [vmem:[#allocation6 + $0x30] sm:$0xff]
    %v922 = vld [vmem:[#allocation6 + $0x38] sm:$0xff]
    %v923 = vld [vmem:[#allocation6 + $0x40] sm:$0xff]
    %v924 = vld [vmem:[#allocation6 + $0x48] sm:$0xff]
    %v925 = vld [vmem:[#allocation6 + $0x50] sm:$0xff]
    %v926 = vld [vmem:[#allocation6 + $0x58] sm:$0xff]
    %v927 = vld [vmem:[#allocation6 + $0x60] sm:$0xff]
    %v928 = vld [vmem:[#allocation6 + $0x68] sm:$0xff]
    %v929 = vld [vmem:[#allocation6 + $0x70] sm:$0xff]
    %v930 = vld [vmem:[#allocation6 + $0x78] sm:$0xff]
    %v931 = vld [vmem:[#allocation6 + $0x80] sm:$0xff]
    %v932 = vld [vmem:[#allocation6 + $0x88] sm:$0xff]
    %v933 = vld [vmem:[#allocation6 + $0x90] sm:$0xff]
    %v934 = vld [vmem:[#allocation6 + $0x98] sm:$0xff]
    %v935 = vld [vmem:[#allocation6 + $0xa0] sm:$0xff]
    %v936 = vld [vmem:[#allocation6 + $0xa8] sm:$0xff]
    %v937 = vld [vmem:[#allocation6 + $0xb0] sm:$0xff]
    %v938 = vld [vmem:[#allocation6 + $0xb8] sm:$0xff]
    %v939 = vld [vmem:[#allocation6 + $0xc0] sm:$0xff]
    %v940 = vld [vmem:[#allocation6 + $0xc8] sm:$0xff]
    %v941 = vld [vmem:[#allocation6 + $0xd0] sm:$0xff]
    %v942 = vld [vmem:[#allocation6 + $0xd8] sm:$0xff]
    %v943 = vld [vmem:[#allocation6 + $0xe0] sm:$0xff]
    %v944 = vld [vmem:[#allocation6 + $0xe8] sm:$0xff]
    %v945 = vld [vmem:[#allocation6 + $0xf0] sm:$0xff]
    %v946 = vld [vmem:[#allocation6 + $0xf8] sm:$0xff]
    %v947 = vld [vmem:[#allocation6 + $0x100] sm:$0xff]
    %v948 = vld [vmem:[#allocation6 + $0x108] sm:$0xff]
    %v949 = vld [vmem:[#allocation6 + $0x110] sm:$0xff]
    %v950 = vld [vmem:[#allocation6 + $0x118] sm:$0xff]
    %v951 = vld [vmem:[#allocation6 + $0x120] sm:$0xff]
    %v952 = vld [vmem:[#allocation6 + $0x128] sm:$0xff]
    %v953 = vld [vmem:[#allocation6 + $0x130] sm:$0xff]
    %v954 = vld [vmem:[#allocation6 + $0x138] sm:$0xff]
    %v955 = vld [vmem:[#allocation6 + $0x140] sm:$0xff]
    %v956 = vld [vmem:[#allocation6 + $0x148] sm:$0xff]
    %v957 = vld [vmem:[#allocation6 + $0x150] sm:$0xff]
    %v958 = vld [vmem:[#allocation6 + $0x158] sm:$0xff]
    %v959 = vld [vmem:[#allocation6 + $0x160] sm:$0xff]
    %v960 = vld [vmem:[#allocation6 + $0x168] sm:$0xff]
    %v961 = vld [vmem:[#allocation6 + $0x170] sm:$0xff]
    %v962 = vld [vmem:[#allocation6 + $0x178] sm:$0xff]
    %v963 = vld [vmem:[#allocation6 + $0x180] sm:$0xff]
    %v964 = vld [vmem:[#allocation6 + $0x188] sm:$0xff]
    %v965 = vld [vmem:[#allocation6 + $0x190] sm:$0xff]
    %v966 = vld [vmem:[#allocation6 + $0x198] sm:$0xff]
    %v967 = vld [vmem:[#allocation6 + $0x1a0] sm:$0xff]
    %v968 = vld [vmem:[#allocation6 + $0x1a8] sm:$0xff]
    %v969 = vld [vmem:[#allocation6 + $0x1b0] sm:$0xff]
    %v970 = vld [vmem:[#allocation6 + $0x1b8] sm:$0xff]
    %v971 = vld [vmem:[#allocation6 + $0x1c0] sm:$0xff]
    %v972 = vld [vmem:[#allocation6 + $0x1c8] sm:$0xff]
    %v973 = vld [vmem:[#allocation6 + $0x1d0] sm:$0xff]
    %v974 = vld [vmem:[#allocation6 + $0x1d8] sm:$0xff]
    %v975 = vld [vmem:[#allocation6 + $0x1e0] sm:$0xff]
    %v976 = vld [vmem:[#allocation6 + $0x1e8] sm:$0xff]
    %v977 = vld [vmem:[#allocation6 + $0x1f0] sm:$0xff]
    %v978 = vld [vmem:[#allocation6 + $0x1f8] sm:$0xff]
    %979 = vmatprep.subr.mxu0 %v976
    %980 = vmatpush1.msra.mxu0 %v975
    %981 = vmatprep.subr.mxu0 %v972
    %982 = vmatpush1.msra.mxu0 %v971
    %983 = vmatprep.subr.mxu0 %v968
    %984 = vmatpush1.msra.mxu0 %v967
    %985 = vmatprep.subr.mxu0 %v964
    %986 = vmatpush1.msra.mxu0 %v963
    %987 = vmatprep.subr.mxu0 %v960
    %988 = vmatpush1.msra.mxu0 %v959
    %989 = vmatprep.subr.mxu0 %v956
    %990 = vmatpush1.msra.mxu0 %v955
    %991 = vmatprep.subr.mxu0 %v952
    %992 = vmatpush1.msra.mxu0 %v951
    %993 = vmatprep.subr.mxu0 %v948
    %994 = vmatpush1.msra.mxu0 %v947
    %995 = vmatprep.subr.mxu0 %v944
    %996 = vmatpush1.msra.mxu0 %v943
    %997 = vmatprep.subr.mxu0 %v940
    %998 = vmatpush1.msra.mxu0 %v939
    %999 = vmatprep.subr.mxu0 %v936
    %1000 = vmatpush1.msra.mxu0 %v935
    %1001 = vmatprep.subr.mxu0 %v932
    %1002 = vmatpush1.msra.mxu0 %v931
    %1003 = vmatprep.subr.mxu0 %v928
    %1004 = vmatpush1.msra.mxu0 %v927
    %1005 = vmatprep.subr.mxu0 %v924
    %1006 = vmatpush1.msra.mxu0 %v923
    %1007 = vmatprep.subr.mxu0 %v920
    %1008 = vmatpush1.msra.mxu0 %v919
    %1009 = vmatprep.subr.mxu0 %v916
    %1010 = vmatpush1.msra.mxu0 %v915
    %1011 = vmatprep.subr.mxu0 0.0
    %1012 = vmatpush2.msra.mxu0 0.0
    %1013 = vmatprep.subr.mxu0 0.0
    %1014 = vmatpush2.msra.mxu0 0.0
    %1015 = vmatprep.subr.mxu0 0.0
    %1016 = vmatpush2.msra.mxu0 0.0
    %1017 = vmatprep.subr.mxu0 0.0
    %1018 = vmatpush2.msra.mxu0 0.0
    %1019 = vmatprep.subr.mxu0 0.0
    %1020 = vmatpush2.msra.mxu0 0.0
    %1021 = vmatprep.subr.mxu0 0.0
    %1022 = vmatpush2.msra.mxu0 0.0
    %1023 = vmatprep.subr.mxu0 0.0
    %1024 = vmatpush2.msra.mxu0 0.0
    %1025 = vmatprep.subr.mxu0 0.0
    %1026 = vmatpush2.msra.mxu0 0.0
    %1027 = vmatprep.subr.mxu0 0.0
    %1028 = vmatpush2.msra.mxu0 0.0
    %1029 = vmatprep.subr.mxu0 0.0
    %1030 = vmatpush2.msra.mxu0 0.0
    %1031 = vmatprep.subr.mxu0 0.0
    %1032 = vmatpush2.msra.mxu0 0.0
    %1033 = vmatprep.subr.mxu0 0.0
    %1034 = vmatpush2.msra.mxu0 0.0
    %1035 = vmatprep.subr.mxu0 0.0
    %1036 = vmatpush2.msra.mxu0 0.0
    %1037 = vmatprep.subr.mxu0 0.0
    %1038 = vmatpush2.msra.mxu0 0.0
    %1039 = vmatprep.subr.mxu0 0.0
    %1040 = vmatpush2.msra.mxu0 0.0
    %1041 = vmatprep.subr.mxu0 0.0
    %1042 = vmatpush2.msra.mxu0 0.0
    %1043 = vmatprep.mubr.f32.mxu0 0.0
    %1044 = vmatmul.mubr.f32.gmra.mxu0 %v909
    %v1045 = vpop.f32.mrf.mxu0
    %v1046 = vadd.f32 0.0, %v1045
    %v1047 = vpop.f32.mrf.mxu0
    %v1048 = vadd.f32 0.0, %v1047
    %1049 = vdwg.mxu0
    %1050 = vmatprep.subr.mxu0 %v978
    %1051 = vmatpush1.msra.mxu0 %v977
    %1052 = vmatprep.subr.mxu0 %v974
    %1053 = vmatpush1.msra.mxu0 %v973
    %1054 = vmatprep.subr.mxu0 %v970
    %1055 = vmatpush1.msra.mxu0 %v969
    %1056 = vmatprep.subr.mxu0 %v966
    %1057 = vmatpush1.msra.mxu0 %v965
    %1058 = vmatprep.subr.mxu0 %v962
    %1059 = vmatpush1.msra.mxu0 %v961
    %1060 = vmatprep.subr.mxu0 %v958
    %1061 = vmatpush1.msra.mxu0 %v957
    %1062 = vmatprep.subr.mxu0 %v954
    %1063 = vmatpush1.msra.mxu0 %v953
    %1064 = vmatprep.subr.mxu0 %v950
    %1065 = vmatpush1.msra.mxu0 %v949
    %1066 = vmatprep.subr.mxu0 %v946
    %1067 = vmatpush1.msra.mxu0 %v945
    %1068 = vmatprep.subr.mxu0 %v942
    %1069 = vmatpush1.msra.mxu0 %v941
    %1070 = vmatprep.subr.mxu0 %v938
    %1071 = vmatpush1.msra.mxu0 %v937
    %1072 = vmatprep.subr.mxu0 %v934
    %1073 = vmatpush1.msra.mxu0 %v933
    %1074 = vmatprep.subr.mxu0 %v930
    %1075 = vmatpush1.msra.mxu0 %v929
    %1076 = vmatprep.subr.mxu0 %v926
    %1077 = vmatpush1.msra.mxu0 %v925
    %1078 = vmatprep.subr.mxu0 %v922
    %1079 = vmatpush1.msra.mxu0 %v921
    %1080 = vmatprep.subr.mxu0 %v918
    %1081 = vmatpush1.msra.mxu0 %v917
    %1082 = vmatprep.subr.mxu0 0.0
    %1083 = vmatpush2.msra.mxu0 0.0
    %1084 = vmatprep.subr.mxu0 0.0
    %1085 = vmatpush2.msra.mxu0 0.0
    %1086 = vmatprep.subr.mxu0 0.0
    %1087 = vmatpush2.msra.mxu0 0.0
    %1088 = vmatprep.subr.mxu0 0.0
    %1089 = vmatpush2.msra.mxu0 0.0
    %1090 = vmatprep.subr.mxu0 0.0
    %1091 = vmatpush2.msra.mxu0 0.0
    %1092 = vmatprep.subr.mxu0 0.0
    %1093 = vmatpush2.msra.mxu0 0.0
    %1094 = vmatprep.subr.mxu0 0.0
    %1095 = vmatpush2.msra.mxu0 0.0
    %1096 = vmatprep.subr.mxu0 0.0
    %1097 = vmatpush2.msra.mxu0 0.0
    %1098 = vmatprep.subr.mxu0 0.0
    %1099 = vmatpush2.msra.mxu0 0.0
    %1100 = vmatprep.subr.mxu0 0.0
    %1101 = vmatpush2.msra.mxu0 0.0
    %1102 = vmatprep.subr.mxu0 0.0
    %1103 = vmatpush2.msra.mxu0 0.0
    %1104 = vmatprep.subr.mxu0 0.0
    %1105 = vmatpush2.msra.mxu0 0.0
    %1106 = vmatprep.subr.mxu0 0.0
    %1107 = vmatpush2.msra.mxu0 0.0
    %1108 = vmatprep.subr.mxu0 0.0
    %1109 = vmatpush2.msra.mxu0 0.0
    %1110 = vmatprep.subr.mxu0 0.0
    %1111 = vmatpush2.msra.mxu0 0.0
    %1112 = vmatprep.subr.mxu0 0.0
    %1113 = vmatpush2.msra.mxu0 0.0
    %1114 = vmatprep.mubr.f32.mxu0 0.0
    %1115 = vmatmul.mubr.f32.gmra.mxu0 %v909
    %v1116 = vpop.f32.mrf.mxu0
    %v1117 = vadd.f32 0.0, %v1116
    %v1118 = vpop.f32.mrf.mxu0
    %v1119 = vadd.f32 0.0, %v1118
    %1120 = vdwg.mxu0
    %v1121 = vadd.f32 %v911, %v1046
    %v1122 = vadd.f32 %v912, %v1048
    %v1123 = vadd.f32 %v913, %v1117
    %v1124 = vadd.f32 %v914, %v1119
    %v1125 = vxor.u32 %v1121, 2147483648
    %v1126 = vmul.f32 %v1125, 1.442695
    %v1127 = vpow.pop %v1126
    %v1128 = vadd.f32 %v1127, 1.0
    %v1129 = vrcp.pop %v1128
    %v1130 = vmul.f32 1.0, %v1129
    %v1131 = vxor.u32 %v1122, 2147483648
    %v1132 = vmul.f32 %v1131, 1.442695
    %v1133 = vpow.pop %v1132
    %v1134 = vadd.f32 %v1133, 1.0
    %v1135 = vrcp.pop %v1134
    %v1136 = vmul.f32 1.0, %v1135
    %v1137 = vtanh.pop %v1123
    %v1138 = vxor.u32 %v1124, 2147483648
    %v1139 = vmul.f32 %v1138, 1.442695
    %v1140 = vpow.pop %v1139
    %v1141 = vadd.f32 %v1140, 1.0
    %v1142 = vrcp.pop %v1141
    %v1143 = vmul.f32 1.0, %v1142
    %v1144 = vmul.f32 %v1136, %v907
    %v1145 = vmul.f32 %v1130, %v1137
    %v1146 = vadd.f32 %v1144, %v1145
    %v1147 = vtanh.pop %v1146
    %v1148 = vmul.f32 %v1143, %v1147
    %1149 = vst [vmem:[#allocation3 + $0x10] sm:$0xff] %v1148
    %v1150 = vld [vmem:[#allocation2 + $0x60] sm:$0xff]
    %v1151 = vld [vmem:[#allocation2 + $0x68] sm:$0xff]
    %v1152 = vld [vmem:[#allocation2 + $0x70] sm:$0xff]
    %v1153 = vld [vmem:[#allocation2 + $0x78] sm:$0xff]
    %v1154 = vld [vmem:[#allocation6] sm:$0xff]
    %v1155 = vld [vmem:[#allocation6 + $0x8] sm:$0xff]
    %v1156 = vld [vmem:[#allocation6 + $0x10] sm:$0xff]
    %v1157 = vld [vmem:[#allocation6 + $0x18] sm:$0xff]
    %v1158 = vld [vmem:[#allocation6 + $0x20] sm:$0xff]
    %v1159 = vld [vmem:[#allocation6 + $0x28] sm:$0xff]
    %v1160 = vld [vmem:[#allocation6 + $0x30] sm:$0xff]
    %v1161 = vld [vmem:[#allocation6 + $0x38] sm:$0xff]
    %v1162 = vld [vmem:[#allocation6 + $0x40] sm:$0xff]
    %v1163 = vld [vmem:[#allocation6 + $0x48] sm:$0xff]
    %v1164 = vld [vmem:[#allocation6 + $0x50] sm:$0xff]
    %v1165 = vld [vmem:[#allocation6 + $0x58] sm:$0xff]
    %v1166 = vld [vmem:[#allocation6 + $0x60] sm:$0xff]
    %v1167 = vld [vmem:[#allocation6 + $0x68] sm:$0xff]
    %v1168 = vld [vmem:[#allocation6 + $0x70] sm:$0xff]
    %v1169 = vld [vmem:[#allocation6 + $0x78] sm:$0xff]
    %v1170 = vld [vmem:[#allocation6 + $0x80] sm:$0xff]
    %v1171 = vld [vmem:[#allocation6 + $0x88] sm:$0xff]
    %v1172 = vld [vmem:[#allocation6 + $0x90] sm:$0xff]
    %v1173 = vld [vmem:[#allocation6 + $0x98] sm:$0xff]
    %v1174 = vld [vmem:[#allocation6 + $0xa0] sm:$0xff]
    %v1175 = vld [vmem:[#allocation6 + $0xa8] sm:$0xff]
    %v1176 = vld [vmem:[#allocation6 + $0xb0] sm:$0xff]
    %v1177 = vld [vmem:[#allocation6 + $0xb8] sm:$0xff]
    %v1178 = vld [vmem:[#allocation6 + $0xc0] sm:$0xff]
    %v1179 = vld [vmem:[#allocation6 + $0xc8] sm:$0xff]
    %v1180 = vld [vmem:[#allocation6 + $0xd0] sm:$0xff]
    %v1181 = vld [vmem:[#allocation6 + $0xd8] sm:$0xff]
    %v1182 = vld [vmem:[#allocation6 + $0xe0] sm:$0xff]
    %v1183 = vld [vmem:[#allocation6 + $0xe8] sm:$0xff]
    %v1184 = vld [vmem:[#allocation6 + $0xf0] sm:$0xff]
    %v1185 = vld [vmem:[#allocation6 + $0xf8] sm:$0xff]
    %v1186 = vld [vmem:[#allocation6 + $0x100] sm:$0xff]
    %v1187 = vld [vmem:[#allocation6 + $0x108] sm:$0xff]
    %v1188 = vld [vmem:[#allocation6 + $0x110] sm:$0xff]
    %v1189 = vld [vmem:[#allocation6 + $0x118] sm:$0xff]
    %v1190 = vld [vmem:[#allocation6 + $0x120] sm:$0xff]
    %v1191 = vld [vmem:[#allocation6 + $0x128] sm:$0xff]
    %v1192 = vld [vmem:[#allocation6 + $0x130] sm:$0xff]
    %v1193 = vld [vmem:[#allocation6 + $0x138] sm:$0xff]
    %v1194 = vld [vmem:[#allocation6 + $0x140] sm:$0xff]
    %v1195 = vld [vmem:[#allocation6 + $0x148] sm:$0xff]
    %v1196 = vld [vmem:[#allocation6 + $0x150] sm:$0xff]
    %v1197 = vld [vmem:[#allocation6 + $0x158] sm:$0xff]
    %v1198 = vld [vmem:[#allocation6 + $0x160] sm:$0xff]
    %v1199 = vld [vmem:[#allocation6 + $0x168] sm:$0xff]
    %v1200 = vld [vmem:[#allocation6 + $0x170] sm:$0xff]
    %v1201 = vld [vmem:[#allocation6 + $0x178] sm:$0xff]
    %v1202 = vld [vmem:[#allocation6 + $0x180] sm:$0xff]
    %v1203 = vld [vmem:[#allocation6 + $0x188] sm:$0xff]
    %v1204 = vld [vmem:[#allocation6 + $0x190] sm:$0xff]
    %v1205 = vld [vmem:[#allocation6 + $0x198] sm:$0xff]
    %v1206 = vld [vmem:[#allocation6 + $0x1a0] sm:$0xff]
    %v1207 = vld [vmem:[#allocation6 + $0x1a8] sm:$0xff]
    %v1208 = vld [vmem:[#allocation6 + $0x1b0] sm:$0xff]
    %v1209 = vld [vmem:[#allocation6 + $0x1b8] sm:$0xff]
    %v1210 = vld [vmem:[#allocation6 + $0x1c0] sm:$0xff]
    %v1211 = vld [vmem:[#allocation6 + $0x1c8] sm:$0xff]
    %v1212 = vld [vmem:[#allocation6 + $0x1d0] sm:$0xff]
    %v1213 = vld [vmem:[#allocation6 + $0x1d8] sm:$0xff]
    %v1214 = vld [vmem:[#allocation6 + $0x1e0] sm:$0xff]
    %v1215 = vld [vmem:[#allocation6 + $0x1e8] sm:$0xff]
    %v1216 = vld [vmem:[#allocation6 + $0x1f0] sm:$0xff]
    %v1217 = vld [vmem:[#allocation6 + $0x1f8] sm:$0xff]
    %1218 = vmatprep.subr.mxu0 %v1215
    %1219 = vmatpush1.msra.mxu0 %v1214
    %1220 = vmatprep.subr.mxu0 %v1211
    %1221 = vmatpush1.msra.mxu0 %v1210
    %1222 = vmatprep.subr.mxu0 %v1207
    %1223 = vmatpush1.msra.mxu0 %v1206
    %1224 = vmatprep.subr.mxu0 %v1203
    %1225 = vmatpush1.msra.mxu0 %v1202
    %1226 = vmatprep.subr.mxu0 %v1199
    %1227 = vmatpush1.msra.mxu0 %v1198
    %1228 = vmatprep.subr.mxu0 %v1195
    %1229 = vmatpush1.msra.mxu0 %v1194
    %1230 = vmatprep.subr.mxu0 %v1191
    %1231 = vmatpush1.msra.mxu0 %v1190
    %1232 = vmatprep.subr.mxu0 %v1187
    %1233 = vmatpush1.msra.mxu0 %v1186
    %1234 = vmatprep.subr.mxu0 %v1183
    %1235 = vmatpush1.msra.mxu0 %v1182
    %1236 = vmatprep.subr.mxu0 %v1179
    %1237 = vmatpush1.msra.mxu0 %v1178
    %1238 = vmatprep.subr.mxu0 %v1175
    %1239 = vmatpush1.msra.mxu0 %v1174
    %1240 = vmatprep.subr.mxu0 %v1171
    %1241 = vmatpush1.msra.mxu0 %v1170
    %1242 = vmatprep.subr.mxu0 %v1167
    %1243 = vmatpush1.msra.mxu0 %v1166
    %1244 = vmatprep.subr.mxu0 %v1163
    %1245 = vmatpush1.msra.mxu0 %v1162
    %1246 = vmatprep.subr.mxu0 %v1159
    %1247 = vmatpush1.msra.mxu0 %v1158
    %1248 = vmatprep.subr.mxu0 %v1155
    %1249 = vmatpush1.msra.mxu0 %v1154
    %1250 = vmatprep.subr.mxu0 0.0
    %1251 = vmatpush2.msra.mxu0 0.0
    %1252 = vmatprep.subr.mxu0 0.0
    %1253 = vmatpush2.msra.mxu0 0.0
    %1254 = vmatprep.subr.mxu0 0.0
    %1255 = vmatpush2.msra.mxu0 0.0
    %1256 = vmatprep.subr.mxu0 0.0
    %1257 = vmatpush2.msra.mxu0 0.0
    %1258 = vmatprep.subr.mxu0 0.0
    %1259 = vmatpush2.msra.mxu0 0.0
    %1260 = vmatprep.subr.mxu0 0.0
    %1261 = vmatpush2.msra.mxu0 0.0
    %1262 = vmatprep.subr.mxu0 0.0
    %1263 = vmatpush2.msra.mxu0 0.0
    %1264 = vmatprep.subr.mxu0 0.0
    %1265 = vmatpush2.msra.mxu0 0.0
    %1266 = vmatprep.subr.mxu0 0.0
    %1267 = vmatpush2.msra.mxu0 0.0
    %1268 = vmatprep.subr.mxu0 0.0
    %1269 = vmatpush2.msra.mxu0 0.0
    %1270 = vmatprep.subr.mxu0 0.0
    %1271 = vmatpush2.msra.mxu0 0.0
    %1272 = vmatprep.subr.mxu0 0.0
    %1273 = vmatpush2.msra.mxu0 0.0
    %1274 = vmatprep.subr.mxu0 0.0
    %1275 = vmatpush2.msra.mxu0 0.0
    %1276 = vmatprep.subr.mxu0 0.0
    %1277 = vmatpush2.msra.mxu0 0.0
    %1278 = vmatprep.subr.mxu0 0.0
    %1279 = vmatpush2.msra.mxu0 0.0
    %1280 = vmatprep.subr.mxu0 0.0
    %1281 = vmatpush2.msra.mxu0 0.0
    %1282 = vmatprep.mubr.f32.mxu0 0.0
    %1283 = vmatmul.mubr.f32.gmra.mxu0 %v1148
    %v1284 = vpop.f32.mrf.mxu0
    %v1285 = vadd.f32 0.0, %v1284
    %v1286 = vpop.f32.mrf.mxu0
    %v1287 = vadd.f32 0.0, %v1286
    %1288 = vdwg.mxu0
    %1289 = vmatprep.subr.mxu0 %v1217
    %1290 = vmatpush1.msra.mxu0 %v1216
    %1291 = vmatprep.subr.mxu0 %v1213
    %1292 = vmatpush1.msra.mxu0 %v1212
    %1293 = vmatprep.subr.mxu0 %v1209
    %1294 = vmatpush1.msra.mxu0 %v1208
    %1295 = vmatprep.subr.mxu0 %v1205
    %1296 = vmatpush1.msra.mxu0 %v1204
    %1297 = vmatprep.subr.mxu0 %v1201
    %1298 = vmatpush1.msra.mxu0 %v1200
    %1299 = vmatprep.subr.mxu0 %v1197
    %1300 = vmatpush1.msra.mxu0 %v1196
    %1301 = vmatprep.subr.mxu0 %v1193
    %1302 = vmatpush1.msra.mxu0 %v1192
    %1303 = vmatprep.subr.mxu0 %v1189
    %1304 = vmatpush1.msra.mxu0 %v1188
    %1305 = vmatprep.subr.mxu0 %v1185
    %1306 = vmatpush1.msra.mxu0 %v1184
    %1307 = vmatprep.subr.mxu0 %v1181
    %1308 = vmatpush1.msra.mxu0 %v1180
    %1309 = vmatprep.subr.mxu0 %v1177
    %1310 = vmatpush1.msra.mxu0 %v1176
    %1311 = vmatprep.subr.mxu0 %v1173
    %1312 = vmatpush1.msra.mxu0 %v1172
    %1313 = vmatprep.subr.mxu0 %v1169
    %1314 = vmatpush1.msra.mxu0 %v1168
    %1315 = vmatprep.subr.mxu0 %v1165
    %1316 = vmatpush1.msra.mxu0 %v1164
    %1317 = vmatprep.subr.mxu0 %v1161
    %1318 = vmatpush1.msra.mxu0 %v1160
    %1319 = vmatprep.subr.mxu0 %v1157
    %1320 = vmatpush1.msra.mxu0 %v1156
    %1321 = vmatprep.subr.mxu0 0.0
    %1322 = vmatpush2.msra.mxu0 0.0
    %1323 = vmatprep.subr.mxu0 0.0
    %1324 = vmatpush2.msra.mxu0 0.0
    %1325 = vmatprep.subr.mxu0 0.0
    %1326 = vmatpush2.msra.mxu0 0.0
    %1327 = vmatprep.subr.mxu0 0.0
    %1328 = vmatpush2.msra.mxu0 0.0
    %1329 = vmatprep.subr.mxu0 0.0
    %1330 = vmatpush2.msra.mxu0 0.0
    %1331 = vmatprep.subr.mxu0 0.0
    %1332 = vmatpush2.msra.mxu0 0.0
    %1333 = vmatprep.subr.mxu0 0.0
    %1334 = vmatpush2.msra.mxu0 0.0
    %1335 = vmatprep.subr.mxu0 0.0
    %1336 = vmatpush2.msra.mxu0 0.0
    %1337 = vmatprep.subr.mxu0 0.0
    %1338 = vmatpush2.msra.mxu0 0.0
    %1339 = vmatprep.subr.mxu0 0.0
    %1340 = vmatpush2.msra.mxu0 0.0
    %1341 = vmatprep.subr.mxu0 0.0
    %1342 = vmatpush2.msra.mxu0 0.0
    %1343 = vmatprep.subr.mxu0 0.0
    %1344 = vmatpush2.msra.mxu0 0.0
    %1345 = vmatprep.subr.mxu0 0.0
    %1346 = vmatpush2.msra.mxu0 0.0
    %1347 = vmatprep.subr.mxu0 0.0
    %1348 = vmatpush2.msra.mxu0 0.0
    %1349 = vmatprep.subr.mxu0 0.0
    %1350 = vmatpush2.msra.mxu0 0.0
    %1351 = vmatprep.subr.mxu0 0.0
    %1352 = vmatpush2.msra.mxu0 0.0
    %1353 = vmatprep.mubr.f32.mxu0 0.0
    %1354 = vmatmul.mubr.f32.gmra.mxu0 %v1148
    %v1355 = vpop.f32.mrf.mxu0
    %v1356 = vadd.f32 0.0, %v1355
    %v1357 = vpop.f32.mrf.mxu0
    %v1358 = vadd.f32 0.0, %v1357
    %1359 = vdwg.mxu0
    %v1360 = vadd.f32 %v1150, %v1285
    %v1361 = vadd.f32 %v1151, %v1287
    %v1362 = vadd.f32 %v1152, %v1356
    %v1363 = vadd.f32 %v1153, %v1358
    %v1364 = vxor.u32 %v1360, 2147483648
    %v1365 = vmul.f32 %v1364, 1.442695
    %v1366 = vpow.pop %v1365
    %v1367 = vadd.f32 %v1366, 1.0
    %v1368 = vrcp.pop %v1367
    %v1369 = vmul.f32 1.0, %v1368
    %v1370 = vxor.u32 %v1361, 2147483648
    %v1371 = vmul.f32 %v1370, 1.442695
    %v1372 = vpow.pop %v1371
    %v1373 = vadd.f32 %v1372, 1.0
    %v1374 = vrcp.pop %v1373
    %v1375 = vmul.f32 1.0, %v1374
    %v1376 = vtanh.pop %v1362
    %v1377 = vxor.u32 %v1363, 2147483648
    %v1378 = vmul.f32 %v1377, 1.442695
    %v1379 = vpow.pop %v1378
    %v1380 = vadd.f32 %v1379, 1.0
    %v1381 = vrcp.pop %v1380
    %v1382 = vmul.f32 1.0, %v1381
    %v1383 = vmul.f32 %v1375, %v1146
    %v1384 = vmul.f32 %v1369, %v1376
    %v1385 = vadd.f32 %v1383, %v1384
    %v1386 = vtanh.pop %v1385
    %v1387 = vmul.f32 %v1382, %v1386
    %1388 = vst [vmem:[#allocation3 + $0x18] sm:$0xff] %v1387
    %v1389 = vld [vmem:[#allocation2 + $0x80] sm:$0xff]
    %v1390 = vld [vmem:[#allocation2 + $0x88] sm:$0xff]
    %v1391 = vld [vmem:[#allocation2 + $0x90] sm:$0xff]
    %v1392 = vld [vmem:[#allocation2 + $0x98] sm:$0xff]
    %v1393 = vld [vmem:[#allocation6] sm:$0xff]
    %v1394 = vld [vmem:[#allocation6 + $0x8] sm:$0xff]
    %v1395 = vld [vmem:[#allocation6 + $0x10] sm:$0xff]
    %v1396 = vld [vmem:[#allocation6 + $0x18] sm:$0xff]
    %v1397 = vld [vmem:[#allocation6 + $0x20] sm:$0xff]
    %v1398 = vld [vmem:[#allocation6 + $0x28] sm:$0xff]
    %v1399 = vld [vmem:[#allocation6 + $0x30] sm:$0xff]
    %v1400 = vld [vmem:[#allocation6 + $0x38] sm:$0xff]
    %v1401 = vld [vmem:[#allocation6 + $0x40] sm:$0xff]
    %v1402 = vld [vmem:[#allocation6 + $0x48] sm:$0xff]
    %v1403 = vld [vmem:[#allocation6 + $0x50] sm:$0xff]
    %v1404 = vld [vmem:[#allocation6 + $0x58] sm:$0xff]
    %v1405 = vld [vmem:[#allocation6 + $0x60] sm:$0xff]
    %v1406 = vld [vmem:[#allocation6 + $0x68] sm:$0xff]
    %v1407 = vld [vmem:[#allocation6 + $0x70] sm:$0xff]
    %v1408 = vld [vmem:[#allocation6 + $0x78] sm:$0xff]
    %v1409 = vld [vmem:[#allocation6 + $0x80] sm:$0xff]
    %v1410 = vld [vmem:[#allocation6 + $0x88] sm:$0xff]
    %v1411 = vld [vmem:[#allocation6 + $0x90] sm:$0xff]
    %v1412 = vld [vmem:[#allocation6 + $0x98] sm:$0xff]
    %v1413 = vld [vmem:[#allocation6 + $0xa0] sm:$0xff]
    %v1414 = vld [vmem:[#allocation6 + $0xa8] sm:$0xff]
    %v1415 = vld [vmem:[#allocation6 + $0xb0] sm:$0xff]
    %v1416 = vld [vmem:[#allocation6 + $0xb8] sm:$0xff]
    %v1417 = vld [vmem:[#allocation6 + $0xc0] sm:$0xff]
    %v1418 = vld [vmem:[#allocation6 + $0xc8] sm:$0xff]
    %v1419 = vld [vmem:[#allocation6 + $0xd0] sm:$0xff]
    %v1420 = vld [vmem:[#allocation6 + $0xd8] sm:$0xff]
    %v1421 = vld [vmem:[#allocation6 + $0xe0] sm:$0xff]
    %v1422 = vld [vmem:[#allocation6 + $0xe8] sm:$0xff]
    %v1423 = vld [vmem:[#allocation6 + $0xf0] sm:$0xff]
    %v1424 = vld [vmem:[#allocation6 + $0xf8] sm:$0xff]
    %v1425 = vld [vmem:[#allocation6 + $0x100] sm:$0xff]
    %v1426 = vld [vmem:[#allocation6 + $0x108] sm:$0xff]
    %v1427 = vld [vmem:[#allocation6 + $0x110] sm:$0xff]
    %v1428 = vld [vmem:[#allocation6 + $0x118] sm:$0xff]
    %v1429 = vld [vmem:[#allocation6 + $0x120] sm:$0xff]
    %v1430 = vld [vmem:[#allocation6 + $0x128] sm:$0xff]
    %v1431 = vld [vmem:[#allocation6 + $0x130] sm:$0xff]
    %v1432 = vld [vmem:[#allocation6 + $0x138] sm:$0xff]
    %v1433 = vld [vmem:[#allocation6 + $0x140] sm:$0xff]
    %v1434 = vld [vmem:[#allocation6 + $0x148] sm:$0xff]
    %v1435 = vld [vmem:[#allocation6 + $0x150] sm:$0xff]
    %v1436 = vld [vmem:[#allocation6 + $0x158] sm:$0xff]
    %v1437 = vld [vmem:[#allocation6 + $0x160] sm:$0xff]
    %v1438 = vld [vmem:[#allocation6 + $0x168] sm:$0xff]
    %v1439 = vld [vmem:[#allocation6 + $0x170] sm:$0xff]
    %v1440 = vld [vmem:[#allocation6 + $0x178] sm:$0xff]
    %v1441 = vld [vmem:[#allocation6 + $0x180] sm:$0xff]
    %v1442 = vld [vmem:[#allocation6 + $0x188] sm:$0xff]
    %v1443 = vld [vmem:[#allocation6 + $0x190] sm:$0xff]
    %v1444 = vld [vmem:[#allocation6 + $0x198] sm:$0xff]
    %v1445 = vld [vmem:[#allocation6 + $0x1a0] sm:$0xff]
    %v1446 = vld [vmem:[#allocation6 + $0x1a8] sm:$0xff]
    %v1447 = vld [vmem:[#allocation6 + $0x1b0] sm:$0xff]
    %v1448 = vld [vmem:[#allocation6 + $0x1b8] sm:$0xff]
    %v1449 = vld [vmem:[#allocation6 + $0x1c0] sm:$0xff]
    %v1450 = vld [vmem:[#allocation6 + $0x1c8] sm:$0xff]
    %v1451 = vld [vmem:[#allocation6 + $0x1d0] sm:$0xff]
    %v1452 = vld [vmem:[#allocation6 + $0x1d8] sm:$0xff]
    %v1453 = vld [vmem:[#allocation6 + $0x1e0] sm:$0xff]
    %v1454 = vld [vmem:[#allocation6 + $0x1e8] sm:$0xff]
    %v1455 = vld [vmem:[#allocation6 + $0x1f0] sm:$0xff]
    %v1456 = vld [vmem:[#allocation6 + $0x1f8] sm:$0xff]
    %1457 = vmatprep.subr.mxu0 %v1454
    %1458 = vmatpush1.msra.mxu0 %v1453
    %1459 = vmatprep.subr.mxu0 %v1450
    %1460 = vmatpush1.msra.mxu0 %v1449
    %1461 = vmatprep.subr.mxu0 %v1446
    %1462 = vmatpush1.msra.mxu0 %v1445
    %1463 = vmatprep.subr.mxu0 %v1442
    %1464 = vmatpush1.msra.mxu0 %v1441
    %1465 = vmatprep.subr.mxu0 %v1438
    %1466 = vmatpush1.msra.mxu0 %v1437
    %1467 = vmatprep.subr.mxu0 %v1434
    %1468 = vmatpush1.msra.mxu0 %v1433
    %1469 = vmatprep.subr.mxu0 %v1430
    %1470 = vmatpush1.msra.mxu0 %v1429
    %1471 = vmatprep.subr.mxu0 %v1426
    %1472 = vmatpush1.msra.mxu0 %v1425
    %1473 = vmatprep.subr.mxu0 %v1422
    %1474 = vmatpush1.msra.mxu0 %v1421
    %1475 = vmatprep.subr.mxu0 %v1418
    %1476 = vmatpush1.msra.mxu0 %v1417
    %1477 = vmatprep.subr.mxu0 %v1414
    %1478 = vmatpush1.msra.mxu0 %v1413
    %1479 = vmatprep.subr.mxu0 %v1410
    %1480 = vmatpush1.msra.mxu0 %v1409
    %1481 = vmatprep.subr.mxu0 %v1406
    %1482 = vmatpush1.msra.mxu0 %v1405
    %1483 = vmatprep.subr.mxu0 %v1402
    %1484 = vmatpush1.msra.mxu0 %v1401
    %1485 = vmatprep.subr.mxu0 %v1398
    %1486 = vmatpush1.msra.mxu0 %v1397
    %1487 = vmatprep.subr.mxu0 %v1394
    %1488 = vmatpush1.msra.mxu0 %v1393
    %1489 = vmatprep.subr.mxu0 0.0
    %1490 = vmatpush2.msra.mxu0 0.0
    %1491 = vmatprep.subr.mxu0 0.0
    %1492 = vmatpush2.msra.mxu0 0.0
    %1493 = vmatprep.subr.mxu0 0.0
    %1494 = vmatpush2.msra.mxu0 0.0
    %1495 = vmatprep.subr.mxu0 0.0
    %1496 = vmatpush2.msra.mxu0 0.0
    %1497 = vmatprep.subr.mxu0 0.0
    %1498 = vmatpush2.msra.mxu0 0.0
    %1499 = vmatprep.subr.mxu0 0.0
    %1500 = vmatpush2.msra.mxu0 0.0
    %1501 = vmatprep.subr.mxu0 0.0
    %1502 = vmatpush2.msra.mxu0 0.0
    %1503 = vmatprep.subr.mxu0 0.0
    %1504 = vmatpush2.msra.mxu0 0.0
    %1505 = vmatprep.subr.mxu0 0.0
    %1506 = vmatpush2.msra.mxu0 0.0
    %1507 = vmatprep.subr.mxu0 0.0
    %1508 = vmatpush2.msra.mxu0 0.0
    %1509 = vmatprep.subr.mxu0 0.0
    %1510 = vmatpush2.msra.mxu0 0.0
    %1511 = vmatprep.subr.mxu0 0.0
    %1512 = vmatpush2.msra.mxu0 0.0
    %1513 = vmatprep.subr.mxu0 0.0
    %1514 = vmatpush2.msra.mxu0 0.0
    %1515 = vmatprep.subr.mxu0 0.0
    %1516 = vmatpush2.msra.mxu0 0.0
    %1517 = vmatprep.subr.mxu0 0.0
    %1518 = vmatpush2.msra.mxu0 0.0
    %1519 = vmatprep.subr.mxu0 0.0
    %1520 = vmatpush2.msra.mxu0 0.0
    %1521 = vmatprep.mubr.f32.mxu0 0.0
    %1522 = vmatmul.mubr.f32.gmra.mxu0 %v1387
    %v1523 = vpop.f32.mrf.mxu0
    %v1524 = vadd.f32 0.0, %v1523
    %v1525 = vpop.f32.mrf.mxu0
    %v1526 = vadd.f32 0.0, %v1525
    %1527 = vdwg.mxu0
    %1528 = vmatprep.subr.mxu0 %v1456
    %1529 = vmatpush1.msra.mxu0 %v1455
    %1530 = vmatprep.subr.mxu0 %v1452
    %1531 = vmatpush1.msra.mxu0 %v1451
    %1532 = vmatprep.subr.mxu0 %v1448
    %1533 = vmatpush1.msra.mxu0 %v1447
    %1534 = vmatprep.subr.mxu0 %v1444
    %1535 = vmatpush1.msra.mxu0 %v1443
    %1536 = vmatprep.subr.mxu0 %v1440
    %1537 = vmatpush1.msra.mxu0 %v1439
    %1538 = vmatprep.subr.mxu0 %v1436
    %1539 = vmatpush1.msra.mxu0 %v1435
    %1540 = vmatprep.subr.mxu0 %v1432
    %1541 = vmatpush1.msra.mxu0 %v1431
    %1542 = vmatprep.subr.mxu0 %v1428
    %1543 = vmatpush1.msra.mxu0 %v1427
    %1544 = vmatprep.subr.mxu0 %v1424
    %1545 = vmatpush1.msra.mxu0 %v1423
    %1546 = vmatprep.subr.mxu0 %v1420
    %1547 = vmatpush1.msra.mxu0 %v1419
    %1548 = vmatprep.subr.mxu0 %v1416
    %1549 = vmatpush1.msra.mxu0 %v1415
    %1550 = vmatprep.subr.mxu0 %v1412
    %1551 = vmatpush1.msra.mxu0 %v1411
    %1552 = vmatprep.subr.mxu0 %v1408
    %1553 = vmatpush1.msra.mxu0 %v1407
    %1554 = vmatprep.subr.mxu0 %v1404
    %1555 = vmatpush1.msra.mxu0 %v1403
    %1556 = vmatprep.subr.mxu0 %v1400
    %1557 = vmatpush1.msra.mxu0 %v1399
    %1558 = vmatprep.subr.mxu0 %v1396
    %1559 = vmatpush1.msra.mxu0 %v1395
    %1560 = vmatprep.subr.mxu0 0.0
    %1561 = vmatpush2.msra.mxu0 0.0
    %1562 = vmatprep.subr.mxu0 0.0
    %1563 = vmatpush2.msra.mxu0 0.0
    %1564 = vmatprep.subr.mxu0 0.0
    %1565 = vmatpush2.msra.mxu0 0.0
    %1566 = vmatprep.subr.mxu0 0.0
    %1567 = vmatpush2.msra.mxu0 0.0
    %1568 = vmatprep.subr.mxu0 0.0
    %1569 = vmatpush2.msra.mxu0 0.0
    %1570 = vmatprep.subr.mxu0 0.0
    %1571 = vmatpush2.msra.mxu0 0.0
    %1572 = vmatprep.subr.mxu0 0.0
    %1573 = vmatpush2.msra.mxu0 0.0
    %1574 = vmatprep.subr.mxu0 0.0
    %1575 = vmatpush2.msra.mxu0 0.0
    %1576 = vmatprep.subr.mxu0 0.0
    %1577 = vmatpush2.msra.mxu0 0.0
    %1578 = vmatprep.subr.mxu0 0.0
    %1579 = vmatpush2.msra.mxu0 0.0
    %1580 = vmatprep.subr.mxu0 0.0
    %1581 = vmatpush2.msra.mxu0 0.0
    %1582 = vmatprep.subr.mxu0 0.0
    %1583 = vmatpush2.msra.mxu0 0.0
    %1584 = vmatprep.subr.mxu0 0.0
    %1585 = vmatpush2.msra.mxu0 0.0
    %1586 = vmatprep.subr.mxu0 0.0
    %1587 = vmatpush2.msra.mxu0 0.0
    %1588 = vmatprep.subr.mxu0 0.0
    %1589 = vmatpush2.msra.mxu0 0.0
    %1590 = vmatprep.subr.mxu0 0.0
    %1591 = vmatpush2.msra.mxu0 0.0
    %1592 = vmatprep.mubr.f32.mxu0 0.0
    %1593 = vmatmul.mubr.f32.gmra.mxu0 %v1387
    %v1594 = vpop.f32.mrf.mxu0
    %v1595 = vadd.f32 0.0, %v1594
    %v1596 = vpop.f32.mrf.mxu0
    %v1597 = vadd.f32 0.0, %v1596
    %1598 = vdwg.mxu0
    %v1599 = vadd.f32 %v1389, %v1524
    %v1600 = vadd.f32 %v1390, %v1526
    %v1601 = vadd.f32 %v1391, %v1595
    %v1602 = vadd.f32 %v1392, %v1597
    %v1603 = vxor.u32 %v1599, 2147483648
    %v1604 = vmul.f32 %v1603, 1.442695
    %v1605 = vpow.pop %v1604
    %v1606 = vadd.f32 %v1605, 1.0
    %v1607 = vrcp.pop %v1606
    %v1608 = vmul.f32 1.0, %v1607
    %v1609 = vxor.u32 %v1600, 2147483648
    %v1610 = vmul.f32 %v1609, 1.442695
    %v1611 = vpow.pop %v1610
    %v1612 = vadd.f32 %v1611, 1.0
    %v1613 = vrcp.pop %v1612
    %v1614 = vmul.f32 1.0, %v1613
    %v1615 = vtanh.pop %v1601
    %v1616 = vxor.u32 %v1602, 2147483648
    %v1617 = vmul.f32 %v1616, 1.442695
    %v1618 = vpow.pop %v1617
    %v1619 = vadd.f32 %v1618, 1.0
    %v1620 = vrcp.pop %v1619
    %v1621 = vmul.f32 1.0, %v1620
    %v1622 = vmul.f32 %v1614, %v1385
    %v1623 = vmul.f32 %v1608, %v1615
    %v1624 = vadd.f32 %v1622, %v1623
    %v1625 = vtanh.pop %v1624
    %v1626 = vmul.f32 %v1621, %v1625
    %1627 = vst [vmem:[#allocation3 + $0x20] sm:$0xff] %v1626
    %v1628 = vld [vmem:[#allocation2 + $0xa0] sm:$0xff]
    %v1629 = vld [vmem:[#allocation2 + $0xa8] sm:$0xff]
    %v1630 = vld [vmem:[#allocation2 + $0xb0] sm:$0xff]
    %v1631 = vld [vmem:[#allocation2 + $0xb8] sm:$0xff]
    %v1632 = vld [vmem:[#allocation6] sm:$0xff]
    %v1633 = vld [vmem:[#allocation6 + $0x8] sm:$0xff]
    %v1634 = vld [vmem:[#allocation6 + $0x10] sm:$0xff]
    %v1635 = vld [vmem:[#allocation6 + $0x18] sm:$0xff]
    %v1636 = vld [vmem:[#allocation6 + $0x20] sm:$0xff]
    %v1637 = vld [vmem:[#allocation6 + $0x28] sm:$0xff]
    %v1638 = vld [vmem:[#allocation6 + $0x30] sm:$0xff]
    %v1639 = vld [vmem:[#allocation6 + $0x38] sm:$0xff]
    %v1640 = vld [vmem:[#allocation6 + $0x40] sm:$0xff]
    %v1641 = vld [vmem:[#allocation6 + $0x48] sm:$0xff]
    %v1642 = vld [vmem:[#allocation6 + $0x50] sm:$0xff]
    %v1643 = vld [vmem:[#allocation6 + $0x58] sm:$0xff]
    %v1644 = vld [vmem:[#allocation6 + $0x60] sm:$0xff]
    %v1645 = vld [vmem:[#allocation6 + $0x68] sm:$0xff]
    %v1646 = vld [vmem:[#allocation6 + $0x70] sm:$0xff]
    %v1647 = vld [vmem:[#allocation6 + $0x78] sm:$0xff]
    %v1648 = vld [vmem:[#allocation6 + $0x80] sm:$0xff]
    %v1649 = vld [vmem:[#allocation6 + $0x88] sm:$0xff]
    %v1650 = vld [vmem:[#allocation6 + $0x90] sm:$0xff]
    %v1651 = vld [vmem:[#allocation6 + $0x98] sm:$0xff]
    %v1652 = vld [vmem:[#allocation6 + $0xa0] sm:$0xff]
    %v1653 = vld [vmem:[#allocation6 + $0xa8] sm:$0xff]
    %v1654 = vld [vmem:[#allocation6 + $0xb0] sm:$0xff]
    %v1655 = vld [vmem:[#allocation6 + $0xb8] sm:$0xff]
    %v1656 = vld [vmem:[#allocation6 + $0xc0] sm:$0xff]
    %v1657 = vld [vmem:[#allocation6 + $0xc8] sm:$0xff]
    %v1658 = vld [vmem:[#allocation6 + $0xd0] sm:$0xff]
    %v1659 = vld [vmem:[#allocation6 + $0xd8] sm:$0xff]
    %v1660 = vld [vmem:[#allocation6 + $0xe0] sm:$0xff]
    %v1661 = vld [vmem:[#allocation6 + $0xe8] sm:$0xff]
    %v1662 = vld [vmem:[#allocation6 + $0xf0] sm:$0xff]
    %v1663 = vld [vmem:[#allocation6 + $0xf8] sm:$0xff]
    %v1664 = vld [vmem:[#allocation6 + $0x100] sm:$0xff]
    %v1665 = vld [vmem:[#allocation6 + $0x108] sm:$0xff]
    %v1666 = vld [vmem:[#allocation6 + $0x110] sm:$0xff]
    %v1667 = vld [vmem:[#allocation6 + $0x118] sm:$0xff]
    %v1668 = vld [vmem:[#allocation6 + $0x120] sm:$0xff]
    %v1669 = vld [vmem:[#allocation6 + $0x128] sm:$0xff]
    %v1670 = vld [vmem:[#allocation6 + $0x130] sm:$0xff]
    %v1671 = vld [vmem:[#allocation6 + $0x138] sm:$0xff]
    %v1672 = vld [vmem:[#allocation6 + $0x140] sm:$0xff]
    %v1673 = vld [vmem:[#allocation6 + $0x148] sm:$0xff]
    %v1674 = vld [vmem:[#allocation6 + $0x150] sm:$0xff]
    %v1675 = vld [vmem:[#allocation6 + $0x158] sm:$0xff]
    %v1676 = vld [vmem:[#allocation6 + $0x160] sm:$0xff]
    %v1677 = vld [vmem:[#allocation6 + $0x168] sm:$0xff]
    %v1678 = vld [vmem:[#allocation6 + $0x170] sm:$0xff]
    %v1679 = vld [vmem:[#allocation6 + $0x178] sm:$0xff]
    %v1680 = vld [vmem:[#allocation6 + $0x180] sm:$0xff]
    %v1681 = vld [vmem:[#allocation6 + $0x188] sm:$0xff]
    %v1682 = vld [vmem:[#allocation6 + $0x190] sm:$0xff]
    %v1683 = vld [vmem:[#allocation6 + $0x198] sm:$0xff]
    %v1684 = vld [vmem:[#allocation6 + $0x1a0] sm:$0xff]
    %v1685 = vld [vmem:[#allocation6 + $0x1a8] sm:$0xff]
    %v1686 = vld [vmem:[#allocation6 + $0x1b0] sm:$0xff]
    %v1687 = vld [vmem:[#allocation6 + $0x1b8] sm:$0xff]
    %v1688 = vld [vmem:[#allocation6 + $0x1c0] sm:$0xff]
    %v1689 = vld [vmem:[#allocation6 + $0x1c8] sm:$0xff]
    %v1690 = vld [vmem:[#allocation6 + $0x1d0] sm:$0xff]
    %v1691 = vld [vmem:[#allocation6 + $0x1d8] sm:$0xff]
    %v1692 = vld [vmem:[#allocation6 + $0x1e0] sm:$0xff]
    %v1693 = vld [vmem:[#allocation6 + $0x1e8] sm:$0xff]
    %v1694 = vld [vmem:[#allocation6 + $0x1f0] sm:$0xff]
    %v1695 = vld [vmem:[#allocation6 + $0x1f8] sm:$0xff]
    %1696 = vmatprep.subr.mxu0 %v1693
    %1697 = vmatpush1.msra.mxu0 %v1692
    %1698 = vmatprep.subr.mxu0 %v1689
    %1699 = vmatpush1.msra.mxu0 %v1688
    %1700 = vmatprep.subr.mxu0 %v1685
    %1701 = vmatpush1.msra.mxu0 %v1684
    %1702 = vmatprep.subr.mxu0 %v1681
    %1703 = vmatpush1.msra.mxu0 %v1680
    %1704 = vmatprep.subr.mxu0 %v1677
    %1705 = vmatpush1.msra.mxu0 %v1676
    %1706 = vmatprep.subr.mxu0 %v1673
    %1707 = vmatpush1.msra.mxu0 %v1672
    %1708 = vmatprep.subr.mxu0 %v1669
    %1709 = vmatpush1.msra.mxu0 %v1668
    %1710 = vmatprep.subr.mxu0 %v1665
    %1711 = vmatpush1.msra.mxu0 %v1664
    %1712 = vmatprep.subr.mxu0 %v1661
    %1713 = vmatpush1.msra.mxu0 %v1660
    %1714 = vmatprep.subr.mxu0 %v1657
    %1715 = vmatpush1.msra.mxu0 %v1656
    %1716 = vmatprep.subr.mxu0 %v1653
    %1717 = vmatpush1.msra.mxu0 %v1652
    %1718 = vmatprep.subr.mxu0 %v1649
    %1719 = vmatpush1.msra.mxu0 %v1648
    %1720 = vmatprep.subr.mxu0 %v1645
    %1721 = vmatpush1.msra.mxu0 %v1644
    %1722 = vmatprep.subr.mxu0 %v1641
    %1723 = vmatpush1.msra.mxu0 %v1640
    %1724 = vmatprep.subr.mxu0 %v1637
    %1725 = vmatpush1.msra.mxu0 %v1636
    %1726 = vmatprep.subr.mxu0 %v1633
    %1727 = vmatpush1.msra.mxu0 %v1632
    %1728 = vmatprep.subr.mxu0 0.0
    %1729 = vmatpush2.msra.mxu0 0.0
    %1730 = vmatprep.subr.mxu0 0.0
    %1731 = vmatpush2.msra.mxu0 0.0
    %1732 = vmatprep.subr.mxu0 0.0
    %1733 = vmatpush2.msra.mxu0 0.0
    %1734 = vmatprep.subr.mxu0 0.0
    %1735 = vmatpush2.msra.mxu0 0.0
    %1736 = vmatprep.subr.mxu0 0.0
    %1737 = vmatpush2.msra.mxu0 0.0
    %1738 = vmatprep.subr.mxu0 0.0
    %1739 = vmatpush2.msra.mxu0 0.0
    %1740 = vmatprep.subr.mxu0 0.0
    %1741 = vmatpush2.msra.mxu0 0.0
    %1742 = vmatprep.subr.mxu0 0.0
    %1743 = vmatpush2.msra.mxu0 0.0
    %1744 = vmatprep.subr.mxu0 0.0
    %1745 = vmatpush2.msra.mxu0 0.0
    %1746 = vmatprep.subr.mxu0 0.0
    %1747 = vmatpush2.msra.mxu0 0.0
    %1748 = vmatprep.subr.mxu0 0.0
    %1749 = vmatpush2.msra.mxu0 0.0
    %1750 = vmatprep.subr.mxu0 0.0
    %1751 = vmatpush2.msra.mxu0 0.0
    %1752 = vmatprep.subr.mxu0 0.0
    %1753 = vmatpush2.msra.mxu0 0.0
    %1754 = vmatprep.subr.mxu0 0.0
    %1755 = vmatpush2.msra.mxu0 0.0
    %1756 = vmatprep.subr.mxu0 0.0
    %1757 = vmatpush2.msra.mxu0 0.0
    %1758 = vmatprep.subr.mxu0 0.0
    %1759 = vmatpush2.msra.mxu0 0.0
    %1760 = vmatprep.mubr.f32.mxu0 0.0
    %1761 = vmatmul.mubr.f32.gmra.mxu0 %v1626
    %v1762 = vpop.f32.mrf.mxu0
    %v1763 = vadd.f32 0.0, %v1762
    %v1764 = vpop.f32.mrf.mxu0
    %v1765 = vadd.f32 0.0, %v1764
    %1766 = vdwg.mxu0
    %1767 = vmatprep.subr.mxu0 %v1695
    %1768 = vmatpush1.msra.mxu0 %v1694
    %1769 = vmatprep.subr.mxu0 %v1691
    %1770 = vmatpush1.msra.mxu0 %v1690
    %1771 = vmatprep.subr.mxu0 %v1687
    %1772 = vmatpush1.msra.mxu0 %v1686
    %1773 = vmatprep.subr.mxu0 %v1683
    %1774 = vmatpush1.msra.mxu0 %v1682
    %1775 = vmatprep.subr.mxu0 %v1679
    %1776 = vmatpush1.msra.mxu0 %v1678
    %1777 = vmatprep.subr.mxu0 %v1675
    %1778 = vmatpush1.msra.mxu0 %v1674
    %1779 = vmatprep.subr.mxu0 %v1671
    %1780 = vmatpush1.msra.mxu0 %v1670
    %1781 = vmatprep.subr.mxu0 %v1667
    %1782 = vmatpush1.msra.mxu0 %v1666
    %1783 = vmatprep.subr.mxu0 %v1663
    %1784 = vmatpush1.msra.mxu0 %v1662
    %1785 = vmatprep.subr.mxu0 %v1659
    %1786 = vmatpush1.msra.mxu0 %v1658
    %1787 = vmatprep.subr.mxu0 %v1655
    %1788 = vmatpush1.msra.mxu0 %v1654
    %1789 = vmatprep.subr.mxu0 %v1651
    %1790 = vmatpush1.msra.mxu0 %v1650
    %1791 = vmatprep.subr.mxu0 %v1647
    %1792 = vmatpush1.msra.mxu0 %v1646
    %1793 = vmatprep.subr.mxu0 %v1643
    %1794 = vmatpush1.msra.mxu0 %v1642
    %1795 = vmatprep.subr.mxu0 %v1639
    %1796 = vmatpush1.msra.mxu0 %v1638
    %1797 = vmatprep.subr.mxu0 %v1635
    %1798 = vmatpush1.msra.mxu0 %v1634
    %1799 = vmatprep.subr.mxu0 0.0
    %1800 = vmatpush2.msra.mxu0 0.0
    %1801 = vmatprep.subr.mxu0 0.0
    %1802 = vmatpush2.msra.mxu0 0.0
    %1803 = vmatprep.subr.mxu0 0.0
    %1804 = vmatpush2.msra.mxu0 0.0
    %1805 = vmatprep.subr.mxu0 0.0
    %1806 = vmatpush2.msra.mxu0 0.0
    %1807 = vmatprep.subr.mxu0 0.0
    %1808 = vmatpush2.msra.mxu0 0.0
    %1809 = vmatprep.subr.mxu0 0.0
    %1810 = vmatpush2.msra.mxu0 0.0
    %1811 = vmatprep.subr.mxu0 0.0
    %1812 = vmatpush2.msra.mxu0 0.0
    %1813 = vmatprep.subr.mxu0 0.0
    %1814 = vmatpush2.msra.mxu0 0.0
    %1815 = vmatprep.subr.mxu0 0.0
    %1816 = vmatpush2.msra.mxu0 0.0
    %1817 = vmatprep.subr.mxu0 0.0
    %1818 = vmatpush2.msra.mxu0 0.0
    %1819 = vmatprep.subr.mxu0 0.0
    %1820 = vmatpush2.msra.mxu0 0.0
    %1821 = vmatprep.subr.mxu0 0.0
    %1822 = vmatpush2.msra.mxu0 0.0
    %1823 = vmatprep.subr.mxu0 0.0
    %1824 = vmatpush2.msra.mxu0 0.0
    %1825 = vmatprep.subr.mxu0 0.0
    %1826 = vmatpush2.msra.mxu0 0.0
    %1827 = vmatprep.subr.mxu0 0.0
    %1828 = vmatpush2.msra.mxu0 0.0
    %1829 = vmatprep.subr.mxu0 0.0
    %1830 = vmatpush2.msra.mxu0 0.0
    %1831 = vmatprep.mubr.f32.mxu0 0.0
    %1832 = vmatmul.mubr.f32.gmra.mxu0 %v1626
    %v1833 = vpop.f32.mrf.mxu0
    %v1834 = vadd.f32 0.0, %v1833
    %v1835 = vpop.f32.mrf.mxu0
    %v1836 = vadd.f32 0.0, %v1835
    %1837 = vdwg.mxu0
    %v1838 = vadd.f32 %v1628, %v1763
    %v1839 = vadd.f32 %v1629, %v1765
    %v1840 = vadd.f32 %v1630, %v1834
    %v1841 = vadd.f32 %v1631, %v1836
    %v1842 = vxor.u32 %v1838, 2147483648
    %v1843 = vmul.f32 %v1842, 1.442695
    %v1844 = vpow.pop %v1843
    %v1845 = vadd.f32 %v1844, 1.0
    %v1846 = vrcp.pop %v1845
    %v1847 = vmul.f32 1.0, %v1846
    %v1848 = vxor.u32 %v1839, 2147483648
    %v1849 = vmul.f32 %v1848, 1.442695
    %v1850 = vpow.pop %v1849
    %v1851 = vadd.f32 %v1850, 1.0
    %v1852 = vrcp.pop %v1851
    %v1853 = vmul.f32 1.0, %v1852
    %v1854 = vtanh.pop %v1840
    %v1855 = vxor.u32 %v1841, 2147483648
    %v1856 = vmul.f32 %v1855, 1.442695
    %v1857 = vpow.pop %v1856
    %v1858 = vadd.f32 %v1857, 1.0
    %v1859 = vrcp.pop %v1858
    %v1860 = vmul.f32 1.0, %v1859
    %v1861 = vmul.f32 %v1853, %v1624
    %v1862 = vmul.f32 %v1847, %v1854
    %v1863 = vadd.f32 %v1861, %v1862
    %v1864 = vtanh.pop %v1863
    %v1865 = vmul.f32 %v1860, %v1864
    %1866 = vst [vmem:[#allocation3 + $0x28] sm:$0xff] %v1865
    %v1867 = vld [vmem:[#allocation2 + $0xc0] sm:$0xff]
    %v1868 = vld [vmem:[#allocation2 + $0xc8] sm:$0xff]
    %v1869 = vld [vmem:[#allocation2 + $0xd0] sm:$0xff]
    %v1870 = vld [vmem:[#allocation2 + $0xd8] sm:$0xff]
    %v1871 = vld [vmem:[#allocation6] sm:$0xff]
    %v1872 = vld [vmem:[#allocation6 + $0x8] sm:$0xff]
    %v1873 = vld [vmem:[#allocation6 + $0x10] sm:$0xff]
    %v1874 = vld [vmem:[#allocation6 + $0x18] sm:$0xff]
    %v1875 = vld [vmem:[#allocation6 + $0x20] sm:$0xff]
    %v1876 = vld [vmem:[#allocation6 + $0x28] sm:$0xff]
    %v1877 = vld [vmem:[#allocation6 + $0x30] sm:$0xff]
    %v1878 = vld [vmem:[#allocation6 + $0x38] sm:$0xff]
    %v1879 = vld [vmem:[#allocation6 + $0x40] sm:$0xff]
    %v1880 = vld [vmem:[#allocation6 + $0x48] sm:$0xff]
    %v1881 = vld [vmem:[#allocation6 + $0x50] sm:$0xff]
    %v1882 = vld [vmem:[#allocation6 + $0x58] sm:$0xff]
    %v1883 = vld [vmem:[#allocation6 + $0x60] sm:$0xff]
    %v1884 = vld [vmem:[#allocation6 + $0x68] sm:$0xff]
    %v1885 = vld [vmem:[#allocation6 + $0x70] sm:$0xff]
    %v1886 = vld [vmem:[#allocation6 + $0x78] sm:$0xff]
    %v1887 = vld [vmem:[#allocation6 + $0x80] sm:$0xff]
    %v1888 = vld [vmem:[#allocation6 + $0x88] sm:$0xff]
    %v1889 = vld [vmem:[#allocation6 + $0x90] sm:$0xff]
    %v1890 = vld [vmem:[#allocation6 + $0x98] sm:$0xff]
    %v1891 = vld [vmem:[#allocation6 + $0xa0] sm:$0xff]
    %v1892 = vld [vmem:[#allocation6 + $0xa8] sm:$0xff]
    %v1893 = vld [vmem:[#allocation6 + $0xb0] sm:$0xff]
    %v1894 = vld [vmem:[#allocation6 + $0xb8] sm:$0xff]
    %v1895 = vld [vmem:[#allocation6 + $0xc0] sm:$0xff]
    %v1896 = vld [vmem:[#allocation6 + $0xc8] sm:$0xff]
    %v1897 = vld [vmem:[#allocation6 + $0xd0] sm:$0xff]
    %v1898 = vld [vmem:[#allocation6 + $0xd8] sm:$0xff]
    %v1899 = vld [vmem:[#allocation6 + $0xe0] sm:$0xff]
    %v1900 = vld [vmem:[#allocation6 + $0xe8] sm:$0xff]
    %v1901 = vld [vmem:[#allocation6 + $0xf0] sm:$0xff]
    %v1902 = vld [vmem:[#allocation6 + $0xf8] sm:$0xff]
    %v1903 = vld [vmem:[#allocation6 + $0x100] sm:$0xff]
    %v1904 = vld [vmem:[#allocation6 + $0x108] sm:$0xff]
    %v1905 = vld [vmem:[#allocation6 + $0x110] sm:$0xff]
    %v1906 = vld [vmem:[#allocation6 + $0x118] sm:$0xff]
    %v1907 = vld [vmem:[#allocation6 + $0x120] sm:$0xff]
    %v1908 = vld [vmem:[#allocation6 + $0x128] sm:$0xff]
    %v1909 = vld [vmem:[#allocation6 + $0x130] sm:$0xff]
    %v1910 = vld [vmem:[#allocation6 + $0x138] sm:$0xff]
    %v1911 = vld [vmem:[#allocation6 + $0x140] sm:$0xff]
    %v1912 = vld [vmem:[#allocation6 + $0x148] sm:$0xff]
    %v1913 = vld [vmem:[#allocation6 + $0x150] sm:$0xff]
    %v1914 = vld [vmem:[#allocation6 + $0x158] sm:$0xff]
    %v1915 = vld [vmem:[#allocation6 + $0x160] sm:$0xff]
    %v1916 = vld [vmem:[#allocation6 + $0x168] sm:$0xff]
    %v1917 = vld [vmem:[#allocation6 + $0x170] sm:$0xff]
    %v1918 = vld [vmem:[#allocation6 + $0x178] sm:$0xff]
    %v1919 = vld [vmem:[#allocation6 + $0x180] sm:$0xff]
    %v1920 = vld [vmem:[#allocation6 + $0x188] sm:$0xff]
    %v1921 = vld [vmem:[#allocation6 + $0x190] sm:$0xff]
    %v1922 = vld [vmem:[#allocation6 + $0x198] sm:$0xff]
    %v1923 = vld [vmem:[#allocation6 + $0x1a0] sm:$0xff]
    %v1924 = vld [vmem:[#allocation6 + $0x1a8] sm:$0xff]
    %v1925 = vld [vmem:[#allocation6 + $0x1b0] sm:$0xff]
    %v1926 = vld [vmem:[#allocation6 + $0x1b8] sm:$0xff]
    %v1927 = vld [vmem:[#allocation6 + $0x1c0] sm:$0xff]
    %v1928 = vld [vmem:[#allocation6 + $0x1c8] sm:$0xff]
    %v1929 = vld [vmem:[#allocation6 + $0x1d0] sm:$0xff]
    %v1930 = vld [vmem:[#allocation6 + $0x1d8] sm:$0xff]
    %v1931 = vld [vmem:[#allocation6 + $0x1e0] sm:$0xff]
    %v1932 = vld [vmem:[#allocation6 + $0x1e8] sm:$0xff]
    %v1933 = vld [vmem:[#allocation6 + $0x1f0] sm:$0xff]
    %v1934 = vld [vmem:[#allocation6 + $0x1f8] sm:$0xff]
    %1935 = vmatprep.subr.mxu0 %v1932
    %1936 = vmatpush1.msra.mxu0 %v1931
    %1937 = vmatprep.subr.mxu0 %v1928
    %1938 = vmatpush1.msra.mxu0 %v1927
    %1939 = vmatprep.subr.mxu0 %v1924
    %1940 = vmatpush1.msra.mxu0 %v1923
    %1941 = vmatprep.subr.mxu0 %v1920
    %1942 = vmatpush1.msra.mxu0 %v1919
    %1943 = vmatprep.subr.mxu0 %v1916
    %1944 = vmatpush1.msra.mxu0 %v1915
    %1945 = vmatprep.subr.mxu0 %v1912
    %1946 = vmatpush1.msra.mxu0 %v1911
    %1947 = vmatprep.subr.mxu0 %v1908
    %1948 = vmatpush1.msra.mxu0 %v1907
    %1949 = vmatprep.subr.mxu0 %v1904
    %1950 = vmatpush1.msra.mxu0 %v1903
    %1951 = vmatprep.subr.mxu0 %v1900
    %1952 = vmatpush1.msra.mxu0 %v1899
    %1953 = vmatprep.subr.mxu0 %v1896
    %1954 = vmatpush1.msra.mxu0 %v1895
    %1955 = vmatprep.subr.mxu0 %v1892
    %1956 = vmatpush1.msra.mxu0 %v1891
    %1957 = vmatprep.subr.mxu0 %v1888
    %1958 = vmatpush1.msra.mxu0 %v1887
    %1959 = vmatprep.subr.mxu0 %v1884
    %1960 = vmatpush1.msra.mxu0 %v1883
    %1961 = vmatprep.subr.mxu0 %v1880
    %1962 = vmatpush1.msra.mxu0 %v1879
    %1963 = vmatprep.subr.mxu0 %v1876
    %1964 = vmatpush1.msra.mxu0 %v1875
    %1965 = vmatprep.subr.mxu0 %v1872
    %1966 = vmatpush1.msra.mxu0 %v1871
    %1967 = vmatprep.subr.mxu0 0.0
    %1968 = vmatpush2.msra.mxu0 0.0
    %1969 = vmatprep.subr.mxu0 0.0
    %1970 = vmatpush2.msra.mxu0 0.0
    %1971 = vmatprep.subr.mxu0 0.0
    %1972 = vmatpush2.msra.mxu0 0.0
    %1973 = vmatprep.subr.mxu0 0.0
    %1974 = vmatpush2.msra.mxu0 0.0
    %1975 = vmatprep.subr.mxu0 0.0
    %1976 = vmatpush2.msra.mxu0 0.0
    %1977 = vmatprep.subr.mxu0 0.0
    %1978 = vmatpush2.msra.mxu0 0.0
    %1979 = vmatprep.subr.mxu0 0.0
    %1980 = vmatpush2.msra.mxu0 0.0
    %1981 = vmatprep.subr.mxu0 0.0
    %1982 = vmatpush2.msra.mxu0 0.0
    %1983 = vmatprep.subr.mxu0 0.0
    %1984 = vmatpush2.msra.mxu0 0.0
    %1985 = vmatprep.subr.mxu0 0.0
    %1986 = vmatpush2.msra.mxu0 0.0
    %1987 = vmatprep.subr.mxu0 0.0
    %1988 = vmatpush2.msra.mxu0 0.0
    %1989 = vmatprep.subr.mxu0 0.0
    %1990 = vmatpush2.msra.mxu0 0.0
    %1991 = vmatprep.subr.mxu0 0.0
    %1992 = vmatpush2.msra.mxu0 0.0
    %1993 = vmatprep.subr.mxu0 0.0
    %1994 = vmatpush2.msra.mxu0 0.0
    %1995 = vmatprep.subr.mxu0 0.0
    %1996 = vmatpush2.msra.mxu0 0.0
    %1997 = vmatprep.subr.mxu0 0.0
    %1998 = vmatpush2.msra.mxu0 0.0
    %1999 = vmatprep.mubr.f32.mxu0 0.0
    %2000 = vmatmul.mubr.f32.gmra.mxu0 %v1865
    %v2001 = vpop.f32.mrf.mxu0
    %v2002 = vadd.f32 0.0, %v2001
    %v2003 = vpop.f32.mrf.mxu0
    %v2004 = vadd.f32 0.0, %v2003
    %2005 = vdwg.mxu0
    %2006 = vmatprep.subr.mxu0 %v1934
    %2007 = vmatpush1.msra.mxu0 %v1933
    %2008 = vmatprep.subr.mxu0 %v1930
    %2009 = vmatpush1.msra.mxu0 %v1929
    %2010 = vmatprep.subr.mxu0 %v1926
    %2011 = vmatpush1.msra.mxu0 %v1925
    %2012 = vmatprep.subr.mxu0 %v1922
    %2013 = vmatpush1.msra.mxu0 %v1921
    %2014 = vmatprep.subr.mxu0 %v1918
    %2015 = vmatpush1.msra.mxu0 %v1917
    %2016 = vmatprep.subr.mxu0 %v1914
    %2017 = vmatpush1.msra.mxu0 %v1913
    %2018 = vmatprep.subr.mxu0 %v1910
    %2019 = vmatpush1.msra.mxu0 %v1909
    %2020 = vmatprep.subr.mxu0 %v1906
    %2021 = vmatpush1.msra.mxu0 %v1905
    %2022 = vmatprep.subr.mxu0 %v1902
    %2023 = vmatpush1.msra.mxu0 %v1901
    %2024 = vmatprep.subr.mxu0 %v1898
    %2025 = vmatpush1.msra.mxu0 %v1897
    %2026 = vmatprep.subr.mxu0 %v1894
    %2027 = vmatpush1.msra.mxu0 %v1893
    %2028 = vmatprep.subr.mxu0 %v1890
    %2029 = vmatpush1.msra.mxu0 %v1889
    %2030 = vmatprep.subr.mxu0 %v1886
    %2031 = vmatpush1.msra.mxu0 %v1885
    %2032 = vmatprep.subr.mxu0 %v1882
    %2033 = vmatpush1.msra.mxu0 %v1881
    %2034 = vmatprep.subr.mxu0 %v1878
    %2035 = vmatpush1.msra.mxu0 %v1877
    %2036 = vmatprep.subr.mxu0 %v1874
    %2037 = vmatpush1.msra.mxu0 %v1873
    %2038 = vmatprep.subr.mxu0 0.0
    %2039 = vmatpush2.msra.mxu0 0.0
    %2040 = vmatprep.subr.mxu0 0.0
    %2041 = vmatpush2.msra.mxu0 0.0
    %2042 = vmatprep.subr.mxu0 0.0
    %2043 = vmatpush2.msra.mxu0 0.0
    %2044 = vmatprep.subr.mxu0 0.0
    %2045 = vmatpush2.msra.mxu0 0.0
    %2046 = vmatprep.subr.mxu0 0.0
    %2047 = vmatpush2.msra.mxu0 0.0
    %2048 = vmatprep.subr.mxu0 0.0
    %2049 = vmatpush2.msra.mxu0 0.0
    %2050 = vmatprep.subr.mxu0 0.0
    %2051 = vmatpush2.msra.mxu0 0.0
    %2052 = vmatprep.subr.mxu0 0.0
    %2053 = vmatpush2.msra.mxu0 0.0
    %2054 = vmatprep.subr.mxu0 0.0
    %2055 = vmatpush2.msra.mxu0 0.0
    %2056 = vmatprep.subr.mxu0 0.0
    %2057 = vmatpush2.msra.mxu0 0.0
    %2058 = vmatprep.subr.mxu0 0.0
    %2059 = vmatpush2.msra.mxu0 0.0
    %2060 = vmatprep.subr.mxu0 0.0
    %2061 = vmatpush2.msra.mxu0 0.0
    %2062 = vmatprep.subr.mxu0 0.0
    %2063 = vmatpush2.msra.mxu0 0.0
    %2064 = vmatprep.subr.mxu0 0.0
    %2065 = vmatpush2.msra.mxu0 0.0
    %2066 = vmatprep.subr.mxu0 0.0
    %2067 = vmatpush2.msra.mxu0 0.0
    %2068 = vmatprep.subr.mxu0 0.0
    %2069 = vmatpush2.msra.mxu0 0.0
    %2070 = vmatprep.mubr.f32.mxu0 0.0
    %2071 = vmatmul.mubr.f32.gmra.mxu0 %v1865
    %v2072 = vpop.f32.mrf.mxu0
    %v2073 = vadd.f32 0.0, %v2072
    %v2074 = vpop.f32.mrf.mxu0
    %v2075 = vadd.f32 0.0, %v2074
    %2076 = vdwg.mxu0
    %v2077 = vadd.f32 %v1867, %v2002
    %v2078 = vadd.f32 %v1868, %v2004
    %v2079 = vadd.f32 %v1869, %v2073
    %v2080 = vadd.f32 %v1870, %v2075
    %v2081 = vxor.u32 %v2077, 2147483648
    %v2082 = vmul.f32 %v2081, 1.442695
    %v2083 = vpow.pop %v2082
    %v2084 = vadd.f32 %v2083, 1.0
    %v2085 = vrcp.pop %v2084
    %v2086 = vmul.f32 1.0, %v2085
    %v2087 = vxor.u32 %v2078, 2147483648
    %v2088 = vmul.f32 %v2087, 1.442695
    %v2089 = vpow.pop %v2088
    %v2090 = vadd.f32 %v2089, 1.0
    %v2091 = vrcp.pop %v2090
    %v2092 = vmul.f32 1.0, %v2091
    %v2093 = vtanh.pop %v2079
    %v2094 = vxor.u32 %v2080, 2147483648
    %v2095 = vmul.f32 %v2094, 1.442695
    %v2096 = vpow.pop %v2095
    %v2097 = vadd.f32 %v2096, 1.0
    %v2098 = vrcp.pop %v2097
    %v2099 = vmul.f32 1.0, %v2098
    %v2100 = vmul.f32 %v2092, %v1863
    %v2101 = vmul.f32 %v2086, %v2093
    %v2102 = vadd.f32 %v2100, %v2101
    %v2103 = vtanh.pop %v2102
    %v2104 = vmul.f32 %v2099, %v2103
    %2105 = vst [vmem:[#allocation3 + $0x30] sm:$0xff] %v2104
    %v2106 = vld [vmem:[#allocation2 + $0xe0] sm:$0xff]
    %v2107 = vld [vmem:[#allocation2 + $0xe8] sm:$0xff]
    %v2108 = vld [vmem:[#allocation2 + $0xf0] sm:$0xff]
    %v2109 = vld [vmem:[#allocation2 + $0xf8] sm:$0xff]
    %v2110 = vld [vmem:[#allocation6] sm:$0xff]
    %v2111 = vld [vmem:[#allocation6 + $0x8] sm:$0xff]
    %v2112 = vld [vmem:[#allocation6 + $0x10] sm:$0xff]
    %v2113 = vld [vmem:[#allocation6 + $0x18] sm:$0xff]
    %v2114 = vld [vmem:[#allocation6 + $0x20] sm:$0xff]
    %v2115 = vld [vmem:[#allocation6 + $0x28] sm:$0xff]
    %v2116 = vld [vmem:[#allocation6 + $0x30] sm:$0xff]
    %v2117 = vld [vmem:[#allocation6 + $0x38] sm:$0xff]
    %v2118 = vld [vmem:[#allocation6 + $0x40] sm:$0xff]
    %v2119 = vld [vmem:[#allocation6 + $0x48] sm:$0xff]
    %v2120 = vld [vmem:[#allocation6 + $0x50] sm:$0xff]
    %v2121 = vld [vmem:[#allocation6 + $0x58] sm:$0xff]
    %v2122 = vld [vmem:[#allocation6 + $0x60] sm:$0xff]
    %v2123 = vld [vmem:[#allocation6 + $0x68] sm:$0xff]
    %v2124 = vld [vmem:[#allocation6 + $0x70] sm:$0xff]
    %v2125 = vld [vmem:[#allocation6 + $0x78] sm:$0xff]
    %v2126 = vld [vmem:[#allocation6 + $0x80] sm:$0xff]
    %v2127 = vld [vmem:[#allocation6 + $0x88] sm:$0xff]
    %v2128 = vld [vmem:[#allocation6 + $0x90] sm:$0xff]
    %v2129 = vld [vmem:[#allocation6 + $0x98] sm:$0xff]
    %v2130 = vld [vmem:[#allocation6 + $0xa0] sm:$0xff]
    %v2131 = vld [vmem:[#allocation6 + $0xa8] sm:$0xff]
    %v2132 = vld [vmem:[#allocation6 + $0xb0] sm:$0xff]
    %v2133 = vld [vmem:[#allocation6 + $0xb8] sm:$0xff]
    %v2134 = vld [vmem:[#allocation6 + $0xc0] sm:$0xff]
    %v2135 = vld [vmem:[#allocation6 + $0xc8] sm:$0xff]
    %v2136 = vld [vmem:[#allocation6 + $0xd0] sm:$0xff]
    %v2137 = vld [vmem:[#allocation6 + $0xd8] sm:$0xff]
    %v2138 = vld [vmem:[#allocation6 + $0xe0] sm:$0xff]
    %v2139 = vld [vmem:[#allocation6 + $0xe8] sm:$0xff]
    %v2140 = vld [vmem:[#allocation6 + $0xf0] sm:$0xff]
    %v2141 = vld [vmem:[#allocation6 + $0xf8] sm:$0xff]
    %v2142 = vld [vmem:[#allocation6 + $0x100] sm:$0xff]
    %v2143 = vld [vmem:[#allocation6 + $0x108] sm:$0xff]
    %v2144 = vld [vmem:[#allocation6 + $0x110] sm:$0xff]
    %v2145 = vld [vmem:[#allocation6 + $0x118] sm:$0xff]
    %v2146 = vld [vmem:[#allocation6 + $0x120] sm:$0xff]
    %v2147 = vld [vmem:[#allocation6 + $0x128] sm:$0xff]
    %v2148 = vld [vmem:[#allocation6 + $0x130] sm:$0xff]
    %v2149 = vld [vmem:[#allocation6 + $0x138] sm:$0xff]
    %v2150 = vld [vmem:[#allocation6 + $0x140] sm:$0xff]
    %v2151 = vld [vmem:[#allocation6 + $0x148] sm:$0xff]
    %v2152 = vld [vmem:[#allocation6 + $0x150] sm:$0xff]
    %v2153 = vld [vmem:[#allocation6 + $0x158] sm:$0xff]
    %v2154 = vld [vmem:[#allocation6 + $0x160] sm:$0xff]
    %v2155 = vld [vmem:[#allocation6 + $0x168] sm:$0xff]
    %v2156 = vld [vmem:[#allocation6 + $0x170] sm:$0xff]
    %v2157 = vld [vmem:[#allocation6 + $0x178] sm:$0xff]
    %v2158 = vld [vmem:[#allocation6 + $0x180] sm:$0xff]
    %v2159 = vld [vmem:[#allocation6 + $0x188] sm:$0xff]
    %v2160 = vld [vmem:[#allocation6 + $0x190] sm:$0xff]
    %v2161 = vld [vmem:[#allocation6 + $0x198] sm:$0xff]
    %v2162 = vld [vmem:[#allocation6 + $0x1a0] sm:$0xff]
    %v2163 = vld [vmem:[#allocation6 + $0x1a8] sm:$0xff]
    %v2164 = vld [vmem:[#allocation6 + $0x1b0] sm:$0xff]
    %v2165 = vld [vmem:[#allocation6 + $0x1b8] sm:$0xff]
    %v2166 = vld [vmem:[#allocation6 + $0x1c0] sm:$0xff]
    %v2167 = vld [vmem:[#allocation6 + $0x1c8] sm:$0xff]
    %v2168 = vld [vmem:[#allocation6 + $0x1d0] sm:$0xff]
    %v2169 = vld [vmem:[#allocation6 + $0x1d8] sm:$0xff]
    %v2170 = vld [vmem:[#allocation6 + $0x1e0] sm:$0xff]
    %v2171 = vld [vmem:[#allocation6 + $0x1e8] sm:$0xff]
    %v2172 = vld [vmem:[#allocation6 + $0x1f0] sm:$0xff]
    %v2173 = vld [vmem:[#allocation6 + $0x1f8] sm:$0xff]
    %2174 = vmatprep.subr.mxu0 %v2171
    %2175 = vmatpush1.msra.mxu0 %v2170
    %2176 = vmatprep.subr.mxu0 %v2167
    %2177 = vmatpush1.msra.mxu0 %v2166
    %2178 = vmatprep.subr.mxu0 %v2163
    %2179 = vmatpush1.msra.mxu0 %v2162
    %2180 = vmatprep.subr.mxu0 %v2159
    %2181 = vmatpush1.msra.mxu0 %v2158
    %2182 = vmatprep.subr.mxu0 %v2155
    %2183 = vmatpush1.msra.mxu0 %v2154
    %2184 = vmatprep.subr.mxu0 %v2151
    %2185 = vmatpush1.msra.mxu0 %v2150
    %2186 = vmatprep.subr.mxu0 %v2147
    %2187 = vmatpush1.msra.mxu0 %v2146
    %2188 = vmatprep.subr.mxu0 %v2143
    %2189 = vmatpush1.msra.mxu0 %v2142
    %2190 = vmatprep.subr.mxu0 %v2139
    %2191 = vmatpush1.msra.mxu0 %v2138
    %2192 = vmatprep.subr.mxu0 %v2135
    %2193 = vmatpush1.msra.mxu0 %v2134
    %2194 = vmatprep.subr.mxu0 %v2131
    %2195 = vmatpush1.msra.mxu0 %v2130
    %2196 = vmatprep.subr.mxu0 %v2127
    %2197 = vmatpush1.msra.mxu0 %v2126
    %2198 = vmatprep.subr.mxu0 %v2123
    %2199 = vmatpush1.msra.mxu0 %v2122
    %2200 = vmatprep.subr.mxu0 %v2119
    %2201 = vmatpush1.msra.mxu0 %v2118
    %2202 = vmatprep.subr.mxu0 %v2115
    %2203 = vmatpush1.msra.mxu0 %v2114
    %2204 = vmatprep.subr.mxu0 %v2111
    %2205 = vmatpush1.msra.mxu0 %v2110
    %2206 = vmatprep.subr.mxu0 0.0
    %2207 = vmatpush2.msra.mxu0 0.0
    %2208 = vmatprep.subr.mxu0 0.0
    %2209 = vmatpush2.msra.mxu0 0.0
    %2210 = vmatprep.subr.mxu0 0.0
    %2211 = vmatpush2.msra.mxu0 0.0
    %2212 = vmatprep.subr.mxu0 0.0
    %2213 = vmatpush2.msra.mxu0 0.0
    %2214 = vmatprep.subr.mxu0 0.0
    %2215 = vmatpush2.msra.mxu0 0.0
    %2216 = vmatprep.subr.mxu0 0.0
    %2217 = vmatpush2.msra.mxu0 0.0
    %2218 = vmatprep.subr.mxu0 0.0
    %2219 = vmatpush2.msra.mxu0 0.0
    %2220 = vmatprep.subr.mxu0 0.0
    %2221 = vmatpush2.msra.mxu0 0.0
    %2222 = vmatprep.subr.mxu0 0.0
    %2223 = vmatpush2.msra.mxu0 0.0
    %2224 = vmatprep.subr.mxu0 0.0
    %2225 = vmatpush2.msra.mxu0 0.0
    %2226 = vmatprep.subr.mxu0 0.0
    %2227 = vmatpush2.msra.mxu0 0.0
    %2228 = vmatprep.subr.mxu0 0.0
    %2229 = vmatpush2.msra.mxu0 0.0
    %2230 = vmatprep.subr.mxu0 0.0
    %2231 = vmatpush2.msra.mxu0 0.0
    %2232 = vmatprep.subr.mxu0 0.0
    %2233 = vmatpush2.msra.mxu0 0.0
    %2234 = vmatprep.subr.mxu0 0.0
    %2235 = vmatpush2.msra.mxu0 0.0
    %2236 = vmatprep.subr.mxu0 0.0
    %2237 = vmatpush2.msra.mxu0 0.0
    %2238 = vmatprep.mubr.f32.mxu0 0.0
    %2239 = vmatmul.mubr.f32.gmra.mxu0 %v2104
    %v2240 = vpop.f32.mrf.mxu0
    %v2241 = vadd.f32 0.0, %v2240
    %v2242 = vpop.f32.mrf.mxu0
    %v2243 = vadd.f32 0.0, %v2242
    %2244 = vdwg.mxu0
    %2245 = vmatprep.subr.mxu0 %v2173
    %2246 = vmatpush1.msra.mxu0 %v2172
    %2247 = vmatprep.subr.mxu0 %v2169
    %2248 = vmatpush1.msra.mxu0 %v2168
    %2249 = vmatprep.subr.mxu0 %v2165
    %2250 = vmatpush1.msra.mxu0 %v2164
    %2251 = vmatprep.subr.mxu0 %v2161
    %2252 = vmatpush1.msra.mxu0 %v2160
    %2253 = vmatprep.subr.mxu0 %v2157
    %2254 = vmatpush1.msra.mxu0 %v2156
    %2255 = vmatprep.subr.mxu0 %v2153
    %2256 = vmatpush1.msra.mxu0 %v2152
    %2257 = vmatprep.subr.mxu0 %v2149
    %2258 = vmatpush1.msra.mxu0 %v2148
    %2259 = vmatprep.subr.mxu0 %v2145
    %2260 = vmatpush1.msra.mxu0 %v2144
    %2261 = vmatprep.subr.mxu0 %v2141
    %2262 = vmatpush1.msra.mxu0 %v2140
    %2263 = vmatprep.subr.mxu0 %v2137
    %2264 = vmatpush1.msra.mxu0 %v2136
    %2265 = vmatprep.subr.mxu0 %v2133
    %2266 = vmatpush1.msra.mxu0 %v2132
    %2267 = vmatprep.subr.mxu0 %v2129
    %2268 = vmatpush1.msra.mxu0 %v2128
    %2269 = vmatprep.subr.mxu0 %v2125
    %2270 = vmatpush1.msra.mxu0 %v2124
    %2271 = vmatprep.subr.mxu0 %v2121
    %2272 = vmatpush1.msra.mxu0 %v2120
    %2273 = vmatprep.subr.mxu0 %v2117
    %2274 = vmatpush1.msra.mxu0 %v2116
    %2275 = vmatprep.subr.mxu0 %v2113
    %2276 = vmatpush1.msra.mxu0 %v2112
    %2277 = vmatprep.subr.mxu0 0.0
    %2278 = vmatpush2.msra.mxu0 0.0
    %2279 = vmatprep.subr.mxu0 0.0
    %2280 = vmatpush2.msra.mxu0 0.0
    %2281 = vmatprep.subr.mxu0 0.0
    %2282 = vmatpush2.msra.mxu0 0.0
    %2283 = vmatprep.subr.mxu0 0.0
    %2284 = vmatpush2.msra.mxu0 0.0
    %2285 = vmatprep.subr.mxu0 0.0
    %2286 = vmatpush2.msra.mxu0 0.0
    %2287 = vmatprep.subr.mxu0 0.0
    %2288 = vmatpush2.msra.mxu0 0.0
    %2289 = vmatprep.subr.mxu0 0.0
    %2290 = vmatpush2.msra.mxu0 0.0
    %2291 = vmatprep.subr.mxu0 0.0
    %2292 = vmatpush2.msra.mxu0 0.0
    %2293 = vmatprep.subr.mxu0 0.0
    %2294 = vmatpush2.msra.mxu0 0.0
    %2295 = vmatprep.subr.mxu0 0.0
    %2296 = vmatpush2.msra.mxu0 0.0
    %2297 = vmatprep.subr.mxu0 0.0
    %2298 = vmatpush2.msra.mxu0 0.0
    %2299 = vmatprep.subr.mxu0 0.0
    %2300 = vmatpush2.msra.mxu0 0.0
    %2301 = vmatprep.subr.mxu0 0.0
    %2302 = vmatpush2.msra.mxu0 0.0
    %2303 = vmatprep.subr.mxu0 0.0
    %2304 = vmatpush2.msra.mxu0 0.0
    %2305 = vmatprep.subr.mxu0 0.0
    %2306 = vmatpush2.msra.mxu0 0.0
    %2307 = vmatprep.subr.mxu0 0.0
    %2308 = vmatpush2.msra.mxu0 0.0
    %2309 = vmatprep.mubr.f32.mxu0 0.0
    %2310 = vmatmul.mubr.f32.gmra.mxu0 %v2104
    %v2311 = vpop.f32.mrf.mxu0
    %v2312 = vadd.f32 0.0, %v2311
    %v2313 = vpop.f32.mrf.mxu0
    %v2314 = vadd.f32 0.0, %v2313
    %2315 = vdwg.mxu0
    %v2316 = vadd.f32 %v2106, %v2241
    %v2317 = vadd.f32 %v2107, %v2243
    %v2318 = vadd.f32 %v2108, %v2312
    %v2319 = vadd.f32 %v2109, %v2314
    %v2320 = vxor.u32 %v2316, 2147483648
    %v2321 = vmul.f32 %v2320, 1.442695
    %v2322 = vpow.pop %v2321
    %v2323 = vadd.f32 %v2322, 1.0
    %v2324 = vrcp.pop %v2323
    %v2325 = vmul.f32 1.0, %v2324
    %v2326 = vxor.u32 %v2317, 2147483648
    %v2327 = vmul.f32 %v2326, 1.442695
    %v2328 = vpow.pop %v2327
    %v2329 = vadd.f32 %v2328, 1.0
    %v2330 = vrcp.pop %v2329
    %v2331 = vmul.f32 1.0, %v2330
    %v2332 = vtanh.pop %v2318
    %v2333 = vxor.u32 %v2319, 2147483648
    %v2334 = vmul.f32 %v2333, 1.442695
    %v2335 = vpow.pop %v2334
    %v2336 = vadd.f32 %v2335, 1.0
    %v2337 = vrcp.pop %v2336
    %v2338 = vmul.f32 1.0, %v2337
    %v2339 = vmul.f32 %v2331, %v2102
    %v2340 = vmul.f32 %v2325, %v2332
    %v2341 = vadd.f32 %v2339, %v2340
    %v2342 = vtanh.pop %v2341
    %v2343 = vmul.f32 %v2338, %v2342
    %2344 = vst [vmem:[#allocation3 + $0x38] sm:$0xff] %v2343
    %v2345 = vld [vmem:[#allocation3] sm:$0xff]
    %v2346 = vld [vmem:[#allocation3 + $0x8] sm:$0xff]
    %v2347 = vld [vmem:[#allocation3 + $0x10] sm:$0xff]
    %v2348 = vld [vmem:[#allocation3 + $0x18] sm:$0xff]
    %v2349 = vld [vmem:[#allocation3 + $0x20] sm:$0xff]
    %v2350 = vld [vmem:[#allocation3 + $0x28] sm:$0xff]
    %v2351 = vld [vmem:[#allocation3 + $0x30] sm:$0xff]
    %v2352 = vld [vmem:[#allocation3 + $0x38] sm:$0xff]
    %v2353 = vld [vmem:[#allocation8] sm:$0xff]
    %v2354 = vld [vmem:[#allocation8 + $0x8] sm:$0xff]
    %v2355 = vld [vmem:[#allocation8 + $0x10] sm:$0xff]
    %v2356 = vld [vmem:[#allocation8 + $0x18] sm:$0xff]
    %v2357 = vld [vmem:[#allocation8 + $0x20] sm:$0xff]
    %v2358 = vld [vmem:[#allocation8 + $0x28] sm:$0xff]
    %v2359 = vld [vmem:[#allocation8 + $0x30] sm:$0xff]
    %v2360 = vld [vmem:[#allocation8 + $0x38] sm:$0xff]
    %v2361 = vld [vmem:[#allocation8 + $0x40] sm:$0xff]
    %v2362 = vld [vmem:[#allocation8 + $0x48] sm:$0xff]
    %v2363 = vld [vmem:[#allocation8 + $0x50] sm:$0xff]
    %v2364 = vld [vmem:[#allocation8 + $0x58] sm:$0xff]
    %v2365 = vld [vmem:[#allocation8 + $0x60] sm:$0xff]
    %v2366 = vld [vmem:[#allocation8 + $0x68] sm:$0xff]
    %v2367 = vld [vmem:[#allocation8 + $0x70] sm:$0xff]
    %v2368 = vld [vmem:[#allocation8 + $0x78] sm:$0xff]
    %v2369 = vld [vmem:[#allocation8 + $0x80] sm:$0xff]
    %v2370 = vld [vmem:[#allocation8 + $0x88] sm:$0xff]
    %v2371 = vld [vmem:[#allocation8 + $0x90] sm:$0xff]
    %v2372 = vld [vmem:[#allocation8 + $0x98] sm:$0xff]
    %v2373 = vld [vmem:[#allocation8 + $0xa0] sm:$0xff]
    %v2374 = vld [vmem:[#allocation8 + $0xa8] sm:$0xff]
    %v2375 = vld [vmem:[#allocation8 + $0xb0] sm:$0xff]
    %v2376 = vld [vmem:[#allocation8 + $0xb8] sm:$0xff]
    %v2377 = vld [vmem:[#allocation8 + $0xc0] sm:$0xff]
    %v2378 = vld [vmem:[#allocation8 + $0xc8] sm:$0xff]
    %v2379 = vld [vmem:[#allocation8 + $0xd0] sm:$0xff]
    %v2380 = vld [vmem:[#allocation8 + $0xd8] sm:$0xff]
    %v2381 = vld [vmem:[#allocation8 + $0xe0] sm:$0xff]
    %v2382 = vld [vmem:[#allocation8 + $0xe8] sm:$0xff]
    %v2383 = vld [vmem:[#allocation8 + $0xf0] sm:$0xff]
    %v2384 = vld [vmem:[#allocation8 + $0xf8] sm:$0xff]
    %v2385 = vld [vmem:[#allocation8 + $0x100] sm:$0xff]
    %v2386 = vld [vmem:[#allocation8 + $0x108] sm:$0xff]
    %v2387 = vld [vmem:[#allocation8 + $0x110] sm:$0xff]
    %v2388 = vld [vmem:[#allocation8 + $0x118] sm:$0xff]
    %v2389 = vld [vmem:[#allocation8 + $0x120] sm:$0xff]
    %v2390 = vld [vmem:[#allocation8 + $0x128] sm:$0xff]
    %v2391 = vld [vmem:[#allocation8 + $0x130] sm:$0xff]
    %v2392 = vld [vmem:[#allocation8 + $0x138] sm:$0xff]
    %v2393 = vld [vmem:[#allocation8 + $0x140] sm:$0xff]
    %v2394 = vld [vmem:[#allocation8 + $0x148] sm:$0xff]
    %v2395 = vld [vmem:[#allocation8 + $0x150] sm:$0xff]
    %v2396 = vld [vmem:[#allocation8 + $0x158] sm:$0xff]
    %v2397 = vld [vmem:[#allocation8 + $0x160] sm:$0xff]
    %v2398 = vld [vmem:[#allocation8 + $0x168] sm:$0xff]
    %v2399 = vld [vmem:[#allocation8 + $0x170] sm:$0xff]
    %v2400 = vld [vmem:[#allocation8 + $0x178] sm:$0xff]
    %v2401 = vld [vmem:[#allocation8 + $0x180] sm:$0xff]
    %v2402 = vld [vmem:[#allocation8 + $0x188] sm:$0xff]
    %v2403 = vld [vmem:[#allocation8 + $0x190] sm:$0xff]
    %v2404 = vld [vmem:[#allocation8 + $0x198] sm:$0xff]
    %v2405 = vld [vmem:[#allocation8 + $0x1a0] sm:$0xff]
    %v2406 = vld [vmem:[#allocation8 + $0x1a8] sm:$0xff]
    %v2407 = vld [vmem:[#allocation8 + $0x1b0] sm:$0xff]
    %v2408 = vld [vmem:[#allocation8 + $0x1b8] sm:$0xff]
    %v2409 = vld [vmem:[#allocation8 + $0x1c0] sm:$0xff]
    %v2410 = vld [vmem:[#allocation8 + $0x1c8] sm:$0xff]
    %v2411 = vld [vmem:[#allocation8 + $0x1d0] sm:$0xff]
    %v2412 = vld [vmem:[#allocation8 + $0x1d8] sm:$0xff]
    %v2413 = vld [vmem:[#allocation8 + $0x1e0] sm:$0xff]
    %v2414 = vld [vmem:[#allocation8 + $0x1e8] sm:$0xff]
    %v2415 = vld [vmem:[#allocation8 + $0x1f0] sm:$0xff]
    %v2416 = vld [vmem:[#allocation8 + $0x1f8] sm:$0xff]
    %v2417 = vld [vmem:[%s6] sm:$0xf]
    %v2419 = vlaneseq
    %v2420 = vshrl.u32 %v2419, 7
    %v2421 = vsub.s32 0, %v2420
    %v2422 = vrot.slane %v2417, %v2421
    %v2423 = vlaneseq
    %v2424 = vshrl.u32 %v2423, 7
    %v2425 = vsub.s32 1, %v2424
    %v2426 = vrot.slane %v2417, %v2425
    %v2427 = vlaneseq
    %v2428 = vshrl.u32 %v2427, 7
    %v2429 = vsub.s32 2, %v2428
    %v2430 = vrot.slane %v2417, %v2429
    %v2431 = vlaneseq
    %v2432 = vshrl.u32 %v2431, 7
    %v2433 = vsub.s32 3, %v2432
    %v2434 = vrot.slane %v2417, %v2433
    %2439 = vmatprep.subr.mxu0 %v2414
    %2440 = vmatpush1.msra.mxu0 %v2413
    %2441 = vmatprep.subr.mxu0 %v2410
    %2442 = vmatpush1.msra.mxu0 %v2409
    %2443 = vmatprep.subr.mxu0 %v2406
    %2444 = vmatpush1.msra.mxu0 %v2405
    %2445 = vmatprep.subr.mxu0 %v2402
    %2446 = vmatpush1.msra.mxu0 %v2401
    %2447 = vmatprep.subr.mxu0 %v2398
    %2448 = vmatpush1.msra.mxu0 %v2397
    %2449 = vmatprep.subr.mxu0 %v2394
    %2450 = vmatpush1.msra.mxu0 %v2393
    %2451 = vmatprep.subr.mxu0 %v2390
    %2452 = vmatpush1.msra.mxu0 %v2389
    %2453 = vmatprep.subr.mxu0 %v2386
    %2454 = vmatpush1.msra.mxu0 %v2385
    %2455 = vmatprep.subr.mxu0 %v2382
    %2456 = vmatpush1.msra.mxu0 %v2381
    %2457 = vmatprep.subr.mxu0 %v2378
    %2458 = vmatpush1.msra.mxu0 %v2377
    %2459 = vmatprep.subr.mxu0 %v2374
    %2460 = vmatpush1.msra.mxu0 %v2373
    %2461 = vmatprep.subr.mxu0 %v2370
    %2462 = vmatpush1.msra.mxu0 %v2369
    %2463 = vmatprep.subr.mxu0 %v2366
    %2464 = vmatpush1.msra.mxu0 %v2365
    %2465 = vmatprep.subr.mxu0 %v2362
    %2466 = vmatpush1.msra.mxu0 %v2361
    %2467 = vmatprep.subr.mxu0 %v2358
    %2468 = vmatpush1.msra.mxu0 %v2357
    %2469 = vmatprep.subr.mxu0 %v2354
    %2470 = vmatpush1.msra.mxu0 %v2353
    %2471 = vmatprep.subr.mxu0 0.0
    %2472 = vmatpush2.msra.mxu0 0.0
    %2473 = vmatprep.subr.mxu0 0.0
    %2474 = vmatpush2.msra.mxu0 0.0
    %2475 = vmatprep.subr.mxu0 0.0
    %2476 = vmatpush2.msra.mxu0 0.0
    %2477 = vmatprep.subr.mxu0 0.0
    %2478 = vmatpush2.msra.mxu0 0.0
    %2479 = vmatprep.subr.mxu0 0.0
    %2480 = vmatpush2.msra.mxu0 0.0
    %2481 = vmatprep.subr.mxu0 0.0
    %2482 = vmatpush2.msra.mxu0 0.0
    %2483 = vmatprep.subr.mxu0 0.0
    %2484 = vmatpush2.msra.mxu0 0.0
    %2485 = vmatprep.subr.mxu0 0.0
    %2486 = vmatpush2.msra.mxu0 0.0
    %2487 = vmatprep.subr.mxu0 0.0
    %2488 = vmatpush2.msra.mxu0 0.0
    %2489 = vmatprep.subr.mxu0 0.0
    %2490 = vmatpush2.msra.mxu0 0.0
    %2491 = vmatprep.subr.mxu0 0.0
    %2492 = vmatpush2.msra.mxu0 0.0
    %2493 = vmatprep.subr.mxu0 0.0
    %2494 = vmatpush2.msra.mxu0 0.0
    %2495 = vmatprep.subr.mxu0 0.0
    %2496 = vmatpush2.msra.mxu0 0.0
    %2497 = vmatprep.subr.mxu0 0.0
    %2498 = vmatpush2.msra.mxu0 0.0
    %2499 = vmatprep.subr.mxu0 0.0
    %2500 = vmatpush2.msra.mxu0 0.0
    %2501 = vmatprep.subr.mxu0 0.0
    %2502 = vmatpush2.msra.mxu0 0.0
    %2503 = vmatprep.mubr.f32.mxu0 0.0
    %2504 = vmatmul.mubr.f32.gmra.mxu0 %v2345
    %v2505 = vpop.f32.mrf.mxu0
    %v2506 = vadd.f32 %v2422, %v2505
    %v2507 = vpop.f32.mrf.mxu0
    %v2508 = vadd.f32 %v2426, %v2507
    %2509 = vmatprep.mubr.f32.mxu0 0.0
    %2510 = vmatmul.mubr.f32.gmra.mxu0 %v2346
    %v2511 = vpop.f32.mrf.mxu0
    %v2512 = vadd.f32 %v2422, %v2511
    %v2513 = vpop.f32.mrf.mxu0
    %v2514 = vadd.f32 %v2426, %v2513
    %2515 = vmatprep.mubr.f32.mxu0 0.0
    %2516 = vmatmul.mubr.f32.gmra.mxu0 %v2347
    %v2517 = vpop.f32.mrf.mxu0
    %v2518 = vadd.f32 %v2422, %v2517
    %v2519 = vpop.f32.mrf.mxu0
    %v2520 = vadd.f32 %v2426, %v2519
    %2521 = vmatprep.mubr.f32.mxu0 0.0
    %2522 = vmatmul.mubr.f32.gmra.mxu0 %v2348
    %v2523 = vpop.f32.mrf.mxu0
    %v2524 = vadd.f32 %v2422, %v2523
    %v2525 = vpop.f32.mrf.mxu0
    %v2526 = vadd.f32 %v2426, %v2525
    %2527 = vmatprep.mubr.f32.mxu0 0.0
    %2528 = vmatmul.mubr.f32.gmra.mxu0 %v2349
    %v2529 = vpop.f32.mrf.mxu0
    %v2530 = vadd.f32 %v2422, %v2529
    %v2531 = vpop.f32.mrf.mxu0
    %v2532 = vadd.f32 %v2426, %v2531
    %2533 = vmatprep.mubr.f32.mxu0 0.0
    %2534 = vmatmul.mubr.f32.gmra.mxu0 %v2350
    %v2535 = vpop.f32.mrf.mxu0
    %v2536 = vadd.f32 %v2422, %v2535
    %v2537 = vpop.f32.mrf.mxu0
    %v2538 = vadd.f32 %v2426, %v2537
    %2539 = vmatprep.mubr.f32.mxu0 0.0
    %2540 = vmatmul.mubr.f32.gmra.mxu0 %v2351
    %v2541 = vpop.f32.mrf.mxu0
    %v2542 = vadd.f32 %v2422, %v2541
    %v2543 = vpop.f32.mrf.mxu0
    %v2544 = vadd.f32 %v2426, %v2543
    %2545 = vmatprep.mubr.f32.mxu0 0.0
    %2546 = vmatmul.mubr.f32.gmra.mxu0 %v2352
    %v2547 = vpop.f32.mrf.mxu0
    %v2548 = vadd.f32 %v2422, %v2547
    %v2549 = vpop.f32.mrf.mxu0
    %v2550 = vadd.f32 %v2426, %v2549
    %2551 = vdwg.mxu0
    %2552 = vmatprep.subr.mxu0 %v2416
    %2553 = vmatpush1.msra.mxu0 %v2415
    %2554 = vmatprep.subr.mxu0 %v2412
    %2555 = vmatpush1.msra.mxu0 %v2411
    %2556 = vmatprep.subr.mxu0 %v2408
    %2557 = vmatpush1.msra.mxu0 %v2407
    %2558 = vmatprep.subr.mxu0 %v2404
    %2559 = vmatpush1.msra.mxu0 %v2403
    %2560 = vmatprep.subr.mxu0 %v2400
    %2561 = vmatpush1.msra.mxu0 %v2399
    %2562 = vmatprep.subr.mxu0 %v2396
    %2563 = vmatpush1.msra.mxu0 %v2395
    %2564 = vmatprep.subr.mxu0 %v2392
    %2565 = vmatpush1.msra.mxu0 %v2391
    %2566 = vmatprep.subr.mxu0 %v2388
    %2567 = vmatpush1.msra.mxu0 %v2387
    %2568 = vmatprep.subr.mxu0 %v2384
    %2569 = vmatpush1.msra.mxu0 %v2383
    %2570 = vmatprep.subr.mxu0 %v2380
    %2571 = vmatpush1.msra.mxu0 %v2379
    %2572 = vmatprep.subr.mxu0 %v2376
    %2573 = vmatpush1.msra.mxu0 %v2375
    %2574 = vmatprep.subr.mxu0 %v2372
    %2575 = vmatpush1.msra.mxu0 %v2371
    %2576 = vmatprep.subr.mxu0 %v2368
    %2577 = vmatpush1.msra.mxu0 %v2367
    %2578 = vmatprep.subr.mxu0 %v2364
    %2579 = vmatpush1.msra.mxu0 %v2363
    %2580 = vmatprep.subr.mxu0 %v2360
    %2581 = vmatpush1.msra.mxu0 %v2359
    %2582 = vmatprep.subr.mxu0 %v2356
    %2583 = vmatpush1.msra.mxu0 %v2355
    %2584 = vmatprep.subr.mxu0 0.0
    %2585 = vmatpush2.msra.mxu0 0.0
    %2586 = vmatprep.subr.mxu0 0.0
    %2587 = vmatpush2.msra.mxu0 0.0
    %2588 = vmatprep.subr.mxu0 0.0
    %2589 = vmatpush2.msra.mxu0 0.0
    %2590 = vmatprep.subr.mxu0 0.0
    %2591 = vmatpush2.msra.mxu0 0.0
    %2592 = vmatprep.subr.mxu0 0.0
    %2593 = vmatpush2.msra.mxu0 0.0
    %2594 = vmatprep.subr.mxu0 0.0
    %2595 = vmatpush2.msra.mxu0 0.0
    %2596 = vmatprep.subr.mxu0 0.0
    %2597 = vmatpush2.msra.mxu0 0.0
    %2598 = vmatprep.subr.mxu0 0.0
    %2599 = vmatpush2.msra.mxu0 0.0
    %2600 = vmatprep.subr.mxu0 0.0
    %2601 = vmatpush2.msra.mxu0 0.0
    %2602 = vmatprep.subr.mxu0 0.0
    %2603 = vmatpush2.msra.mxu0 0.0
    %2604 = vmatprep.subr.mxu0 0.0
    %2605 = vmatpush2.msra.mxu0 0.0
    %2606 = vmatprep.subr.mxu0 0.0
    %2607 = vmatpush2.msra.mxu0 0.0
    %2608 = vmatprep.subr.mxu0 0.0
    %2609 = vmatpush2.msra.mxu0 0.0
    %2610 = vmatprep.subr.mxu0 0.0
    %2611 = vmatpush2.msra.mxu0 0.0
    %2612 = vmatprep.subr.mxu0 0.0
    %2613 = vmatpush2.msra.mxu0 0.0
    %2614 = vmatprep.subr.mxu0 0.0
    %2615 = vmatpush2.msra.mxu0 0.0
    %2616 = vmatprep.mubr.f32.mxu0 0.0
    %2617 = vmatmul.mubr.f32.gmra.mxu0 %v2345
    %v2618 = vpop.f32.mrf.mxu0
    %v2619 = vadd.f32 %v2430, %v2618
    %v2620 = vpop.f32.mrf.mxu0
    %v2621 = vadd.f32 %v2434, %v2620
    %2622 = vmatprep.mubr.f32.mxu0 0.0
    %2623 = vmatmul.mubr.f32.gmra.mxu0 %v2346
    %v2624 = vpop.f32.mrf.mxu0
    %v2625 = vadd.f32 %v2430, %v2624
    %v2626 = vpop.f32.mrf.mxu0
    %v2627 = vadd.f32 %v2434, %v2626
    %2628 = vmatprep.mubr.f32.mxu0 0.0
    %2629 = vmatmul.mubr.f32.gmra.mxu0 %v2347
    %v2630 = vpop.f32.mrf.mxu0
    %v2631 = vadd.f32 %v2430, %v2630
    %v2632 = vpop.f32.mrf.mxu0
    %v2633 = vadd.f32 %v2434, %v2632
    %2634 = vmatprep.mubr.f32.mxu0 0.0
    %2635 = vmatmul.mubr.f32.gmra.mxu0 %v2348
    %v2636 = vpop.f32.mrf.mxu0
    %v2637 = vadd.f32 %v2430, %v2636
    %v2638 = vpop.f32.mrf.mxu0
    %v2639 = vadd.f32 %v2434, %v2638
    %2640 = vmatprep.mubr.f32.mxu0 0.0
    %2641 = vmatmul.mubr.f32.gmra.mxu0 %v2349
    %v2642 = vpop.f32.mrf.mxu0
    %v2643 = vadd.f32 %v2430, %v2642
    %v2644 = vpop.f32.mrf.mxu0
    %v2645 = vadd.f32 %v2434, %v2644
    %2646 = vmatprep.mubr.f32.mxu0 0.0
    %2647 = vmatmul.mubr.f32.gmra.mxu0 %v2350
    %v2648 = vpop.f32.mrf.mxu0
    %v2649 = vadd.f32 %v2430, %v2648
    %v2650 = vpop.f32.mrf.mxu0
    %v2651 = vadd.f32 %v2434, %v2650
    %2652 = vmatprep.mubr.f32.mxu0 0.0
    %2653 = vmatmul.mubr.f32.gmra.mxu0 %v2351
    %v2654 = vpop.f32.mrf.mxu0
    %v2655 = vadd.f32 %v2430, %v2654
    %v2656 = vpop.f32.mrf.mxu0
    %v2657 = vadd.f32 %v2434, %v2656
    %2658 = vmatprep.mubr.f32.mxu0 0.0
    %2659 = vmatmul.mubr.f32.gmra.mxu0 %v2352
    %v2660 = vpop.f32.mrf.mxu0
    %v2661 = vadd.f32 %v2430, %v2660
    %v2662 = vpop.f32.mrf.mxu0
    %v2663 = vadd.f32 %v2434, %v2662
    %2664 = vdwg.mxu0
    %2665 = vst [vmem:[#allocation2] sm:$0xff] %v2506
    %2666 = vst [vmem:[#allocation2 + $0x8] sm:$0xff] %v2508
    %2667 = vst [vmem:[#allocation2 + $0x10] sm:$0xff] %v2619
    %2668 = vst [vmem:[#allocation2 + $0x18] sm:$0xff] %v2621
    %2669 = vst [vmem:[#allocation2 + $0x20] sm:$0xff] %v2512
    %2670 = vst [vmem:[#allocation2 + $0x28] sm:$0xff] %v2514
    %2671 = vst [vmem:[#allocation2 + $0x30] sm:$0xff] %v2625
    %2672 = vst [vmem:[#allocation2 + $0x38] sm:$0xff] %v2627
    %2673 = vst [vmem:[#allocation2 + $0x40] sm:$0xff] %v2518
    %2674 = vst [vmem:[#allocation2 + $0x48] sm:$0xff] %v2520
    %2675 = vst [vmem:[#allocation2 + $0x50] sm:$0xff] %v2631
    %2676 = vst [vmem:[#allocation2 + $0x58] sm:$0xff] %v2633
    %2677 = vst [vmem:[#allocation2 + $0x60] sm:$0xff] %v2524
    %2678 = vst [vmem:[#allocation2 + $0x68] sm:$0xff] %v2526
    %2679 = vst [vmem:[#allocation2 + $0x70] sm:$0xff] %v2637
    %2680 = vst [vmem:[#allocation2 + $0x78] sm:$0xff] %v2639
    %2681 = vst [vmem:[#allocation2 + $0x80] sm:$0xff] %v2530
    %2682 = vst [vmem:[#allocation2 + $0x88] sm:$0xff] %v2532
    %2683 = vst [vmem:[#allocation2 + $0x90] sm:$0xff] %v2643
    %2684 = vst [vmem:[#allocation2 + $0x98] sm:$0xff] %v2645
    %2685 = vst [vmem:[#allocation2 + $0xa0] sm:$0xff] %v2536
    %2686 = vst [vmem:[#allocation2 + $0xa8] sm:$0xff] %v2538
    %2687 = vst [vmem:[#allocation2 + $0xb0] sm:$0xff] %v2649
    %2688 = vst [vmem:[#allocation2 + $0xb8] sm:$0xff] %v2651
    %2689 = vst [vmem:[#allocation2 + $0xc0] sm:$0xff] %v2542
    %2690 = vst [vmem:[#allocation2 + $0xc8] sm:$0xff] %v2544
    %2691 = vst [vmem:[#allocation2 + $0xd0] sm:$0xff] %v2655
    %2692 = vst [vmem:[#allocation2 + $0xd8] sm:$0xff] %v2657
    %2693 = vst [vmem:[#allocation2 + $0xe0] sm:$0xff] %v2548
    %2694 = vst [vmem:[#allocation2 + $0xe8] sm:$0xff] %v2550
    %2695 = vst [vmem:[#allocation2 + $0xf0] sm:$0xff] %v2661
    %2696 = vst [vmem:[#allocation2 + $0xf8] sm:$0xff] %v2663
    %v2697 = vld [vmem:[#allocation2] sm:$0xff]
    %v2698 = vld [vmem:[#allocation2 + $0x8] sm:$0xff]
    %v2699 = vld [vmem:[#allocation2 + $0x10] sm:$0xff]
    %v2700 = vld [vmem:[#allocation2 + $0x18] sm:$0xff]
    %v2701 = vld [vmem:[#allocation9] sm:$0xff]
    %v2702 = vld [vmem:[#allocation9 + $0x8] sm:$0xff]
    %v2703 = vld [vmem:[#allocation9 + $0x10] sm:$0xff]
    %v2704 = vld [vmem:[#allocation9 + $0x18] sm:$0xff]
    %v2705 = vld [vmem:[#allocation9 + $0x20] sm:$0xff]
    %v2706 = vld [vmem:[#allocation9 + $0x28] sm:$0xff]
    %v2707 = vld [vmem:[#allocation9 + $0x30] sm:$0xff]
    %v2708 = vld [vmem:[#allocation9 + $0x38] sm:$0xff]
    %v2709 = vld [vmem:[#allocation9 + $0x40] sm:$0xff]
    %v2710 = vld [vmem:[#allocation9 + $0x48] sm:$0xff]
    %v2711 = vld [vmem:[#allocation9 + $0x50] sm:$0xff]
    %v2712 = vld [vmem:[#allocation9 + $0x58] sm:$0xff]
    %v2713 = vld [vmem:[#allocation9 + $0x60] sm:$0xff]
    %v2714 = vld [vmem:[#allocation9 + $0x68] sm:$0xff]
    %v2715 = vld [vmem:[#allocation9 + $0x70] sm:$0xff]
    %v2716 = vld [vmem:[#allocation9 + $0x78] sm:$0xff]
    %v2717 = vld [vmem:[#allocation9 + $0x80] sm:$0xff]
    %v2718 = vld [vmem:[#allocation9 + $0x88] sm:$0xff]
    %v2719 = vld [vmem:[#allocation9 + $0x90] sm:$0xff]
    %v2720 = vld [vmem:[#allocation9 + $0x98] sm:$0xff]
    %v2721 = vld [vmem:[#allocation9 + $0xa0] sm:$0xff]
    %v2722 = vld [vmem:[#allocation9 + $0xa8] sm:$0xff]
    %v2723 = vld [vmem:[#allocation9 + $0xb0] sm:$0xff]
    %v2724 = vld [vmem:[#allocation9 + $0xb8] sm:$0xff]
    %v2725 = vld [vmem:[#allocation9 + $0xc0] sm:$0xff]
    %v2726 = vld [vmem:[#allocation9 + $0xc8] sm:$0xff]
    %v2727 = vld [vmem:[#allocation9 + $0xd0] sm:$0xff]
    %v2728 = vld [vmem:[#allocation9 + $0xd8] sm:$0xff]
    %v2729 = vld [vmem:[#allocation9 + $0xe0] sm:$0xff]
    %v2730 = vld [vmem:[#allocation9 + $0xe8] sm:$0xff]
    %v2731 = vld [vmem:[#allocation9 + $0xf0] sm:$0xff]
    %v2732 = vld [vmem:[#allocation9 + $0xf8] sm:$0xff]
    %v2733 = vld [vmem:[#allocation9 + $0x100] sm:$0xff]
    %v2734 = vld [vmem:[#allocation9 + $0x108] sm:$0xff]
    %v2735 = vld [vmem:[#allocation9 + $0x110] sm:$0xff]
    %v2736 = vld [vmem:[#allocation9 + $0x118] sm:$0xff]
    %v2737 = vld [vmem:[#allocation9 + $0x120] sm:$0xff]
    %v2738 = vld [vmem:[#allocation9 + $0x128] sm:$0xff]
    %v2739 = vld [vmem:[#allocation9 + $0x130] sm:$0xff]
    %v2740 = vld [vmem:[#allocation9 + $0x138] sm:$0xff]
    %v2741 = vld [vmem:[#allocation9 + $0x140] sm:$0xff]
    %v2742 = vld [vmem:[#allocation9 + $0x148] sm:$0xff]
    %v2743 = vld [vmem:[#allocation9 + $0x150] sm:$0xff]
    %v2744 = vld [vmem:[#allocation9 + $0x158] sm:$0xff]
    %v2745 = vld [vmem:[#allocation9 + $0x160] sm:$0xff]
    %v2746 = vld [vmem:[#allocation9 + $0x168] sm:$0xff]
    %v2747 = vld [vmem:[#allocation9 + $0x170] sm:$0xff]
    %v2748 = vld [vmem:[#allocation9 + $0x178] sm:$0xff]
    %v2749 = vld [vmem:[#allocation9 + $0x180] sm:$0xff]
    %v2750 = vld [vmem:[#allocation9 + $0x188] sm:$0xff]
    %v2751 = vld [vmem:[#allocation9 + $0x190] sm:$0xff]
    %v2752 = vld [vmem:[#allocation9 + $0x198] sm:$0xff]
    %v2753 = vld [vmem:[#allocation9 + $0x1a0] sm:$0xff]
    %v2754 = vld [vmem:[#allocation9 + $0x1a8] sm:$0xff]
    %v2755 = vld [vmem:[#allocation9 + $0x1b0] sm:$0xff]
    %v2756 = vld [vmem:[#allocation9 + $0x1b8] sm:$0xff]
    %v2757 = vld [vmem:[#allocation9 + $0x1c0] sm:$0xff]
    %v2758 = vld [vmem:[#allocation9 + $0x1c8] sm:$0xff]
    %v2759 = vld [vmem:[#allocation9 + $0x1d0] sm:$0xff]
    %v2760 = vld [vmem:[#allocation9 + $0x1d8] sm:$0xff]
    %v2761 = vld [vmem:[#allocation9 + $0x1e0] sm:$0xff]
    %v2762 = vld [vmem:[#allocation9 + $0x1e8] sm:$0xff]
    %v2763 = vld [vmem:[#allocation9 + $0x1f0] sm:$0xff]
    %v2764 = vld [vmem:[#allocation9 + $0x1f8] sm:$0xff]
    %2765 = vmatprep.subr.mxu0 %v2762
    %2766 = vmatpush1.msra.mxu0 %v2761
    %2767 = vmatprep.subr.mxu0 %v2758
    %2768 = vmatpush1.msra.mxu0 %v2757
    %2769 = vmatprep.subr.mxu0 %v2754
    %2770 = vmatpush1.msra.mxu0 %v2753
    %2771 = vmatprep.subr.mxu0 %v2750
    %2772 = vmatpush1.msra.mxu0 %v2749
    %2773 = vmatprep.subr.mxu0 %v2746
    %2774 = vmatpush1.msra.mxu0 %v2745
    %2775 = vmatprep.subr.mxu0 %v2742
    %2776 = vmatpush1.msra.mxu0 %v2741
    %2777 = vmatprep.subr.mxu0 %v2738
    %2778 = vmatpush1.msra.mxu0 %v2737
    %2779 = vmatprep.subr.mxu0 %v2734
    %2780 = vmatpush1.msra.mxu0 %v2733
    %2781 = vmatprep.subr.mxu0 %v2730
    %2782 = vmatpush1.msra.mxu0 %v2729
    %2783 = vmatprep.subr.mxu0 %v2726
    %2784 = vmatpush1.msra.mxu0 %v2725
    %2785 = vmatprep.subr.mxu0 %v2722
    %2786 = vmatpush1.msra.mxu0 %v2721
    %2787 = vmatprep.subr.mxu0 %v2718
    %2788 = vmatpush1.msra.mxu0 %v2717
    %2789 = vmatprep.subr.mxu0 %v2714
    %2790 = vmatpush1.msra.mxu0 %v2713
    %2791 = vmatprep.subr.mxu0 %v2710
    %2792 = vmatpush1.msra.mxu0 %v2709
    %2793 = vmatprep.subr.mxu0 %v2706
    %2794 = vmatpush1.msra.mxu0 %v2705
    %2795 = vmatprep.subr.mxu0 %v2702
    %2796 = vmatpush1.msra.mxu0 %v2701
    %2797 = vmatprep.subr.mxu0 0.0
    %2798 = vmatpush2.msra.mxu0 0.0
    %2799 = vmatprep.subr.mxu0 0.0
    %2800 = vmatpush2.msra.mxu0 0.0
    %2801 = vmatprep.subr.mxu0 0.0
    %2802 = vmatpush2.msra.mxu0 0.0
    %2803 = vmatprep.subr.mxu0 0.0
    %2804 = vmatpush2.msra.mxu0 0.0
    %2805 = vmatprep.subr.mxu0 0.0
    %2806 = vmatpush2.msra.mxu0 0.0
    %2807 = vmatprep.subr.mxu0 0.0
    %2808 = vmatpush2.msra.mxu0 0.0
    %2809 = vmatprep.subr.mxu0 0.0
    %2810 = vmatpush2.msra.mxu0 0.0
    %2811 = vmatprep.subr.mxu0 0.0
    %2812 = vmatpush2.msra.mxu0 0.0
    %2813 = vmatprep.subr.mxu0 0.0
    %2814 = vmatpush2.msra.mxu0 0.0
    %2815 = vmatprep.subr.mxu0 0.0
    %2816 = vmatpush2.msra.mxu0 0.0
    %2817 = vmatprep.subr.mxu0 0.0
    %2818 = vmatpush2.msra.mxu0 0.0
    %2819 = vmatprep.subr.mxu0 0.0
    %2820 = vmatpush2.msra.mxu0 0.0
    %2821 = vmatprep.subr.mxu0 0.0
    %2822 = vmatpush2.msra.mxu0 0.0
    %2823 = vmatprep.subr.mxu0 0.0
    %2824 = vmatpush2.msra.mxu0 0.0
    %2825 = vmatprep.subr.mxu0 0.0
    %2826 = vmatpush2.msra.mxu0 0.0
    %2827 = vmatprep.subr.mxu0 0.0
    %2828 = vmatpush2.msra.mxu0 0.0
    %2829 = vmatprep.mubr.f32.mxu0 0.0
    %2830 = vmatmul.mubr.f32.gmra.mxu0 0.0
    %v2831 = vpop.f32.mrf.mxu0
    %v2832 = vadd.f32 0.0, %v2831
    %v2833 = vpop.f32.mrf.mxu0
    %v2834 = vadd.f32 0.0, %v2833
    %2835 = vdwg.mxu0
    %2836 = vmatprep.subr.mxu0 %v2764
    %2837 = vmatpush1.msra.mxu0 %v2763
    %2838 = vmatprep.subr.mxu0 %v2760
    %2839 = vmatpush1.msra.mxu0 %v2759
    %2840 = vmatprep.subr.mxu0 %v2756
    %2841 = vmatpush1.msra.mxu0 %v2755
    %2842 = vmatprep.subr.mxu0 %v2752
    %2843 = vmatpush1.msra.mxu0 %v2751
    %2844 = vmatprep.subr.mxu0 %v2748
    %2845 = vmatpush1.msra.mxu0 %v2747
    %2846 = vmatprep.subr.mxu0 %v2744
    %2847 = vmatpush1.msra.mxu0 %v2743
    %2848 = vmatprep.subr.mxu0 %v2740
    %2849 = vmatpush1.msra.mxu0 %v2739
    %2850 = vmatprep.subr.mxu0 %v2736
    %2851 = vmatpush1.msra.mxu0 %v2735
    %2852 = vmatprep.subr.mxu0 %v2732
    %2853 = vmatpush1.msra.mxu0 %v2731
    %2854 = vmatprep.subr.mxu0 %v2728
    %2855 = vmatpush1.msra.mxu0 %v2727
    %2856 = vmatprep.subr.mxu0 %v2724
    %2857 = vmatpush1.msra.mxu0 %v2723
    %2858 = vmatprep.subr.mxu0 %v2720
    %2859 = vmatpush1.msra.mxu0 %v2719
    %2860 = vmatprep.subr.mxu0 %v2716
    %2861 = vmatpush1.msra.mxu0 %v2715
    %2862 = vmatprep.subr.mxu0 %v2712
    %2863 = vmatpush1.msra.mxu0 %v2711
    %2864 = vmatprep.subr.mxu0 %v2708
    %2865 = vmatpush1.msra.mxu0 %v2707
    %2866 = vmatprep.subr.mxu0 %v2704
    %2867 = vmatpush1.msra.mxu0 %v2703
    %2868 = vmatprep.subr.mxu0 0.0
    %2869 = vmatpush2.msra.mxu0 0.0
    %2870 = vmatprep.subr.mxu0 0.0
    %2871 = vmatpush2.msra.mxu0 0.0
    %2872 = vmatprep.subr.mxu0 0.0
    %2873 = vmatpush2.msra.mxu0 0.0
    %2874 = vmatprep.subr.mxu0 0.0
    %2875 = vmatpush2.msra.mxu0 0.0
    %2876 = vmatprep.subr.mxu0 0.0
    %2877 = vmatpush2.msra.mxu0 0.0
    %2878 = vmatprep.subr.mxu0 0.0
    %2879 = vmatpush2.msra.mxu0 0.0
    %2880 = vmatprep.subr.mxu0 0.0
    %2881 = vmatpush2.msra.mxu0 0.0
    %2882 = vmatprep.subr.mxu0 0.0
    %2883 = vmatpush2.msra.mxu0 0.0
    %2884 = vmatprep.subr.mxu0 0.0
    %2885 = vmatpush2.msra.mxu0 0.0
    %2886 = vmatprep.subr.mxu0 0.0
    %2887 = vmatpush2.msra.mxu0 0.0
    %2888 = vmatprep.subr.mxu0 0.0
    %2889 = vmatpush2.msra.mxu0 0.0
    %2890 = vmatprep.subr.mxu0 0.0
    %2891 = vmatpush2.msra.mxu0 0.0
    %2892 = vmatprep.subr.mxu0 0.0
    %2893 = vmatpush2.msra.mxu0 0.0
    %2894 = vmatprep.subr.mxu0 0.0
    %2895 = vmatpush2.msra.mxu0 0.0
    %2896 = vmatprep.subr.mxu0 0.0
    %2897 = vmatpush2.msra.mxu0 0.0
    %2898 = vmatprep.subr.mxu0 0.0
    %2899 = vmatpush2.msra.mxu0 0.0
    %2900 = vmatprep.mubr.f32.mxu0 0.0
    %2901 = vmatmul.mubr.f32.gmra.mxu0 0.0
    %v2902 = vpop.f32.mrf.mxu0
    %v2903 = vadd.f32 0.0, %v2902
    %v2904 = vpop.f32.mrf.mxu0
    %v2905 = vadd.f32 0.0, %v2904
    %2906 = vdwg.mxu0
    %v2907 = vadd.f32 %v2697, %v2832
    %v2908 = vadd.f32 %v2698, %v2834
    %v2909 = vadd.f32 %v2699, %v2903
    %v2910 = vadd.f32 %v2700, %v2905
    %v2911 = vxor.u32 %v2907, 2147483648
    %v2912 = vmul.f32 %v2911, 1.442695
    %v2913 = vpow.pop %v2912
    %v2914 = vadd.f32 %v2913, 1.0
    %v2915 = vrcp.pop %v2914
    %v2916 = vmul.f32 1.0, %v2915
    %v2917 = vxor.u32 %v2908, 2147483648
    %v2918 = vmul.f32 %v2917, 1.442695
    %v2919 = vpow.pop %v2918
    %v2920 = vadd.f32 %v2919, 1.0
    %v2921 = vrcp.pop %v2920
    %v2922 = vmul.f32 1.0, %v2921
    %v2923 = vtanh.pop %v2909
    %v2924 = vxor.u32 %v2910, 2147483648
    %v2925 = vmul.f32 %v2924, 1.442695
    %v2926 = vpow.pop %v2925
    %v2927 = vadd.f32 %v2926, 1.0
    %v2928 = vrcp.pop %v2927
    %v2929 = vmul.f32 1.0, %v2928
    %v2930 = vmul.f32 %v2922, 0.0
    %v2931 = vmul.f32 %v2916, %v2923
    %v2932 = vadd.f32 %v2930, %v2931
    %v2933 = vtanh.pop %v2932
    %v2934 = vmul.f32 %v2929, %v2933
    %v2935 = vld [vmem:[#allocation2 + $0x20] sm:$0xff]
    %v2936 = vld [vmem:[#allocation2 + $0x28] sm:$0xff]
    %v2937 = vld [vmem:[#allocation2 + $0x30] sm:$0xff]
    %v2938 = vld [vmem:[#allocation2 + $0x38] sm:$0xff]
    %2939 = vmatprep.subr.mxu0 %v2762
    %2940 = vmatpush1.msra.mxu0 %v2761
    %2941 = vmatprep.subr.mxu0 %v2758
    %2942 = vmatpush1.msra.mxu0 %v2757
    %2943 = vmatprep.subr.mxu0 %v2754
    %2944 = vmatpush1.msra.mxu0 %v2753
    %2945 = vmatprep.subr.mxu0 %v2750
    %2946 = vmatpush1.msra.mxu0 %v2749
    %2947 = vmatprep.subr.mxu0 %v2746
    %2948 = vmatpush1.msra.mxu0 %v2745
    %2949 = vmatprep.subr.mxu0 %v2742
    %2950 = vmatpush1.msra.mxu0 %v2741
    %2951 = vmatprep.subr.mxu0 %v2738
    %2952 = vmatpush1.msra.mxu0 %v2737
    %2953 = vmatprep.subr.mxu0 %v2734
    %2954 = vmatpush1.msra.mxu0 %v2733
    %2955 = vmatprep.subr.mxu0 %v2730
    %2956 = vmatpush1.msra.mxu0 %v2729
    %2957 = vmatprep.subr.mxu0 %v2726
    %2958 = vmatpush1.msra.mxu0 %v2725
    %2959 = vmatprep.subr.mxu0 %v2722
    %2960 = vmatpush1.msra.mxu0 %v2721
    %2961 = vmatprep.subr.mxu0 %v2718
    %2962 = vmatpush1.msra.mxu0 %v2717
    %2963 = vmatprep.subr.mxu0 %v2714
    %2964 = vmatpush1.msra.mxu0 %v2713
    %2965 = vmatprep.subr.mxu0 %v2710
    %2966 = vmatpush1.msra.mxu0 %v2709
    %2967 = vmatprep.subr.mxu0 %v2706
    %2968 = vmatpush1.msra.mxu0 %v2705
    %2969 = vmatprep.subr.mxu0 %v2702
    %2970 = vmatpush1.msra.mxu0 %v2701
    %2971 = vmatprep.subr.mxu0 0.0
    %2972 = vmatpush2.msra.mxu0 0.0
    %2973 = vmatprep.subr.mxu0 0.0
    %2974 = vmatpush2.msra.mxu0 0.0
    %2975 = vmatprep.subr.mxu0 0.0
    %2976 = vmatpush2.msra.mxu0 0.0
    %2977 = vmatprep.subr.mxu0 0.0
    %2978 = vmatpush2.msra.mxu0 0.0
    %2979 = vmatprep.subr.mxu0 0.0
    %2980 = vmatpush2.msra.mxu0 0.0
    %2981 = vmatprep.subr.mxu0 0.0
    %2982 = vmatpush2.msra.mxu0 0.0
    %2983 = vmatprep.subr.mxu0 0.0
    %2984 = vmatpush2.msra.mxu0 0.0
    %2985 = vmatprep.subr.mxu0 0.0
    %2986 = vmatpush2.msra.mxu0 0.0
    %2987 = vmatprep.subr.mxu0 0.0
    %2988 = vmatpush2.msra.mxu0 0.0
    %2989 = vmatprep.subr.mxu0 0.0
    %2990 = vmatpush2.msra.mxu0 0.0
    %2991 = vmatprep.subr.mxu0 0.0
    %2992 = vmatpush2.msra.mxu0 0.0
    %2993 = vmatprep.subr.mxu0 0.0
    %2994 = vmatpush2.msra.mxu0 0.0
    %2995 = vmatprep.subr.mxu0 0.0
    %2996 = vmatpush2.msra.mxu0 0.0
    %2997 = vmatprep.subr.mxu0 0.0
    %2998 = vmatpush2.msra.mxu0 0.0
    %2999 = vmatprep.subr.mxu0 0.0
    %3000 = vmatpush2.msra.mxu0 0.0
    %3001 = vmatprep.subr.mxu0 0.0
    %3002 = vmatpush2.msra.mxu0 0.0
    %3003 = vmatprep.mubr.f32.mxu0 0.0
    %3004 = vmatmul.mubr.f32.gmra.mxu0 %v2934
    %v3005 = vpop.f32.mrf.mxu0
    %v3006 = vadd.f32 0.0, %v3005
    %v3007 = vpop.f32.mrf.mxu0
    %v3008 = vadd.f32 0.0, %v3007
    %3009 = vdwg.mxu0
    %3010 = vmatprep.subr.mxu0 %v2764
    %3011 = vmatpush1.msra.mxu0 %v2763
    %3012 = vmatprep.subr.mxu0 %v2760
    %3013 = vmatpush1.msra.mxu0 %v2759
    %3014 = vmatprep.subr.mxu0 %v2756
    %3015 = vmatpush1.msra.mxu0 %v2755
    %3016 = vmatprep.subr.mxu0 %v2752
    %3017 = vmatpush1.msra.mxu0 %v2751
    %3018 = vmatprep.subr.mxu0 %v2748
    %3019 = vmatpush1.msra.mxu0 %v2747
    %3020 = vmatprep.subr.mxu0 %v2744
    %3021 = vmatpush1.msra.mxu0 %v2743
    %3022 = vmatprep.subr.mxu0 %v2740
    %3023 = vmatpush1.msra.mxu0 %v2739
    %3024 = vmatprep.subr.mxu0 %v2736
    %3025 = vmatpush1.msra.mxu0 %v2735
    %3026 = vmatprep.subr.mxu0 %v2732
    %3027 = vmatpush1.msra.mxu0 %v2731
    %3028 = vmatprep.subr.mxu0 %v2728
    %3029 = vmatpush1.msra.mxu0 %v2727
    %3030 = vmatprep.subr.mxu0 %v2724
    %3031 = vmatpush1.msra.mxu0 %v2723
    %3032 = vmatprep.subr.mxu0 %v2720
    %3033 = vmatpush1.msra.mxu0 %v2719
    %3034 = vmatprep.subr.mxu0 %v2716
    %3035 = vmatpush1.msra.mxu0 %v2715
    %3036 = vmatprep.subr.mxu0 %v2712
    %3037 = vmatpush1.msra.mxu0 %v2711
    %3038 = vmatprep.subr.mxu0 %v2708
    %3039 = vmatpush1.msra.mxu0 %v2707
    %3040 = vmatprep.subr.mxu0 %v2704
    %3041 = vmatpush1.msra.mxu0 %v2703
    %3042 = vmatprep.subr.mxu0 0.0
    %3043 = vmatpush2.msra.mxu0 0.0
    %3044 = vmatprep.subr.mxu0 0.0
    %3045 = vmatpush2.msra.mxu0 0.0
    %3046 = vmatprep.subr.mxu0 0.0
    %3047 = vmatpush2.msra.mxu0 0.0
    %3048 = vmatprep.subr.mxu0 0.0
    %3049 = vmatpush2.msra.mxu0 0.0
    %3050 = vmatprep.subr.mxu0 0.0
    %3051 = vmatpush2.msra.mxu0 0.0
    %3052 = vmatprep.subr.mxu0 0.0
    %3053 = vmatpush2.msra.mxu0 0.0
    %3054 = vmatprep.subr.mxu0 0.0
    %3055 = vmatpush2.msra.mxu0 0.0
    %3056 = vmatprep.subr.mxu0 0.0
    %3057 = vmatpush2.msra.mxu0 0.0
    %3058 = vmatprep.subr.mxu0 0.0
    %3059 = vmatpush2.msra.mxu0 0.0
    %3060 = vmatprep.subr.mxu0 0.0
    %3061 = vmatpush2.msra.mxu0 0.0
    %3062 = vmatprep.subr.mxu0 0.0
    %3063 = vmatpush2.msra.mxu0 0.0
    %3064 = vmatprep.subr.mxu0 0.0
    %3065 = vmatpush2.msra.mxu0 0.0
    %3066 = vmatprep.subr.mxu0 0.0
    %3067 = vmatpush2.msra.mxu0 0.0
    %3068 = vmatprep.subr.mxu0 0.0
    %3069 = vmatpush2.msra.mxu0 0.0
    %3070 = vmatprep.subr.mxu0 0.0
    %3071 = vmatpush2.msra.mxu0 0.0
    %3072 = vmatprep.subr.mxu0 0.0
    %3073 = vmatpush2.msra.mxu0 0.0
    %3074 = vmatprep.mubr.f32.mxu0 0.0
    %3075 = vmatmul.mubr.f32.gmra.mxu0 %v2934
    %v3076 = vpop.f32.mrf.mxu0
    %v3077 = vadd.f32 0.0, %v3076
    %v3078 = vpop.f32.mrf.mxu0
    %v3079 = vadd.f32 0.0, %v3078
    %3080 = vdwg.mxu0
    %v3081 = vadd.f32 %v2935, %v3006
    %v3082 = vadd.f32 %v2936, %v3008
    %v3083 = vadd.f32 %v2937, %v3077
    %v3084 = vadd.f32 %v2938, %v3079
    %v3085 = vxor.u32 %v3081, 2147483648
    %v3086 = vmul.f32 %v3085, 1.442695
    %v3087 = vpow.pop %v3086
    %v3088 = vadd.f32 %v3087, 1.0
    %v3089 = vrcp.pop %v3088
    %v3090 = vmul.f32 1.0, %v3089
    %v3091 = vxor.u32 %v3082, 2147483648
    %v3092 = vmul.f32 %v3091, 1.442695
    %v3093 = vpow.pop %v3092
    %v3094 = vadd.f32 %v3093, 1.0
    %v3095 = vrcp.pop %v3094
    %v3096 = vmul.f32 1.0, %v3095
    %v3097 = vtanh.pop %v3083
    %v3098 = vxor.u32 %v3084, 2147483648
    %v3099 = vmul.f32 %v3098, 1.442695
    %v3100 = vpow.pop %v3099
    %v3101 = vadd.f32 %v3100, 1.0
    %v3102 = vrcp.pop %v3101
    %v3103 = vmul.f32 1.0, %v3102
    %v3104 = vmul.f32 %v3096, %v2932
    %v3105 = vmul.f32 %v3090, %v3097
    %v3106 = vadd.f32 %v3104, %v3105
    %v3107 = vtanh.pop %v3106
    %v3108 = vmul.f32 %v3103, %v3107
    %v3109 = vld [vmem:[#allocation2 + $0x40] sm:$0xff]
    %v3110 = vld [vmem:[#allocation2 + $0x48] sm:$0xff]
    %v3111 = vld [vmem:[#allocation2 + $0x50] sm:$0xff]
    %v3112 = vld [vmem:[#allocation2 + $0x58] sm:$0xff]
    %3113 = vmatprep.subr.mxu0 %v2762
    %3114 = vmatpush1.msra.mxu0 %v2761
    %3115 = vmatprep.subr.mxu0 %v2758
    %3116 = vmatpush1.msra.mxu0 %v2757
    %3117 = vmatprep.subr.mxu0 %v2754
    %3118 = vmatpush1.msra.mxu0 %v2753
    %3119 = vmatprep.subr.mxu0 %v2750
    %3120 = vmatpush1.msra.mxu0 %v2749
    %3121 = vmatprep.subr.mxu0 %v2746
    %3122 = vmatpush1.msra.mxu0 %v2745
    %3123 = vmatprep.subr.mxu0 %v2742
    %3124 = vmatpush1.msra.mxu0 %v2741
    %3125 = vmatprep.subr.mxu0 %v2738
    %3126 = vmatpush1.msra.mxu0 %v2737
    %3127 = vmatprep.subr.mxu0 %v2734
    %3128 = vmatpush1.msra.mxu0 %v2733
    %3129 = vmatprep.subr.mxu0 %v2730
    %3130 = vmatpush1.msra.mxu0 %v2729
    %3131 = vmatprep.subr.mxu0 %v2726
    %3132 = vmatpush1.msra.mxu0 %v2725
    %3133 = vmatprep.subr.mxu0 %v2722
    %3134 = vmatpush1.msra.mxu0 %v2721
    %3135 = vmatprep.subr.mxu0 %v2718
    %3136 = vmatpush1.msra.mxu0 %v2717
    %3137 = vmatprep.subr.mxu0 %v2714
    %3138 = vmatpush1.msra.mxu0 %v2713
    %3139 = vmatprep.subr.mxu0 %v2710
    %3140 = vmatpush1.msra.mxu0 %v2709
    %3141 = vmatprep.subr.mxu0 %v2706
    %3142 = vmatpush1.msra.mxu0 %v2705
    %3143 = vmatprep.subr.mxu0 %v2702
    %3144 = vmatpush1.msra.mxu0 %v2701
    %3145 = vmatprep.subr.mxu0 0.0
    %3146 = vmatpush2.msra.mxu0 0.0
    %3147 = vmatprep.subr.mxu0 0.0
    %3148 = vmatpush2.msra.mxu0 0.0
    %3149 = vmatprep.subr.mxu0 0.0
    %3150 = vmatpush2.msra.mxu0 0.0
    %3151 = vmatprep.subr.mxu0 0.0
    %3152 = vmatpush2.msra.mxu0 0.0
    %3153 = vmatprep.subr.mxu0 0.0
    %3154 = vmatpush2.msra.mxu0 0.0
    %3155 = vmatprep.subr.mxu0 0.0
    %3156 = vmatpush2.msra.mxu0 0.0
    %3157 = vmatprep.subr.mxu0 0.0
    %3158 = vmatpush2.msra.mxu0 0.0
    %3159 = vmatprep.subr.mxu0 0.0
    %3160 = vmatpush2.msra.mxu0 0.0
    %3161 = vmatprep.subr.mxu0 0.0
    %3162 = vmatpush2.msra.mxu0 0.0
    %3163 = vmatprep.subr.mxu0 0.0
    %3164 = vmatpush2.msra.mxu0 0.0
    %3165 = vmatprep.subr.mxu0 0.0
    %3166 = vmatpush2.msra.mxu0 0.0
    %3167 = vmatprep.subr.mxu0 0.0
    %3168 = vmatpush2.msra.mxu0 0.0
    %3169 = vmatprep.subr.mxu0 0.0
    %3170 = vmatpush2.msra.mxu0 0.0
    %3171 = vmatprep.subr.mxu0 0.0
    %3172 = vmatpush2.msra.mxu0 0.0
    %3173 = vmatprep.subr.mxu0 0.0
    %3174 = vmatpush2.msra.mxu0 0.0
    %3175 = vmatprep.subr.mxu0 0.0
    %3176 = vmatpush2.msra.mxu0 0.0
    %3177 = vmatprep.mubr.f32.mxu0 0.0
    %3178 = vmatmul.mubr.f32.gmra.mxu0 %v3108
    %v3179 = vpop.f32.mrf.mxu0
    %v3180 = vadd.f32 0.0, %v3179
    %v3181 = vpop.f32.mrf.mxu0
    %v3182 = vadd.f32 0.0, %v3181
    %3183 = vdwg.mxu0
    %3184 = vmatprep.subr.mxu0 %v2764
    %3185 = vmatpush1.msra.mxu0 %v2763
    %3186 = vmatprep.subr.mxu0 %v2760
    %3187 = vmatpush1.msra.mxu0 %v2759
    %3188 = vmatprep.subr.mxu0 %v2756
    %3189 = vmatpush1.msra.mxu0 %v2755
    %3190 = vmatprep.subr.mxu0 %v2752
    %3191 = vmatpush1.msra.mxu0 %v2751
    %3192 = vmatprep.subr.mxu0 %v2748
    %3193 = vmatpush1.msra.mxu0 %v2747
    %3194 = vmatprep.subr.mxu0 %v2744
    %3195 = vmatpush1.msra.mxu0 %v2743
    %3196 = vmatprep.subr.mxu0 %v2740
    %3197 = vmatpush1.msra.mxu0 %v2739
    %3198 = vmatprep.subr.mxu0 %v2736
    %3199 = vmatpush1.msra.mxu0 %v2735
    %3200 = vmatprep.subr.mxu0 %v2732
    %3201 = vmatpush1.msra.mxu0 %v2731
    %3202 = vmatprep.subr.mxu0 %v2728
    %3203 = vmatpush1.msra.mxu0 %v2727
    %3204 = vmatprep.subr.mxu0 %v2724
    %3205 = vmatpush1.msra.mxu0 %v2723
    %3206 = vmatprep.subr.mxu0 %v2720
    %3207 = vmatpush1.msra.mxu0 %v2719
    %3208 = vmatprep.subr.mxu0 %v2716
    %3209 = vmatpush1.msra.mxu0 %v2715
    %3210 = vmatprep.subr.mxu0 %v2712
    %3211 = vmatpush1.msra.mxu0 %v2711
    %3212 = vmatprep.subr.mxu0 %v2708
    %3213 = vmatpush1.msra.mxu0 %v2707
    %3214 = vmatprep.subr.mxu0 %v2704
    %3215 = vmatpush1.msra.mxu0 %v2703
    %3216 = vmatprep.subr.mxu0 0.0
    %3217 = vmatpush2.msra.mxu0 0.0
    %3218 = vmatprep.subr.mxu0 0.0
    %3219 = vmatpush2.msra.mxu0 0.0
    %3220 = vmatprep.subr.mxu0 0.0
    %3221 = vmatpush2.msra.mxu0 0.0
    %3222 = vmatprep.subr.mxu0 0.0
    %3223 = vmatpush2.msra.mxu0 0.0
    %3224 = vmatprep.subr.mxu0 0.0
    %3225 = vmatpush2.msra.mxu0 0.0
    %3226 = vmatprep.subr.mxu0 0.0
    %3227 = vmatpush2.msra.mxu0 0.0
    %3228 = vmatprep.subr.mxu0 0.0
    %3229 = vmatpush2.msra.mxu0 0.0
    %3230 = vmatprep.subr.mxu0 0.0
    %3231 = vmatpush2.msra.mxu0 0.0
    %3232 = vmatprep.subr.mxu0 0.0
    %3233 = vmatpush2.msra.mxu0 0.0
    %3234 = vmatprep.subr.mxu0 0.0
    %3235 = vmatpush2.msra.mxu0 0.0
    %3236 = vmatprep.subr.mxu0 0.0
    %3237 = vmatpush2.msra.mxu0 0.0
    %3238 = vmatprep.subr.mxu0 0.0
    %3239 = vmatpush2.msra.mxu0 0.0
    %3240 = vmatprep.subr.mxu0 0.0
    %3241 = vmatpush2.msra.mxu0 0.0
    %3242 = vmatprep.subr.mxu0 0.0
    %3243 = vmatpush2.msra.mxu0 0.0
    %3244 = vmatprep.subr.mxu0 0.0
    %3245 = vmatpush2.msra.mxu0 0.0
    %3246 = vmatprep.subr.mxu0 0.0
    %3247 = vmatpush2.msra.mxu0 0.0
    %3248 = vmatprep.mubr.f32.mxu0 0.0
    %3249 = vmatmul.mubr.f32.gmra.mxu0 %v3108
    %v3250 = vpop.f32.mrf.mxu0
    %v3251 = vadd.f32 0.0, %v3250
    %v3252 = vpop.f32.mrf.mxu0
    %v3253 = vadd.f32 0.0, %v3252
    %3254 = vdwg.mxu0
    %v3255 = vadd.f32 %v3109, %v3180
    %v3256 = vadd.f32 %v3110, %v3182
    %v3257 = vadd.f32 %v3111, %v3251
    %v3258 = vadd.f32 %v3112, %v3253
    %v3259 = vxor.u32 %v3255, 2147483648
    %v3260 = vmul.f32 %v3259, 1.442695
    %v3261 = vpow.pop %v3260
    %v3262 = vadd.f32 %v3261, 1.0
    %v3263 = vrcp.pop %v3262
    %v3264 = vmul.f32 1.0, %v3263
    %v3265 = vxor.u32 %v3256, 2147483648
    %v3266 = vmul.f32 %v3265, 1.442695
    %v3267 = vpow.pop %v3266
    %v3268 = vadd.f32 %v3267, 1.0
    %v3269 = vrcp.pop %v3268
    %v3270 = vmul.f32 1.0, %v3269
    %v3271 = vtanh.pop %v3257
    %v3272 = vxor.u32 %v3258, 2147483648
    %v3273 = vmul.f32 %v3272, 1.442695
    %v3274 = vpow.pop %v3273
    %v3275 = vadd.f32 %v3274, 1.0
    %v3276 = vrcp.pop %v3275
    %v3277 = vmul.f32 1.0, %v3276
    %v3278 = vmul.f32 %v3270, %v3106
    %v3279 = vmul.f32 %v3264, %v3271
    %v3280 = vadd.f32 %v3278, %v3279
    %v3281 = vtanh.pop %v3280
    %v3282 = vmul.f32 %v3277, %v3281
    %v3283 = vld [vmem:[#allocation2 + $0x60] sm:$0xff]
    %v3284 = vld [vmem:[#allocation2 + $0x68] sm:$0xff]
    %v3285 = vld [vmem:[#allocation2 + $0x70] sm:$0xff]
    %v3286 = vld [vmem:[#allocation2 + $0x78] sm:$0xff]
    %3287 = vmatprep.subr.mxu0 %v2762
    %3288 = vmatpush1.msra.mxu0 %v2761
    %3289 = vmatprep.subr.mxu0 %v2758
    %3290 = vmatpush1.msra.mxu0 %v2757
    %3291 = vmatprep.subr.mxu0 %v2754
    %3292 = vmatpush1.msra.mxu0 %v2753
    %3293 = vmatprep.subr.mxu0 %v2750
    %3294 = vmatpush1.msra.mxu0 %v2749
    %3295 = vmatprep.subr.mxu0 %v2746
    %3296 = vmatpush1.msra.mxu0 %v2745
    %3297 = vmatprep.subr.mxu0 %v2742
    %3298 = vmatpush1.msra.mxu0 %v2741
    %3299 = vmatprep.subr.mxu0 %v2738
    %3300 = vmatpush1.msra.mxu0 %v2737
    %3301 = vmatprep.subr.mxu0 %v2734
    %3302 = vmatpush1.msra.mxu0 %v2733
    %3303 = vmatprep.subr.mxu0 %v2730
    %3304 = vmatpush1.msra.mxu0 %v2729
    %3305 = vmatprep.subr.mxu0 %v2726
    %3306 = vmatpush1.msra.mxu0 %v2725
    %3307 = vmatprep.subr.mxu0 %v2722
    %3308 = vmatpush1.msra.mxu0 %v2721
    %3309 = vmatprep.subr.mxu0 %v2718
    %3310 = vmatpush1.msra.mxu0 %v2717
    %3311 = vmatprep.subr.mxu0 %v2714
    %3312 = vmatpush1.msra.mxu0 %v2713
    %3313 = vmatprep.subr.mxu0 %v2710
    %3314 = vmatpush1.msra.mxu0 %v2709
    %3315 = vmatprep.subr.mxu0 %v2706
    %3316 = vmatpush1.msra.mxu0 %v2705
    %3317 = vmatprep.subr.mxu0 %v2702
    %3318 = vmatpush1.msra.mxu0 %v2701
    %3319 = vmatprep.subr.mxu0 0.0
    %3320 = vmatpush2.msra.mxu0 0.0
    %3321 = vmatprep.subr.mxu0 0.0
    %3322 = vmatpush2.msra.mxu0 0.0
    %3323 = vmatprep.subr.mxu0 0.0
    %3324 = vmatpush2.msra.mxu0 0.0
    %3325 = vmatprep.subr.mxu0 0.0
    %3326 = vmatpush2.msra.mxu0 0.0
    %3327 = vmatprep.subr.mxu0 0.0
    %3328 = vmatpush2.msra.mxu0 0.0
    %3329 = vmatprep.subr.mxu0 0.0
    %3330 = vmatpush2.msra.mxu0 0.0
    %3331 = vmatprep.subr.mxu0 0.0
    %3332 = vmatpush2.msra.mxu0 0.0
    %3333 = vmatprep.subr.mxu0 0.0
    %3334 = vmatpush2.msra.mxu0 0.0
    %3335 = vmatprep.subr.mxu0 0.0
    %3336 = vmatpush2.msra.mxu0 0.0
    %3337 = vmatprep.subr.mxu0 0.0
    %3338 = vmatpush2.msra.mxu0 0.0
    %3339 = vmatprep.subr.mxu0 0.0
    %3340 = vmatpush2.msra.mxu0 0.0
    %3341 = vmatprep.subr.mxu0 0.0
    %3342 = vmatpush2.msra.mxu0 0.0
    %3343 = vmatprep.subr.mxu0 0.0
    %3344 = vmatpush2.msra.mxu0 0.0
    %3345 = vmatprep.subr.mxu0 0.0
    %3346 = vmatpush2.msra.mxu0 0.0
    %3347 = vmatprep.subr.mxu0 0.0
    %3348 = vmatpush2.msra.mxu0 0.0
    %3349 = vmatprep.subr.mxu0 0.0
    %3350 = vmatpush2.msra.mxu0 0.0
    %3351 = vmatprep.mubr.f32.mxu0 0.0
    %3352 = vmatmul.mubr.f32.gmra.mxu0 %v3282
    %v3353 = vpop.f32.mrf.mxu0
    %v3354 = vadd.f32 0.0, %v3353
    %v3355 = vpop.f32.mrf.mxu0
    %v3356 = vadd.f32 0.0, %v3355
    %3357 = vdwg.mxu0
    %3358 = vmatprep.subr.mxu0 %v2764
    %3359 = vmatpush1.msra.mxu0 %v2763
    %3360 = vmatprep.subr.mxu0 %v2760
    %3361 = vmatpush1.msra.mxu0 %v2759
    %3362 = vmatprep.subr.mxu0 %v2756
    %3363 = vmatpush1.msra.mxu0 %v2755
    %3364 = vmatprep.subr.mxu0 %v2752
    %3365 = vmatpush1.msra.mxu0 %v2751
    %3366 = vmatprep.subr.mxu0 %v2748
    %3367 = vmatpush1.msra.mxu0 %v2747
    %3368 = vmatprep.subr.mxu0 %v2744
    %3369 = vmatpush1.msra.mxu0 %v2743
    %3370 = vmatprep.subr.mxu0 %v2740
    %3371 = vmatpush1.msra.mxu0 %v2739
    %3372 = vmatprep.subr.mxu0 %v2736
    %3373 = vmatpush1.msra.mxu0 %v2735
    %3374 = vmatprep.subr.mxu0 %v2732
    %3375 = vmatpush1.msra.mxu0 %v2731
    %3376 = vmatprep.subr.mxu0 %v2728
    %3377 = vmatpush1.msra.mxu0 %v2727
    %3378 = vmatprep.subr.mxu0 %v2724
    %3379 = vmatpush1.msra.mxu0 %v2723
    %3380 = vmatprep.subr.mxu0 %v2720
    %3381 = vmatpush1.msra.mxu0 %v2719
    %3382 = vmatprep.subr.mxu0 %v2716
    %3383 = vmatpush1.msra.mxu0 %v2715
    %3384 = vmatprep.subr.mxu0 %v2712
    %3385 = vmatpush1.msra.mxu0 %v2711
    %3386 = vmatprep.subr.mxu0 %v2708
    %3387 = vmatpush1.msra.mxu0 %v2707
    %3388 = vmatprep.subr.mxu0 %v2704
    %3389 = vmatpush1.msra.mxu0 %v2703
    %3390 = vmatprep.subr.mxu0 0.0
    %3391 = vmatpush2.msra.mxu0 0.0
    %3392 = vmatprep.subr.mxu0 0.0
    %3393 = vmatpush2.msra.mxu0 0.0
    %3394 = vmatprep.subr.mxu0 0.0
    %3395 = vmatpush2.msra.mxu0 0.0
    %3396 = vmatprep.subr.mxu0 0.0
    %3397 = vmatpush2.msra.mxu0 0.0
    %3398 = vmatprep.subr.mxu0 0.0
    %3399 = vmatpush2.msra.mxu0 0.0
    %3400 = vmatprep.subr.mxu0 0.0
    %3401 = vmatpush2.msra.mxu0 0.0
    %3402 = vmatprep.subr.mxu0 0.0
    %3403 = vmatpush2.msra.mxu0 0.0
    %3404 = vmatprep.subr.mxu0 0.0
    %3405 = vmatpush2.msra.mxu0 0.0
    %3406 = vmatprep.subr.mxu0 0.0
    %3407 = vmatpush2.msra.mxu0 0.0
    %3408 = vmatprep.subr.mxu0 0.0
    %3409 = vmatpush2.msra.mxu0 0.0
    %3410 = vmatprep.subr.mxu0 0.0
    %3411 = vmatpush2.msra.mxu0 0.0
    %3412 = vmatprep.subr.mxu0 0.0
    %3413 = vmatpush2.msra.mxu0 0.0
    %3414 = vmatprep.subr.mxu0 0.0
    %3415 = vmatpush2.msra.mxu0 0.0
    %3416 = vmatprep.subr.mxu0 0.0
    %3417 = vmatpush2.msra.mxu0 0.0
    %3418 = vmatprep.subr.mxu0 0.0
    %3419 = vmatpush2.msra.mxu0 0.0
    %3420 = vmatprep.subr.mxu0 0.0
    %3421 = vmatpush2.msra.mxu0 0.0
    %3422 = vmatprep.mubr.f32.mxu0 0.0
    %3423 = vmatmul.mubr.f32.gmra.mxu0 %v3282
    %v3424 = vpop.f32.mrf.mxu0
    %v3425 = vadd.f32 0.0, %v3424
    %v3426 = vpop.f32.mrf.mxu0
    %v3427 = vadd.f32 0.0, %v3426
    %3428 = vdwg.mxu0
    %v3429 = vadd.f32 %v3283, %v3354
    %v3430 = vadd.f32 %v3284, %v3356
    %v3431 = vadd.f32 %v3285, %v3425
    %v3432 = vadd.f32 %v3286, %v3427
    %v3433 = vxor.u32 %v3429, 2147483648
    %v3434 = vmul.f32 %v3433, 1.442695
    %v3435 = vpow.pop %v3434
    %v3436 = vadd.f32 %v3435, 1.0
    %v3437 = vrcp.pop %v3436
    %v3438 = vmul.f32 1.0, %v3437
    %v3439 = vxor.u32 %v3430, 2147483648
    %v3440 = vmul.f32 %v3439, 1.442695
    %v3441 = vpow.pop %v3440
    %v3442 = vadd.f32 %v3441, 1.0
    %v3443 = vrcp.pop %v3442
    %v3444 = vmul.f32 1.0, %v3443
    %v3445 = vtanh.pop %v3431
    %v3446 = vxor.u32 %v3432, 2147483648
    %v3447 = vmul.f32 %v3446, 1.442695
    %v3448 = vpow.pop %v3447
    %v3449 = vadd.f32 %v3448, 1.0
    %v3450 = vrcp.pop %v3449
    %v3451 = vmul.f32 1.0, %v3450
    %v3452 = vmul.f32 %v3444, %v3280
    %v3453 = vmul.f32 %v3438, %v3445
    %v3454 = vadd.f32 %v3452, %v3453
    %v3455 = vtanh.pop %v3454
    %v3456 = vmul.f32 %v3451, %v3455
    %v3457 = vld [vmem:[#allocation2 + $0x80] sm:$0xff]
    %v3458 = vld [vmem:[#allocation2 + $0x88] sm:$0xff]
    %v3459 = vld [vmem:[#allocation2 + $0x90] sm:$0xff]
    %v3460 = vld [vmem:[#allocation2 + $0x98] sm:$0xff]
    %3461 = vmatprep.subr.mxu0 %v2762
    %3462 = vmatpush1.msra.mxu0 %v2761
    %3463 = vmatprep.subr.mxu0 %v2758
    %3464 = vmatpush1.msra.mxu0 %v2757
    %3465 = vmatprep.subr.mxu0 %v2754
    %3466 = vmatpush1.msra.mxu0 %v2753
    %3467 = vmatprep.subr.mxu0 %v2750
    %3468 = vmatpush1.msra.mxu0 %v2749
    %3469 = vmatprep.subr.mxu0 %v2746
    %3470 = vmatpush1.msra.mxu0 %v2745
    %3471 = vmatprep.subr.mxu0 %v2742
    %3472 = vmatpush1.msra.mxu0 %v2741
    %3473 = vmatprep.subr.mxu0 %v2738
    %3474 = vmatpush1.msra.mxu0 %v2737
    %3475 = vmatprep.subr.mxu0 %v2734
    %3476 = vmatpush1.msra.mxu0 %v2733
    %3477 = vmatprep.subr.mxu0 %v2730
    %3478 = vmatpush1.msra.mxu0 %v2729
    %3479 = vmatprep.subr.mxu0 %v2726
    %3480 = vmatpush1.msra.mxu0 %v2725
    %3481 = vmatprep.subr.mxu0 %v2722
    %3482 = vmatpush1.msra.mxu0 %v2721
    %3483 = vmatprep.subr.mxu0 %v2718
    %3484 = vmatpush1.msra.mxu0 %v2717
    %3485 = vmatprep.subr.mxu0 %v2714
    %3486 = vmatpush1.msra.mxu0 %v2713
    %3487 = vmatprep.subr.mxu0 %v2710
    %3488 = vmatpush1.msra.mxu0 %v2709
    %3489 = vmatprep.subr.mxu0 %v2706
    %3490 = vmatpush1.msra.mxu0 %v2705
    %3491 = vmatprep.subr.mxu0 %v2702
    %3492 = vmatpush1.msra.mxu0 %v2701
    %3493 = vmatprep.subr.mxu0 0.0
    %3494 = vmatpush2.msra.mxu0 0.0
    %3495 = vmatprep.subr.mxu0 0.0
    %3496 = vmatpush2.msra.mxu0 0.0
    %3497 = vmatprep.subr.mxu0 0.0
    %3498 = vmatpush2.msra.mxu0 0.0
    %3499 = vmatprep.subr.mxu0 0.0
    %3500 = vmatpush2.msra.mxu0 0.0
    %3501 = vmatprep.subr.mxu0 0.0
    %3502 = vmatpush2.msra.mxu0 0.0
    %3503 = vmatprep.subr.mxu0 0.0
    %3504 = vmatpush2.msra.mxu0 0.0
    %3505 = vmatprep.subr.mxu0 0.0
    %3506 = vmatpush2.msra.mxu0 0.0
    %3507 = vmatprep.subr.mxu0 0.0
    %3508 = vmatpush2.msra.mxu0 0.0
    %3509 = vmatprep.subr.mxu0 0.0
    %3510 = vmatpush2.msra.mxu0 0.0
    %3511 = vmatprep.subr.mxu0 0.0
    %3512 = vmatpush2.msra.mxu0 0.0
    %3513 = vmatprep.subr.mxu0 0.0
    %3514 = vmatpush2.msra.mxu0 0.0
    %3515 = vmatprep.subr.mxu0 0.0
    %3516 = vmatpush2.msra.mxu0 0.0
    %3517 = vmatprep.subr.mxu0 0.0
    %3518 = vmatpush2.msra.mxu0 0.0
    %3519 = vmatprep.subr.mxu0 0.0
    %3520 = vmatpush2.msra.mxu0 0.0
    %3521 = vmatprep.subr.mxu0 0.0
    %3522 = vmatpush2.msra.mxu0 0.0
    %3523 = vmatprep.subr.mxu0 0.0
    %3524 = vmatpush2.msra.mxu0 0.0
    %3525 = vmatprep.mubr.f32.mxu0 0.0
    %3526 = vmatmul.mubr.f32.gmra.mxu0 %v3456
    %v3527 = vpop.f32.mrf.mxu0
    %v3528 = vadd.f32 0.0, %v3527
    %v3529 = vpop.f32.mrf.mxu0
    %v3530 = vadd.f32 0.0, %v3529
    %3531 = vdwg.mxu0
    %3532 = vmatprep.subr.mxu0 %v2764
    %3533 = vmatpush1.msra.mxu0 %v2763
    %3534 = vmatprep.subr.mxu0 %v2760
    %3535 = vmatpush1.msra.mxu0 %v2759
    %3536 = vmatprep.subr.mxu0 %v2756
    %3537 = vmatpush1.msra.mxu0 %v2755
    %3538 = vmatprep.subr.mxu0 %v2752
    %3539 = vmatpush1.msra.mxu0 %v2751
    %3540 = vmatprep.subr.mxu0 %v2748
    %3541 = vmatpush1.msra.mxu0 %v2747
    %3542 = vmatprep.subr.mxu0 %v2744
    %3543 = vmatpush1.msra.mxu0 %v2743
    %3544 = vmatprep.subr.mxu0 %v2740
    %3545 = vmatpush1.msra.mxu0 %v2739
    %3546 = vmatprep.subr.mxu0 %v2736
    %3547 = vmatpush1.msra.mxu0 %v2735
    %3548 = vmatprep.subr.mxu0 %v2732
    %3549 = vmatpush1.msra.mxu0 %v2731
    %3550 = vmatprep.subr.mxu0 %v2728
    %3551 = vmatpush1.msra.mxu0 %v2727
    %3552 = vmatprep.subr.mxu0 %v2724
    %3553 = vmatpush1.msra.mxu0 %v2723
    %3554 = vmatprep.subr.mxu0 %v2720
    %3555 = vmatpush1.msra.mxu0 %v2719
    %3556 = vmatprep.subr.mxu0 %v2716
    %3557 = vmatpush1.msra.mxu0 %v2715
    %3558 = vmatprep.subr.mxu0 %v2712
    %3559 = vmatpush1.msra.mxu0 %v2711
    %3560 = vmatprep.subr.mxu0 %v2708
    %3561 = vmatpush1.msra.mxu0 %v2707
    %3562 = vmatprep.subr.mxu0 %v2704
    %3563 = vmatpush1.msra.mxu0 %v2703
    %3564 = vmatprep.subr.mxu0 0.0
    %3565 = vmatpush2.msra.mxu0 0.0
    %3566 = vmatprep.subr.mxu0 0.0
    %3567 = vmatpush2.msra.mxu0 0.0
    %3568 = vmatprep.subr.mxu0 0.0
    %3569 = vmatpush2.msra.mxu0 0.0
    %3570 = vmatprep.subr.mxu0 0.0
    %3571 = vmatpush2.msra.mxu0 0.0
    %3572 = vmatprep.subr.mxu0 0.0
    %3573 = vmatpush2.msra.mxu0 0.0
    %3574 = vmatprep.subr.mxu0 0.0
    %3575 = vmatpush2.msra.mxu0 0.0
    %3576 = vmatprep.subr.mxu0 0.0
    %3577 = vmatpush2.msra.mxu0 0.0
    %3578 = vmatprep.subr.mxu0 0.0
    %3579 = vmatpush2.msra.mxu0 0.0
    %3580 = vmatprep.subr.mxu0 0.0
    %3581 = vmatpush2.msra.mxu0 0.0
    %3582 = vmatprep.subr.mxu0 0.0
    %3583 = vmatpush2.msra.mxu0 0.0
    %3584 = vmatprep.subr.mxu0 0.0
    %3585 = vmatpush2.msra.mxu0 0.0
    %3586 = vmatprep.subr.mxu0 0.0
    %3587 = vmatpush2.msra.mxu0 0.0
    %3588 = vmatprep.subr.mxu0 0.0
    %3589 = vmatpush2.msra.mxu0 0.0
    %3590 = vmatprep.subr.mxu0 0.0
    %3591 = vmatpush2.msra.mxu0 0.0
    %3592 = vmatprep.subr.mxu0 0.0
    %3593 = vmatpush2.msra.mxu0 0.0
    %3594 = vmatprep.subr.mxu0 0.0
    %3595 = vmatpush2.msra.mxu0 0.0
    %3596 = vmatprep.mubr.f32.mxu0 0.0
    %3597 = vmatmul.mubr.f32.gmra.mxu0 %v3456
    %v3598 = vpop.f32.mrf.mxu0
    %v3599 = vadd.f32 0.0, %v3598
    %v3600 = vpop.f32.mrf.mxu0
    %v3601 = vadd.f32 0.0, %v3600
    %3602 = vdwg.mxu0
    %v3603 = vadd.f32 %v3457, %v3528
    %v3604 = vadd.f32 %v3458, %v3530
    %v3605 = vadd.f32 %v3459, %v3599
    %v3606 = vadd.f32 %v3460, %v3601
    %v3607 = vxor.u32 %v3603, 2147483648
    %v3608 = vmul.f32 %v3607, 1.442695
    %v3609 = vpow.pop %v3608
    %v3610 = vadd.f32 %v3609, 1.0
    %v3611 = vrcp.pop %v3610
    %v3612 = vmul.f32 1.0, %v3611
    %v3613 = vxor.u32 %v3604, 2147483648
    %v3614 = vmul.f32 %v3613, 1.442695
    %v3615 = vpow.pop %v3614
    %v3616 = vadd.f32 %v3615, 1.0
    %v3617 = vrcp.pop %v3616
    %v3618 = vmul.f32 1.0, %v3617
    %v3619 = vtanh.pop %v3605
    %v3620 = vxor.u32 %v3606, 2147483648
    %v3621 = vmul.f32 %v3620, 1.442695
    %v3622 = vpow.pop %v3621
    %v3623 = vadd.f32 %v3622, 1.0
    %v3624 = vrcp.pop %v3623
    %v3625 = vmul.f32 1.0, %v3624
    %v3626 = vmul.f32 %v3618, %v3454
    %v3627 = vmul.f32 %v3612, %v3619
    %v3628 = vadd.f32 %v3626, %v3627
    %v3629 = vtanh.pop %v3628
    %v3630 = vmul.f32 %v3625, %v3629
    %v3631 = vld [vmem:[#allocation2 + $0xa0] sm:$0xff]
    %v3632 = vld [vmem:[#allocation2 + $0xa8] sm:$0xff]
    %v3633 = vld [vmem:[#allocation2 + $0xb0] sm:$0xff]
    %v3634 = vld [vmem:[#allocation2 + $0xb8] sm:$0xff]
    %3635 = vmatprep.subr.mxu0 %v2762
    %3636 = vmatpush1.msra.mxu0 %v2761
    %3637 = vmatprep.subr.mxu0 %v2758
    %3638 = vmatpush1.msra.mxu0 %v2757
    %3639 = vmatprep.subr.mxu0 %v2754
    %3640 = vmatpush1.msra.mxu0 %v2753
    %3641 = vmatprep.subr.mxu0 %v2750
    %3642 = vmatpush1.msra.mxu0 %v2749
    %3643 = vmatprep.subr.mxu0 %v2746
    %3644 = vmatpush1.msra.mxu0 %v2745
    %3645 = vmatprep.subr.mxu0 %v2742
    %3646 = vmatpush1.msra.mxu0 %v2741
    %3647 = vmatprep.subr.mxu0 %v2738
    %3648 = vmatpush1.msra.mxu0 %v2737
    %3649 = vmatprep.subr.mxu0 %v2734
    %3650 = vmatpush1.msra.mxu0 %v2733
    %3651 = vmatprep.subr.mxu0 %v2730
    %3652 = vmatpush1.msra.mxu0 %v2729
    %3653 = vmatprep.subr.mxu0 %v2726
    %3654 = vmatpush1.msra.mxu0 %v2725
    %3655 = vmatprep.subr.mxu0 %v2722
    %3656 = vmatpush1.msra.mxu0 %v2721
    %3657 = vmatprep.subr.mxu0 %v2718
    %3658 = vmatpush1.msra.mxu0 %v2717
    %3659 = vmatprep.subr.mxu0 %v2714
    %3660 = vmatpush1.msra.mxu0 %v2713
    %3661 = vmatprep.subr.mxu0 %v2710
    %3662 = vmatpush1.msra.mxu0 %v2709
    %3663 = vmatprep.subr.mxu0 %v2706
    %3664 = vmatpush1.msra.mxu0 %v2705
    %3665 = vmatprep.subr.mxu0 %v2702
    %3666 = vmatpush1.msra.mxu0 %v2701
    %3667 = vmatprep.subr.mxu0 0.0
    %3668 = vmatpush2.msra.mxu0 0.0
    %3669 = vmatprep.subr.mxu0 0.0
    %3670 = vmatpush2.msra.mxu0 0.0
    %3671 = vmatprep.subr.mxu0 0.0
    %3672 = vmatpush2.msra.mxu0 0.0
    %3673 = vmatprep.subr.mxu0 0.0
    %3674 = vmatpush2.msra.mxu0 0.0
    %3675 = vmatprep.subr.mxu0 0.0
    %3676 = vmatpush2.msra.mxu0 0.0
    %3677 = vmatprep.subr.mxu0 0.0
    %3678 = vmatpush2.msra.mxu0 0.0
    %3679 = vmatprep.subr.mxu0 0.0
    %3680 = vmatpush2.msra.mxu0 0.0
    %3681 = vmatprep.subr.mxu0 0.0
    %3682 = vmatpush2.msra.mxu0 0.0
    %3683 = vmatprep.subr.mxu0 0.0
    %3684 = vmatpush2.msra.mxu0 0.0
    %3685 = vmatprep.subr.mxu0 0.0
    %3686 = vmatpush2.msra.mxu0 0.0
    %3687 = vmatprep.subr.mxu0 0.0
    %3688 = vmatpush2.msra.mxu0 0.0
    %3689 = vmatprep.subr.mxu0 0.0
    %3690 = vmatpush2.msra.mxu0 0.0
    %3691 = vmatprep.subr.mxu0 0.0
    %3692 = vmatpush2.msra.mxu0 0.0
    %3693 = vmatprep.subr.mxu0 0.0
    %3694 = vmatpush2.msra.mxu0 0.0
    %3695 = vmatprep.subr.mxu0 0.0
    %3696 = vmatpush2.msra.mxu0 0.0
    %3697 = vmatprep.subr.mxu0 0.0
    %3698 = vmatpush2.msra.mxu0 0.0
    %3699 = vmatprep.mubr.f32.mxu0 0.0
    %3700 = vmatmul.mubr.f32.gmra.mxu0 %v3630
    %v3701 = vpop.f32.mrf.mxu0
    %v3702 = vadd.f32 0.0, %v3701
    %v3703 = vpop.f32.mrf.mxu0
    %v3704 = vadd.f32 0.0, %v3703
    %3705 = vdwg.mxu0
    %3706 = vmatprep.subr.mxu0 %v2764
    %3707 = vmatpush1.msra.mxu0 %v2763
    %3708 = vmatprep.subr.mxu0 %v2760
    %3709 = vmatpush1.msra.mxu0 %v2759
    %3710 = vmatprep.subr.mxu0 %v2756
    %3711 = vmatpush1.msra.mxu0 %v2755
    %3712 = vmatprep.subr.mxu0 %v2752
    %3713 = vmatpush1.msra.mxu0 %v2751
    %3714 = vmatprep.subr.mxu0 %v2748
    %3715 = vmatpush1.msra.mxu0 %v2747
    %3716 = vmatprep.subr.mxu0 %v2744
    %3717 = vmatpush1.msra.mxu0 %v2743
    %3718 = vmatprep.subr.mxu0 %v2740
    %3719 = vmatpush1.msra.mxu0 %v2739
    %3720 = vmatprep.subr.mxu0 %v2736
    %3721 = vmatpush1.msra.mxu0 %v2735
    %3722 = vmatprep.subr.mxu0 %v2732
    %3723 = vmatpush1.msra.mxu0 %v2731
    %3724 = vmatprep.subr.mxu0 %v2728
    %3725 = vmatpush1.msra.mxu0 %v2727
    %3726 = vmatprep.subr.mxu0 %v2724
    %3727 = vmatpush1.msra.mxu0 %v2723
    %3728 = vmatprep.subr.mxu0 %v2720
    %3729 = vmatpush1.msra.mxu0 %v2719
    %3730 = vmatprep.subr.mxu0 %v2716
    %3731 = vmatpush1.msra.mxu0 %v2715
    %3732 = vmatprep.subr.mxu0 %v2712
    %3733 = vmatpush1.msra.mxu0 %v2711
    %3734 = vmatprep.subr.mxu0 %v2708
    %3735 = vmatpush1.msra.mxu0 %v2707
    %3736 = vmatprep.subr.mxu0 %v2704
    %3737 = vmatpush1.msra.mxu0 %v2703
    %3738 = vmatprep.subr.mxu0 0.0
    %3739 = vmatpush2.msra.mxu0 0.0
    %3740 = vmatprep.subr.mxu0 0.0
    %3741 = vmatpush2.msra.mxu0 0.0
    %3742 = vmatprep.subr.mxu0 0.0
    %3743 = vmatpush2.msra.mxu0 0.0
    %3744 = vmatprep.subr.mxu0 0.0
    %3745 = vmatpush2.msra.mxu0 0.0
    %3746 = vmatprep.subr.mxu0 0.0
    %3747 = vmatpush2.msra.mxu0 0.0
    %3748 = vmatprep.subr.mxu0 0.0
    %3749 = vmatpush2.msra.mxu0 0.0
    %3750 = vmatprep.subr.mxu0 0.0
    %3751 = vmatpush2.msra.mxu0 0.0
    %3752 = vmatprep.subr.mxu0 0.0
    %3753 = vmatpush2.msra.mxu0 0.0
    %3754 = vmatprep.subr.mxu0 0.0
    %3755 = vmatpush2.msra.mxu0 0.0
    %3756 = vmatprep.subr.mxu0 0.0
    %3757 = vmatpush2.msra.mxu0 0.0
    %3758 = vmatprep.subr.mxu0 0.0
    %3759 = vmatpush2.msra.mxu0 0.0
    %3760 = vmatprep.subr.mxu0 0.0
    %3761 = vmatpush2.msra.mxu0 0.0
    %3762 = vmatprep.subr.mxu0 0.0
    %3763 = vmatpush2.msra.mxu0 0.0
    %3764 = vmatprep.subr.mxu0 0.0
    %3765 = vmatpush2.msra.mxu0 0.0
    %3766 = vmatprep.subr.mxu0 0.0
    %3767 = vmatpush2.msra.mxu0 0.0
    %3768 = vmatprep.subr.mxu0 0.0
    %3769 = vmatpush2.msra.mxu0 0.0
    %3770 = vmatprep.mubr.f32.mxu0 0.0
    %3771 = vmatmul.mubr.f32.gmra.mxu0 %v3630
    %v3772 = vpop.f32.mrf.mxu0
    %v3773 = vadd.f32 0.0, %v3772
    %v3774 = vpop.f32.mrf.mxu0
    %v3775 = vadd.f32 0.0, %v3774
    %3776 = vdwg.mxu0
    %v3777 = vadd.f32 %v3631, %v3702
    %v3778 = vadd.f32 %v3632, %v3704
    %v3779 = vadd.f32 %v3633, %v3773
    %v3780 = vadd.f32 %v3634, %v3775
    %v3781 = vxor.u32 %v3777, 2147483648
    %v3782 = vmul.f32 %v3781, 1.442695
    %v3783 = vpow.pop %v3782
    %v3784 = vadd.f32 %v3783, 1.0
    %v3785 = vrcp.pop %v3784
    %v3786 = vmul.f32 1.0, %v3785
    %v3787 = vxor.u32 %v3778, 2147483648
    %v3788 = vmul.f32 %v3787, 1.442695
    %v3789 = vpow.pop %v3788
    %v3790 = vadd.f32 %v3789, 1.0
    %v3791 = vrcp.pop %v3790
    %v3792 = vmul.f32 1.0, %v3791
    %v3793 = vtanh.pop %v3779
    %v3794 = vxor.u32 %v3780, 2147483648
    %v3795 = vmul.f32 %v3794, 1.442695
    %v3796 = vpow.pop %v3795
    %v3797 = vadd.f32 %v3796, 1.0
    %v3798 = vrcp.pop %v3797
    %v3799 = vmul.f32 1.0, %v3798
    %v3800 = vmul.f32 %v3792, %v3628
    %v3801 = vmul.f32 %v3786, %v3793
    %v3802 = vadd.f32 %v3800, %v3801
    %v3803 = vtanh.pop %v3802
    %v3804 = vmul.f32 %v3799, %v3803
    %v3805 = vld [vmem:[#allocation2 + $0xc0] sm:$0xff]
    %v3806 = vld [vmem:[#allocation2 + $0xc8] sm:$0xff]
    %v3807 = vld [vmem:[#allocation2 + $0xd0] sm:$0xff]
    %v3808 = vld [vmem:[#allocation2 + $0xd8] sm:$0xff]
    %3809 = vmatprep.subr.mxu0 %v2762
    %3810 = vmatpush1.msra.mxu0 %v2761
    %3811 = vmatprep.subr.mxu0 %v2758
    %3812 = vmatpush1.msra.mxu0 %v2757
    %3813 = vmatprep.subr.mxu0 %v2754
    %3814 = vmatpush1.msra.mxu0 %v2753
    %3815 = vmatprep.subr.mxu0 %v2750
    %3816 = vmatpush1.msra.mxu0 %v2749
    %3817 = vmatprep.subr.mxu0 %v2746
    %3818 = vmatpush1.msra.mxu0 %v2745
    %3819 = vmatprep.subr.mxu0 %v2742
    %3820 = vmatpush1.msra.mxu0 %v2741
    %3821 = vmatprep.subr.mxu0 %v2738
    %3822 = vmatpush1.msra.mxu0 %v2737
    %3823 = vmatprep.subr.mxu0 %v2734
    %3824 = vmatpush1.msra.mxu0 %v2733
    %3825 = vmatprep.subr.mxu0 %v2730
    %3826 = vmatpush1.msra.mxu0 %v2729
    %3827 = vmatprep.subr.mxu0 %v2726
    %3828 = vmatpush1.msra.mxu0 %v2725
    %3829 = vmatprep.subr.mxu0 %v2722
    %3830 = vmatpush1.msra.mxu0 %v2721
    %3831 = vmatprep.subr.mxu0 %v2718
    %3832 = vmatpush1.msra.mxu0 %v2717
    %3833 = vmatprep.subr.mxu0 %v2714
    %3834 = vmatpush1.msra.mxu0 %v2713
    %3835 = vmatprep.subr.mxu0 %v2710
    %3836 = vmatpush1.msra.mxu0 %v2709
    %3837 = vmatprep.subr.mxu0 %v2706
    %3838 = vmatpush1.msra.mxu0 %v2705
    %3839 = vmatprep.subr.mxu0 %v2702
    %3840 = vmatpush1.msra.mxu0 %v2701
    %3841 = vmatprep.subr.mxu0 0.0
    %3842 = vmatpush2.msra.mxu0 0.0
    %3843 = vmatprep.subr.mxu0 0.0
    %3844 = vmatpush2.msra.mxu0 0.0
    %3845 = vmatprep.subr.mxu0 0.0
    %3846 = vmatpush2.msra.mxu0 0.0
    %3847 = vmatprep.subr.mxu0 0.0
    %3848 = vmatpush2.msra.mxu0 0.0
    %3849 = vmatprep.subr.mxu0 0.0
    %3850 = vmatpush2.msra.mxu0 0.0
    %3851 = vmatprep.subr.mxu0 0.0
    %3852 = vmatpush2.msra.mxu0 0.0
    %3853 = vmatprep.subr.mxu0 0.0
    %3854 = vmatpush2.msra.mxu0 0.0
    %3855 = vmatprep.subr.mxu0 0.0
    %3856 = vmatpush2.msra.mxu0 0.0
    %3857 = vmatprep.subr.mxu0 0.0
    %3858 = vmatpush2.msra.mxu0 0.0
    %3859 = vmatprep.subr.mxu0 0.0
    %3860 = vmatpush2.msra.mxu0 0.0
    %3861 = vmatprep.subr.mxu0 0.0
    %3862 = vmatpush2.msra.mxu0 0.0
    %3863 = vmatprep.subr.mxu0 0.0
    %3864 = vmatpush2.msra.mxu0 0.0
    %3865 = vmatprep.subr.mxu0 0.0
    %3866 = vmatpush2.msra.mxu0 0.0
    %3867 = vmatprep.subr.mxu0 0.0
    %3868 = vmatpush2.msra.mxu0 0.0
    %3869 = vmatprep.subr.mxu0 0.0
    %3870 = vmatpush2.msra.mxu0 0.0
    %3871 = vmatprep.subr.mxu0 0.0
    %3872 = vmatpush2.msra.mxu0 0.0
    %3873 = vmatprep.mubr.f32.mxu0 0.0
    %3874 = vmatmul.mubr.f32.gmra.mxu0 %v3804
    %v3875 = vpop.f32.mrf.mxu0
    %v3876 = vadd.f32 0.0, %v3875
    %v3877 = vpop.f32.mrf.mxu0
    %v3878 = vadd.f32 0.0, %v3877
    %3879 = vdwg.mxu0
    %3880 = vmatprep.subr.mxu0 %v2764
    %3881 = vmatpush1.msra.mxu0 %v2763
    %3882 = vmatprep.subr.mxu0 %v2760
    %3883 = vmatpush1.msra.mxu0 %v2759
    %3884 = vmatprep.subr.mxu0 %v2756
    %3885 = vmatpush1.msra.mxu0 %v2755
    %3886 = vmatprep.subr.mxu0 %v2752
    %3887 = vmatpush1.msra.mxu0 %v2751
    %3888 = vmatprep.subr.mxu0 %v2748
    %3889 = vmatpush1.msra.mxu0 %v2747
    %3890 = vmatprep.subr.mxu0 %v2744
    %3891 = vmatpush1.msra.mxu0 %v2743
    %3892 = vmatprep.subr.mxu0 %v2740
    %3893 = vmatpush1.msra.mxu0 %v2739
    %3894 = vmatprep.subr.mxu0 %v2736
    %3895 = vmatpush1.msra.mxu0 %v2735
    %3896 = vmatprep.subr.mxu0 %v2732
    %3897 = vmatpush1.msra.mxu0 %v2731
    %3898 = vmatprep.subr.mxu0 %v2728
    %3899 = vmatpush1.msra.mxu0 %v2727
    %3900 = vmatprep.subr.mxu0 %v2724
    %3901 = vmatpush1.msra.mxu0 %v2723
    %3902 = vmatprep.subr.mxu0 %v2720
    %3903 = vmatpush1.msra.mxu0 %v2719
    %3904 = vmatprep.subr.mxu0 %v2716
    %3905 = vmatpush1.msra.mxu0 %v2715
    %3906 = vmatprep.subr.mxu0 %v2712
    %3907 = vmatpush1.msra.mxu0 %v2711
    %3908 = vmatprep.subr.mxu0 %v2708
    %3909 = vmatpush1.msra.mxu0 %v2707
    %3910 = vmatprep.subr.mxu0 %v2704
    %3911 = vmatpush1.msra.mxu0 %v2703
    %3912 = vmatprep.subr.mxu0 0.0
    %3913 = vmatpush2.msra.mxu0 0.0
    %3914 = vmatprep.subr.mxu0 0.0
    %3915 = vmatpush2.msra.mxu0 0.0
    %3916 = vmatprep.subr.mxu0 0.0
    %3917 = vmatpush2.msra.mxu0 0.0
    %3918 = vmatprep.subr.mxu0 0.0
    %3919 = vmatpush2.msra.mxu0 0.0
    %3920 = vmatprep.subr.mxu0 0.0
    %3921 = vmatpush2.msra.mxu0 0.0
    %3922 = vmatprep.subr.mxu0 0.0
    %3923 = vmatpush2.msra.mxu0 0.0
    %3924 = vmatprep.subr.mxu0 0.0
    %3925 = vmatpush2.msra.mxu0 0.0
    %3926 = vmatprep.subr.mxu0 0.0
    %3927 = vmatpush2.msra.mxu0 0.0
    %3928 = vmatprep.subr.mxu0 0.0
    %3929 = vmatpush2.msra.mxu0 0.0
    %3930 = vmatprep.subr.mxu0 0.0
    %3931 = vmatpush2.msra.mxu0 0.0
    %3932 = vmatprep.subr.mxu0 0.0
    %3933 = vmatpush2.msra.mxu0 0.0
    %3934 = vmatprep.subr.mxu0 0.0
    %3935 = vmatpush2.msra.mxu0 0.0
    %3936 = vmatprep.subr.mxu0 0.0
    %3937 = vmatpush2.msra.mxu0 0.0
    %3938 = vmatprep.subr.mxu0 0.0
    %3939 = vmatpush2.msra.mxu0 0.0
    %3940 = vmatprep.subr.mxu0 0.0
    %3941 = vmatpush2.msra.mxu0 0.0
    %3942 = vmatprep.subr.mxu0 0.0
    %3943 = vmatpush2.msra.mxu0 0.0
    %3944 = vmatprep.mubr.f32.mxu0 0.0
    %3945 = vmatmul.mubr.f32.gmra.mxu0 %v3804
    %v3946 = vpop.f32.mrf.mxu0
    %v3947 = vadd.f32 0.0, %v3946
    %v3948 = vpop.f32.mrf.mxu0
    %v3949 = vadd.f32 0.0, %v3948
    %3950 = vdwg.mxu0
    %v3951 = vadd.f32 %v3805, %v3876
    %v3952 = vadd.f32 %v3806, %v3878
    %v3953 = vadd.f32 %v3807, %v3947
    %v3954 = vadd.f32 %v3808, %v3949
    %v3955 = vxor.u32 %v3951, 2147483648
    %v3956 = vmul.f32 %v3955, 1.442695
    %v3957 = vpow.pop %v3956
    %v3958 = vadd.f32 %v3957, 1.0
    %v3959 = vrcp.pop %v3958
    %v3960 = vmul.f32 1.0, %v3959
    %v3961 = vxor.u32 %v3952, 2147483648
    %v3962 = vmul.f32 %v3961, 1.442695
    %v3963 = vpow.pop %v3962
    %v3964 = vadd.f32 %v3963, 1.0
    %v3965 = vrcp.pop %v3964
    %v3966 = vmul.f32 1.0, %v3965
    %v3967 = vtanh.pop %v3953
    %v3968 = vxor.u32 %v3954, 2147483648
    %v3969 = vmul.f32 %v3968, 1.442695
    %v3970 = vpow.pop %v3969
    %v3971 = vadd.f32 %v3970, 1.0
    %v3972 = vrcp.pop %v3971
    %v3973 = vmul.f32 1.0, %v3972
    %v3974 = vmul.f32 %v3966, %v3802
    %v3975 = vmul.f32 %v3960, %v3967
    %v3976 = vadd.f32 %v3974, %v3975
    %v3977 = vtanh.pop %v3976
    %v3978 = vmul.f32 %v3973, %v3977
    %v3979 = vld [vmem:[#allocation2 + $0xe0] sm:$0xff]
    %v3980 = vld [vmem:[#allocation2 + $0xe8] sm:$0xff]
    %v3981 = vld [vmem:[#allocation2 + $0xf0] sm:$0xff]
    %v3982 = vld [vmem:[#allocation2 + $0xf8] sm:$0xff]
    %3983 = vmatprep.subr.mxu0 %v2762
    %3984 = vmatpush1.msra.mxu0 %v2761
    %3985 = vmatprep.subr.mxu0 %v2758
    %3986 = vmatpush1.msra.mxu0 %v2757
    %3987 = vmatprep.subr.mxu0 %v2754
    %3988 = vmatpush1.msra.mxu0 %v2753
    %3989 = vmatprep.subr.mxu0 %v2750
    %3990 = vmatpush1.msra.mxu0 %v2749
    %3991 = vmatprep.subr.mxu0 %v2746
    %3992 = vmatpush1.msra.mxu0 %v2745
    %3993 = vmatprep.subr.mxu0 %v2742
    %3994 = vmatpush1.msra.mxu0 %v2741
    %3995 = vmatprep.subr.mxu0 %v2738
    %3996 = vmatpush1.msra.mxu0 %v2737
    %3997 = vmatprep.subr.mxu0 %v2734
    %3998 = vmatpush1.msra.mxu0 %v2733
    %3999 = vmatprep.subr.mxu0 %v2730
    %4000 = vmatpush1.msra.mxu0 %v2729
    %4001 = vmatprep.subr.mxu0 %v2726
    %4002 = vmatpush1.msra.mxu0 %v2725
    %4003 = vmatprep.subr.mxu0 %v2722
    %4004 = vmatpush1.msra.mxu0 %v2721
    %4005 = vmatprep.subr.mxu0 %v2718
    %4006 = vmatpush1.msra.mxu0 %v2717
    %4007 = vmatprep.subr.mxu0 %v2714
    %4008 = vmatpush1.msra.mxu0 %v2713
    %4009 = vmatprep.subr.mxu0 %v2710
    %4010 = vmatpush1.msra.mxu0 %v2709
    %4011 = vmatprep.subr.mxu0 %v2706
    %4012 = vmatpush1.msra.mxu0 %v2705
    %4013 = vmatprep.subr.mxu0 %v2702
    %4014 = vmatpush1.msra.mxu0 %v2701
    %4015 = vmatprep.subr.mxu0 0.0
    %4016 = vmatpush2.msra.mxu0 0.0
    %4017 = vmatprep.subr.mxu0 0.0
    %4018 = vmatpush2.msra.mxu0 0.0
    %4019 = vmatprep.subr.mxu0 0.0
    %4020 = vmatpush2.msra.mxu0 0.0
    %4021 = vmatprep.subr.mxu0 0.0
    %4022 = vmatpush2.msra.mxu0 0.0
    %4023 = vmatprep.subr.mxu0 0.0
    %4024 = vmatpush2.msra.mxu0 0.0
    %4025 = vmatprep.subr.mxu0 0.0
    %4026 = vmatpush2.msra.mxu0 0.0
    %4027 = vmatprep.subr.mxu0 0.0
    %4028 = vmatpush2.msra.mxu0 0.0
    %4029 = vmatprep.subr.mxu0 0.0
    %4030 = vmatpush2.msra.mxu0 0.0
    %4031 = vmatprep.subr.mxu0 0.0
    %4032 = vmatpush2.msra.mxu0 0.0
    %4033 = vmatprep.subr.mxu0 0.0
    %4034 = vmatpush2.msra.mxu0 0.0
    %4035 = vmatprep.subr.mxu0 0.0
    %4036 = vmatpush2.msra.mxu0 0.0
    %4037 = vmatprep.subr.mxu0 0.0
    %4038 = vmatpush2.msra.mxu0 0.0
    %4039 = vmatprep.subr.mxu0 0.0
    %4040 = vmatpush2.msra.mxu0 0.0
    %4041 = vmatprep.subr.mxu0 0.0
    %4042 = vmatpush2.msra.mxu0 0.0
    %4043 = vmatprep.subr.mxu0 0.0
    %4044 = vmatpush2.msra.mxu0 0.0
    %4045 = vmatprep.subr.mxu0 0.0
    %4046 = vmatpush2.msra.mxu0 0.0
    %4047 = vmatprep.mubr.f32.mxu0 0.0
    %4048 = vmatmul.mubr.f32.gmra.mxu0 %v3978
    %v4049 = vpop.f32.mrf.mxu0
    %v4050 = vadd.f32 0.0, %v4049
    %v4051 = vpop.f32.mrf.mxu0
    %v4052 = vadd.f32 0.0, %v4051
    %4053 = vdwg.mxu0
    %4054 = vmatprep.subr.mxu0 %v2764
    %4055 = vmatpush1.msra.mxu0 %v2763
    %4056 = vmatprep.subr.mxu0 %v2760
    %4057 = vmatpush1.msra.mxu0 %v2759
    %4058 = vmatprep.subr.mxu0 %v2756
    %4059 = vmatpush1.msra.mxu0 %v2755
    %4060 = vmatprep.subr.mxu0 %v2752
    %4061 = vmatpush1.msra.mxu0 %v2751
    %4062 = vmatprep.subr.mxu0 %v2748
    %4063 = vmatpush1.msra.mxu0 %v2747
    %4064 = vmatprep.subr.mxu0 %v2744
    %4065 = vmatpush1.msra.mxu0 %v2743
    %4066 = vmatprep.subr.mxu0 %v2740
    %4067 = vmatpush1.msra.mxu0 %v2739
    %4068 = vmatprep.subr.mxu0 %v2736
    %4069 = vmatpush1.msra.mxu0 %v2735
    %4070 = vmatprep.subr.mxu0 %v2732
    %4071 = vmatpush1.msra.mxu0 %v2731
    %4072 = vmatprep.subr.mxu0 %v2728
    %4073 = vmatpush1.msra.mxu0 %v2727
    %4074 = vmatprep.subr.mxu0 %v2724
    %4075 = vmatpush1.msra.mxu0 %v2723
    %4076 = vmatprep.subr.mxu0 %v2720
    %4077 = vmatpush1.msra.mxu0 %v2719
    %4078 = vmatprep.subr.mxu0 %v2716
    %4079 = vmatpush1.msra.mxu0 %v2715
    %4080 = vmatprep.subr.mxu0 %v2712
    %4081 = vmatpush1.msra.mxu0 %v2711
    %4082 = vmatprep.subr.mxu0 %v2708
    %4083 = vmatpush1.msra.mxu0 %v2707
    %4084 = vmatprep.subr.mxu0 %v2704
    %4085 = vmatpush1.msra.mxu0 %v2703
    %4086 = vmatprep.subr.mxu0 0.0
    %4087 = vmatpush2.msra.mxu0 0.0
    %4088 = vmatprep.subr.mxu0 0.0
    %4089 = vmatpush2.msra.mxu0 0.0
    %4090 = vmatprep.subr.mxu0 0.0
    %4091 = vmatpush2.msra.mxu0 0.0
    %4092 = vmatprep.subr.mxu0 0.0
    %4093 = vmatpush2.msra.mxu0 0.0
    %4094 = vmatprep.subr.mxu0 0.0
    %4095 = vmatpush2.msra.mxu0 0.0
    %4096 = vmatprep.subr.mxu0 0.0
    %4097 = vmatpush2.msra.mxu0 0.0
    %4098 = vmatprep.subr.mxu0 0.0
    %4099 = vmatpush2.msra.mxu0 0.0
    %4100 = vmatprep.subr.mxu0 0.0
    %4101 = vmatpush2.msra.mxu0 0.0
    %4102 = vmatprep.subr.mxu0 0.0
    %4103 = vmatpush2.msra.mxu0 0.0
    %4104 = vmatprep.subr.mxu0 0.0
    %4105 = vmatpush2.msra.mxu0 0.0
    %4106 = vmatprep.subr.mxu0 0.0
    %4107 = vmatpush2.msra.mxu0 0.0
    %4108 = vmatprep.subr.mxu0 0.0
    %4109 = vmatpush2.msra.mxu0 0.0
    %4110 = vmatprep.subr.mxu0 0.0
    %4111 = vmatpush2.msra.mxu0 0.0
    %4112 = vmatprep.subr.mxu0 0.0
    %4113 = vmatpush2.msra.mxu0 0.0
    %4114 = vmatprep.subr.mxu0 0.0
    %4115 = vmatpush2.msra.mxu0 0.0
    %4116 = vmatprep.subr.mxu0 0.0
    %4117 = vmatpush2.msra.mxu0 0.0
    %4118 = vmatprep.mubr.f32.mxu0 0.0
    %4119 = vmatmul.mubr.f32.gmra.mxu0 %v3978
    %v4120 = vpop.f32.mrf.mxu0
    %v4121 = vadd.f32 0.0, %v4120
    %v4122 = vpop.f32.mrf.mxu0
    %v4123 = vadd.f32 0.0, %v4122
    %4124 = vdwg.mxu0
    %v4125 = vadd.f32 %v3979, %v4050
    %v4126 = vadd.f32 %v3980, %v4052
    %v4127 = vadd.f32 %v3981, %v4121
    %v4128 = vadd.f32 %v3982, %v4123
    %v4129 = vxor.u32 %v4125, 2147483648
    %v4130 = vmul.f32 %v4129, 1.442695
    %v4131 = vpow.pop %v4130
    %v4132 = vadd.f32 %v4131, 1.0
    %v4133 = vrcp.pop %v4132
    %v4134 = vmul.f32 1.0, %v4133
    %v4135 = vxor.u32 %v4126, 2147483648
    %v4136 = vmul.f32 %v4135, 1.442695
    %v4137 = vpow.pop %v4136
    %v4138 = vadd.f32 %v4137, 1.0
    %v4139 = vrcp.pop %v4138
    %v4140 = vmul.f32 1.0, %v4139
    %v4141 = vtanh.pop %v4127
    %v4142 = vxor.u32 %v4128, 2147483648
    %v4143 = vmul.f32 %v4142, 1.442695
    %v4144 = vpow.pop %v4143
    %v4145 = vadd.f32 %v4144, 1.0
    %v4146 = vrcp.pop %v4145
    %v4147 = vmul.f32 1.0, %v4146
    %v4148 = vmul.f32 %v4140, %v3976
    %v4149 = vmul.f32 %v4134, %v4141
    %v4150 = vadd.f32 %v4148, %v4149
    %v4151 = vtanh.pop %v4150
    %v4152 = vmul.f32 %v4147, %v4151
    %4153 = vst [vmem:[%s7] sm:$0xff] %v4152
    // Predicated region
    $region46: #{_lambda_.2} parent=1 // pred_check
      _
    $region47: #{_lambda_.2} parent=1 // pred_check_branch
      %4155 = sbr.rel (0) target = $region49
    $region48: #{_lambda_.2} parent=1 // pred_region
      _
    $region49: #{_lambda_.2} parent=1 // pred_fallthru
      _
    // Predicated region
    $region50: #{_lambda_.2} parent=1 // pred_check
      _
    $region51: #{_lambda_.2} parent=1 // pred_check_branch
      %4157 = sbr.rel (0) target = $region53
    $region52: #{_lambda_.2} parent=1 // pred_region
      _
    $region53: #{_lambda_.2} parent=1 // pred_fallthru
      _
    %4158 = vsyncpa [#allocation5], 1
    %4159 = vsyncpa [#allocation7], 1
    %4160 = vsyncpa [#allocation10], 1

</llo_original>
